<compile_context>
chip_gen: v7x
topology: tpu7x:2x2x1
jax: 0.10.0
libtpu: 0.0.40
codegen_flags: <defaults>
</compile_context>

<pallas_src>
import jax
import jax.numpy as jnp
from jax import lax
from jax.experimental import pallas as pl
from jax.experimental.pallas import tpu as pltpu

EPS = 1e-5


def _fused_kernel(x_ref, g1_ref, b1_ref, w_ref, g2_ref, b2_ref, o_ref):
    # x_ref : (Cin, M)  f32   -- constant block index: stays resident across the grid
    # g1/b1 : (Cin, 1)  f32
    # w_ref : (TN, Cin) bf16  -- one Cout tile of the 1x1 conv weight
    # g2/b2 : (TN, 1)   f32
    # o_ref : (TN, M)   f32
    x = x_ref[...]

    # --- BatchNorm #1 (batch stats), folded to one scale/shift per channel ---
    mean1 = jnp.mean(x, axis=1, keepdims=True)                      # (Cin, 1)
    xc = x - mean1
    var1 = jnp.mean(xc * xc, axis=1, keepdims=True)                 # biased variance
    s1 = g1_ref[...] * lax.rsqrt(var1 + EPS)
    t1 = b1_ref[...] - mean1 * s1

    # --- BN1 apply + ReLU, cast to bf16 for the MXU ---
    x_relu = jnp.maximum(x * s1 + t1, 0.0).astype(jnp.bfloat16)     # (Cin, M)

    # --- 1x1 conv == matmul on the MXU, f32 accumulation ---
    y = jnp.dot(w_ref[...], x_relu, preferred_element_type=jnp.float32)  # (TN, M)

    # --- BatchNorm #2 (batch stats); per-output-channel => exact under Cout tiling ---
    mean2 = jnp.mean(y, axis=1, keepdims=True)                      # (TN, 1)
    yc = y - mean2
    var2 = jnp.mean(yc * yc, axis=1, keepdims=True)
    s2 = g2_ref[...] * lax.rsqrt(var2 + EPS)
    t2 = b2_ref[...] - mean2 * s2
    o_ref[...] = y * s2 + t2


def bn_relu_conv1x1_bn(x_nchw, gamma1, beta1, w_oi, gamma2, beta2, *, tn=256):
    """x_nchw: (N, Cin, H, W); w_oi: (Cout, Cin) or (Cout, Cin, 1, 1)."""
    N, Cin, H, W = x_nchw.shape
    Cout = w_oi.shape[0]
    M = N * H * W

    # NCHW -> (Cin, M). For N == 1 this is a pure reshape (no real transpose).
    x_mat = jnp.transpose(x_nchw, (1, 0, 2, 3)).reshape(Cin, M).astype(jnp.float32)
    # Store the weight in bf16: halves the dominant HBM traffic for this kernel.
    w_mat = w_oi.reshape(Cout, Cin).astype(jnp.bfloat16)

    g1 = gamma1.reshape(Cin, 1).astype(jnp.float32)
    b1 = beta1.reshape(Cin, 1).astype(jnp.float32)
    g2 = gamma2.reshape(Cout, 1).astype(jnp.float32)
    b2 = beta2.reshape(Cout, 1).astype(jnp.float32)

    tn = min(tn, Cout)
    assert Cout % tn == 0, (Cout, tn)

    out_mat = pl.pallas_call(
        _fused_kernel,
        out_shape=jax.ShapeDtypeStruct((Cout, M), jnp.float32),
        grid=(Cout // tn,),
        in_specs=[
            pl.BlockSpec((Cin, M), lambda j: (0, 0)),    # x: resident across grid
            pl.BlockSpec((Cin, 1), lambda j: (0, 0)),    # gamma1
            pl.BlockSpec((Cin, 1), lambda j: (0, 0)),    # beta1
            pl.BlockSpec((tn, Cin), lambda j: (j, 0)),   # weight tile (double-buffered)
            pl.BlockSpec((tn, 1), lambda j: (j, 0)),     # gamma2 tile
            pl.BlockSpec((tn, 1), lambda j: (j, 0)),     # beta2 tile
        ],
        out_specs=pl.BlockSpec((tn, M), lambda j: (j, 0)),
        compiler_params=pltpu.CompilerParams(
            dimension_semantics=("parallel",),
        ),
    )(x_mat, g1, b1, w_mat, g2, b2)

    # (Cout, M) -> NCHW (again a pure reshape for N == 1)
    return jnp.transpose(out_mat.reshape(Cout, N, H, W), (1, 0, 2, 3))


def _reference(x_nchw, gamma1, beta1, w_oi, gamma2, beta2):
    def bn(x, g, b):
        mean = jnp.mean(x, axis=(0, 2, 3), keepdims=True)
        var = jnp.mean((x - mean) ** 2, axis=(0, 2, 3), keepdims=True)
        return (x - mean) * lax.rsqrt(var + EPS) * g.reshape(1, -1, 1, 1) + b.reshape(1, -1, 1, 1)

    h = jnp.maximum(bn(x_nchw, gamma1, beta1), 0.0)
    y = jnp.einsum("nchw,oc->nohw", h, w_oi.reshape(w_oi.shape[0], -1))
    return bn(y, gamma2, beta2)


if __name__ == "__main__":
    key = jax.random.PRNGKey(0)
    k_x, k_w, k_g1, k_b1, k_g2, k_b2 = jax.random.split(key, 6)

    N, Cin, H, W = 1, 512, 14, 14
    Cout = 1024

    x = jax.random.normal(k_x, (N, Cin, H, W), dtype=jnp.float32)
    # Conv2d(512, 1024, 1x1, bias=False) weight: (Cout, Cin, 1, 1) -> (Cout, Cin)
    w = jax.random.normal(k_w, (Cout, Cin), dtype=jnp.float32) * 0.02
    gamma1 = 1.0 + 0.1 * jax.random.normal(k_g1, (Cin,), dtype=jnp.float32)
    beta1 = 0.1 * jax.random.normal(k_b1, (Cin,), dtype=jnp.float32)
    gamma2 = 1.0 + 0.1 * jax.random.normal(k_g2, (Cout,), dtype=jnp.float32)
    beta2 = 0.1 * jax.random.normal(k_b2, (Cout,), dtype=jnp.float32)

    out = jax.block_until_ready(bn_relu_conv1x1_bn(x, gamma1, beta1, w, gamma2, beta2))
    ref = jax.block_until_ready(_reference(x, gamma1, beta1, w, gamma2, beta2))

    assert out.shape == (N, Cout, H, W), out.shape
    # bf16 matmul operands (f32 accumulation) vs an all-f32 reference:
    # allow ~1-2% tolerance; any layout/statistics bug would be orders larger.
    assert jnp.allclose(out, ref, atol=2e-2, rtol=2e-2), float(jnp.max(jnp.abs(out - ref)))

    print("KERNEL_OK")
</pallas_src>

<mosaic_0001>
module attributes {stable_mosaic.version = 11 : i64} {
  func.func @_fused_kernel(%arg0: i32, %arg1: memref<512x196xf32, #tpu.memory_space<vmem>>, %arg2: memref<512x1xf32, #tpu.memory_space<vmem>>, %arg3: memref<512x1xf32, #tpu.memory_space<vmem>>, %arg4: memref<256x512xbf16, #tpu.memory_space<vmem>>, %arg5: memref<256x1xf32, #tpu.memory_space<vmem>>, %arg6: memref<256x1xf32, #tpu.memory_space<vmem>>, %arg7: memref<256x196xf32, #tpu.memory_space<vmem>>) attributes {dimension_semantics = [#tpu.dimension_semantics<parallel>], iteration_bounds = array<i64: 4>, scalar_prefetch = 0 : i64, scratch_operands = 0 : i64, tpu.core_type = #tpu.core_type<tc>, window_params = [{pipeline_mode = #tpu.pipeline_mode<synchronous>, transform_indices = @transform_0, window_bounds = array<i64: 512, 196>}, {pipeline_mode = #tpu.pipeline_mode<synchronous>, transform_indices = @transform_1, window_bounds = array<i64: 512, 1>}, {pipeline_mode = #tpu.pipeline_mode<synchronous>, transform_indices = @transform_2, window_bounds = array<i64: 512, 1>}, {transform_indices = @transform_3, window_bounds = array<i64: 256, 512>}, {transform_indices = @transform_4, window_bounds = array<i64: 256, 1>}, {transform_indices = @transform_5, window_bounds = array<i64: 256, 1>}, {transform_indices = @transform_6, window_bounds = array<i64: 256, 196>}]} {
    %c0 = arith.constant 0 : index
    %c0_0 = arith.constant 0 : index
    %0 = vector.load %arg1[%c0, %c0_0] : memref<512x196xf32, #tpu.memory_space<vmem>>, vector<512x196xf32>
    %cst = arith.constant dense<0.000000e+00> : vector<512xf32>
    %1 = vector.multi_reduction <add>, %0, %cst [1] : vector<512x196xf32> to vector<512xf32>
    %2 = vector.shape_cast %1 : vector<512xf32> to vector<512x1xf32>
    %cst_1 = arith.constant 1.960000e+02 : f32
    %3 = vector.broadcast %cst_1 : f32 to vector<512x1xf32>
    %4 = arith.divf %2, %3 : vector<512x1xf32>
    %5 = vector.broadcast %4 : vector<512x1xf32> to vector<512x196xf32>
    %6 = arith.subf %0, %5 : vector<512x196xf32>
    %7 = arith.mulf %6, %6 : vector<512x196xf32>
    %cst_2 = arith.constant dense<0.000000e+00> : vector<512xf32>
    %8 = vector.multi_reduction <add>, %7, %cst_2 [1] : vector<512x196xf32> to vector<512xf32>
    %9 = vector.shape_cast %8 : vector<512xf32> to vector<512x1xf32>
    %cst_3 = arith.constant 1.960000e+02 : f32
    %10 = vector.broadcast %cst_3 : f32 to vector<512x1xf32>
    %11 = arith.divf %9, %10 : vector<512x1xf32>
    %c0_4 = arith.constant 0 : index
    %c0_5 = arith.constant 0 : index
    %12 = vector.load %arg2[%c0_4, %c0_5] : memref<512x1xf32, #tpu.memory_space<vmem>>, vector<512x1xf32>
    %cst_6 = arith.constant 9.99999974E-6 : f32
    %13 = vector.broadcast %cst_6 : f32 to vector<512x1xf32>
    %14 = arith.addf %11, %13 : vector<512x1xf32>
    %15 = math.rsqrt %14 : vector<512x1xf32>
    %16 = arith.mulf %12, %15 : vector<512x1xf32>
    %c0_7 = arith.constant 0 : index
    %c0_8 = arith.constant 0 : index
    %17 = vector.load %arg3[%c0_7, %c0_8] : memref<512x1xf32, #tpu.memory_space<vmem>>, vector<512x1xf32>
    %18 = arith.mulf %4, %16 : vector<512x1xf32>
    %19 = arith.subf %17, %18 : vector<512x1xf32>
    %20 = vector.broadcast %16 : vector<512x1xf32> to vector<512x196xf32>
    %21 = arith.mulf %0, %20 : vector<512x196xf32>
    %22 = vector.broadcast %19 : vector<512x1xf32> to vector<512x196xf32>
    %23 = arith.addf %21, %22 : vector<512x196xf32>
    %cst_9 = arith.constant 0.000000e+00 : f32
    %24 = vector.broadcast %cst_9 : f32 to vector<512x196xf32>
    %25 = arith.maximumf %23, %24 : vector<512x196xf32>
    %26 = arith.truncf %25 : vector<512x196xf32> to vector<512x196xbf16>
    %c0_10 = arith.constant 0 : index
    %c0_11 = arith.constant 0 : index
    %27 = vector.load %arg4[%c0_10, %c0_11] : memref<256x512xbf16, #tpu.memory_space<vmem>>, vector<256x512xbf16>
    %cst_12 = arith.constant dense<0.000000e+00> : vector<256x196xf32>
    %28 = tpu.matmul %27, %26, %cst_12 {dimension_numbers = #tpu.dot_dimension_numbers<[1], [0], [0], [1], [0, 0, 1, 1], [], []>} : vector<256x512xbf16>, vector<512x196xbf16>, vector<256x196xf32> -> vector<256x196xf32>
    %cst_13 = arith.constant dense<0.000000e+00> : vector<256xf32>
    %29 = vector.multi_reduction <add>, %28, %cst_13 [1] : vector<256x196xf32> to vector<256xf32>
    %30 = vector.shape_cast %29 : vector<256xf32> to vector<256x1xf32>
    %cst_14 = arith.constant 1.960000e+02 : f32
    %31 = vector.broadcast %cst_14 : f32 to vector<256x1xf32>
    %32 = arith.divf %30, %31 : vector<256x1xf32>
    %33 = vector.broadcast %32 : vector<256x1xf32> to vector<256x196xf32>
    %34 = arith.subf %28, %33 : vector<256x196xf32>
    %35 = arith.mulf %34, %34 : vector<256x196xf32>
    %cst_15 = arith.constant dense<0.000000e+00> : vector<256xf32>
    %36 = vector.multi_reduction <add>, %35, %cst_15 [1] : vector<256x196xf32> to vector<256xf32>
    %37 = vector.shape_cast %36 : vector<256xf32> to vector<256x1xf32>
    %cst_16 = arith.constant 1.960000e+02 : f32
    %38 = vector.broadcast %cst_16 : f32 to vector<256x1xf32>
    %39 = arith.divf %37, %38 : vector<256x1xf32>
    %c0_17 = arith.constant 0 : index
    %c0_18 = arith.constant 0 : index
    %40 = vector.load %arg5[%c0_17, %c0_18] : memref<256x1xf32, #tpu.memory_space<vmem>>, vector<256x1xf32>
    %cst_19 = arith.constant 9.99999974E-6 : f32
    %41 = vector.broadcast %cst_19 : f32 to vector<256x1xf32>
    %42 = arith.addf %39, %41 : vector<256x1xf32>
    %43 = math.rsqrt %42 : vector<256x1xf32>
    %44 = arith.mulf %40, %43 : vector<256x1xf32>
    %c0_20 = arith.constant 0 : index
    %c0_21 = arith.constant 0 : index
    %45 = vector.load %arg6[%c0_20, %c0_21] : memref<256x1xf32, #tpu.memory_space<vmem>>, vector<256x1xf32>
    %46 = arith.mulf %32, %44 : vector<256x1xf32>
    %47 = arith.subf %45, %46 : vector<256x1xf32>
    %48 = vector.broadcast %44 : vector<256x1xf32> to vector<256x196xf32>
    %49 = arith.mulf %28, %48 : vector<256x196xf32>
    %50 = vector.broadcast %47 : vector<256x1xf32> to vector<256x196xf32>
    %51 = arith.addf %49, %50 : vector<256x196xf32>
    %c0_22 = arith.constant 0 : index
    %c0_23 = arith.constant 0 : index
    %52 = vector.load %arg7[%c0_22, %c0_23] : memref<256x196xf32, #tpu.memory_space<vmem>>, vector<256x196xf32>
    tpu.vector_store %arg7[%c0_22, %c0_23], %51 {strides = array<i32>} : memref<256x196xf32, #tpu.memory_space<vmem>>, vector<256x196xf32>,
    return
  }
  func.func @transform_0(%arg0: i32) -> (i32, i32) {
    %c0_i32 = arith.constant 0 : i32
    %c0_i32_0 = arith.constant 0 : i32
    %c0_i32_1 = arith.constant 0 : i32
    return %c0_i32, %c0_i32_0 : i32, i32
  }
  func.func @transform_1(%arg0: i32) -> (i32, i32) {
    %c0_i32 = arith.constant 0 : i32
    %c0_i32_0 = arith.constant 0 : i32
    %c0_i32_1 = arith.constant 0 : i32
    return %c0_i32, %c0_i32_0 : i32, i32
  }
  func.func @transform_2(%arg0: i32) -> (i32, i32) {
    %c0_i32 = arith.constant 0 : i32
    %c0_i32_0 = arith.constant 0 : i32
    %c0_i32_1 = arith.constant 0 : i32
    return %c0_i32, %c0_i32_0 : i32, i32
  }
  func.func @transform_3(%arg0: i32) -> (i32, i32) {
    %c0_i32 = arith.constant 0 : i32
    %c0_i32_0 = arith.constant 0 : i32
    return %arg0, %c0_i32 : i32, i32
  }
  func.func @transform_4(%arg0: i32) -> (i32, i32) {
    %c0_i32 = arith.constant 0 : i32
    %c0_i32_0 = arith.constant 0 : i32
    return %arg0, %c0_i32 : i32, i32
  }
  func.func @transform_5(%arg0: i32) -> (i32, i32) {
    %c0_i32 = arith.constant 0 : i32
    %c0_i32_0 = arith.constant 0 : i32
    return %arg0, %c0_i32 : i32, i32
  }
  func.func @transform_6(%arg0: i32) -> (i32, i32) {
    %c0_i32 = arith.constant 0 : i32
    %c0_i32_0 = arith.constant 0 : i32
    return %arg0, %c0_i32 : i32, i32
  }
}

</mosaic_0001>

<llo_original>
// kernel: tpu_custom_call.1
$region0: #{tpu_custom_call.1}
  #allocation0 [shape = 'u32[]', space=smem, size = 0x4, offset = 0x4, fixed_abs, tag = 'smem constant byte address 0x4 - core index']
  #allocation1 [shape = 'u32[144,128]{1,0:T(1,128)}', space=vmem, size = 0x12000, scoped, tag = 'internal scratch']
  %s0 = inlined_call_operand.vmem [shape: f32[512,196], index: 0, kind: input, shape index: {}]
  %s1 = inlined_call_operand.vmem [shape: f32[512,1], index: 1, kind: input, shape index: {}]
  %s2 = inlined_call_operand.vmem [shape: f32[512,1], index: 2, kind: input, shape index: {}]
  %s3 = inlined_call_operand.vmem [shape: bf16[1024,512], index: 3, kind: input, shape index: {}]
  %s4 = inlined_call_operand.vmem [shape: f32[1024,1], index: 4, kind: input, shape index: {}]
  %s5 = inlined_call_operand.vmem [shape: f32[1024,1], index: 5, kind: input, shape index: {}]
  %s6 = inlined_call_operand.vmem [shape: f32[1024,196], index: 6, kind: output, shape index: {}]
  %s7 = sld [smem:[#allocation0]]
  $region57: #{tpu_custom_call.1} parent=0
    _
  %s9 = ssub.s32 1, %s7
  %s10 = scalar_select 0, %s9, %s7
  loop: start=0, step=1, limit=6
  $region2: #{tpu_custom_call.1} parent=0 // loop_pre_header
    _
  $region3: #{tpu_custom_call.1} parent=0 // loop_header
    %s12 = sphi 0, %s16
    %p13 = scmp.ge.s32.totalorder %s12, 6
    %s20 = sphi 0, %s20
    %s22 = sphi 0, %s20
    %s23 = sphi 0, %s22
    %s37 = sphi 0, %s23
    %s41 = sphi 0, %s41
    %s43 = sphi 0, %s41
    %s44 = sphi 0, %s43
    %s58 = sphi 0, %s44
    %s62 = sphi 0, %s62
    %s64 = sphi 0, %s62
    %s65 = sphi 0, %s64
    %s79 = sphi 0, %s65
    %s85 = sphi 0, %s87
    %s88 = sphi 0, %s85
    %s89 = sphi 0, %s88
    %s105 = sphi 0, %s89
    %s111 = sphi 0, %s113
    %s114 = sphi 0, %s111
    %s115 = sphi 0, %s114
    %s131 = sphi 0, %s115
    %s137 = sphi 0, %s139
    %s140 = sphi 0, %s137
    %s141 = sphi 0, %s140
    %s157 = sphi 0, %s141
    %s163 = sphi 0, %s165
    %s166 = sphi 0, %s163
    %s167 = sphi 0, %s166
    %s183 = sphi 0, %s167
  $region4: #{tpu_custom_call.1} parent=0 // loop_header_branch
    %15 = sbr.rel (%p13) target = $region8
  $region5: #{tpu_custom_call.1} parent=0 // loop_body
    %s17 = ssub.s32 %s12, 1
    %s18 = ssub.s32 %s12, 2
    %s19 = sadd.s32 %s12, 1
    %s21 = sadd.s32 %s20, 1
    %p24 = scmp.eq.s32.totalorder %s12, 3
    %p25 = scmp.ne.s32.totalorder %s20, %s22
    %p26 = scmp.eq.s32.totalorder %s12, 0
    %p27 = por %p25, %p26
    %p28 = scmp.ne.s32.totalorder %s20, %s22
    %p29 = scmp.eq.s32.totalorder %s17, 3
    %p30 = por %p28, %p29
    %p31 = scmp.ne.s32.totalorder %s22, %s23
    %p32 = scmp.eq.s32.totalorder %s17, 0
    %p33 = por %p31, %p32
    %p34 = scmp.ne.s32.totalorder %s22, %s23
    %p35 = scmp.eq.s32.totalorder %s18, 3
    %p36 = por %p34, %p35
    %p38 = scmp.ne.s32.totalorder %s23, %s37
    %p39 = scmp.eq.s32.totalorder %s18, 0
    %p40 = por %p38, %p39
    %s42 = sadd.s32 %s41, 1
    %p45 = scmp.eq.s32.totalorder %s12, 3
    %p46 = scmp.ne.s32.totalorder %s41, %s43
    %p47 = scmp.eq.s32.totalorder %s12, 0
    %p48 = por %p46, %p47
    %p49 = scmp.ne.s32.totalorder %s41, %s43
    %p50 = scmp.eq.s32.totalorder %s17, 3
    %p51 = por %p49, %p50
    %p52 = scmp.ne.s32.totalorder %s43, %s44
    %p53 = scmp.eq.s32.totalorder %s17, 0
    %p54 = por %p52, %p53
    %p55 = scmp.ne.s32.totalorder %s43, %s44
    %p56 = scmp.eq.s32.totalorder %s18, 3
    %p57 = por %p55, %p56
    %p59 = scmp.ne.s32.totalorder %s44, %s58
    %p60 = scmp.eq.s32.totalorder %s18, 0
    %p61 = por %p59, %p60
    %s63 = sadd.s32 %s62, 1
    %p66 = scmp.eq.s32.totalorder %s12, 3
    %p67 = scmp.ne.s32.totalorder %s62, %s64
    %p68 = scmp.eq.s32.totalorder %s12, 0
    %p69 = por %p67, %p68
    %p70 = scmp.ne.s32.totalorder %s62, %s64
    %p71 = scmp.eq.s32.totalorder %s17, 3
    %p72 = por %p70, %p71
    %p73 = scmp.ne.s32.totalorder %s64, %s65
    %p74 = scmp.eq.s32.totalorder %s17, 0
    %p75 = por %p73, %p74
    %p76 = scmp.ne.s32.totalorder %s64, %s65
    %p77 = scmp.eq.s32.totalorder %s18, 3
    %p78 = por %p76, %p77
    %p80 = scmp.ne.s32.totalorder %s65, %s79
    %p81 = scmp.eq.s32.totalorder %s18, 0
    %p82 = por %p80, %p81
    %s83 = ssub.s32 %s12, %s19
    %p84 = scmp.eq.s32.totalorder %s83, 0
    %s86 = sadd.s32 %s85, 1
    %s87 = scalar_select %p84, %s85, %s86
    %p90 = pneg %p84
    %p91 = scmp.eq.s32.totalorder %s12, 3
    %p92 = por %p90, %p91
    %p93 = scmp.ne.s32.totalorder %s85, %s88
    %p94 = scmp.eq.s32.totalorder %s12, 0
    %p95 = por %p93, %p94
    %p96 = scmp.ne.s32.totalorder %s85, %s88
    %p97 = scmp.eq.s32.totalorder %s17, 3
    %p98 = por %p96, %p97
    %p99 = scmp.ne.s32.totalorder %s88, %s89
    %p100 = scmp.eq.s32.totalorder %s17, 0
    %p101 = por %p99, %p100
    %p102 = scmp.ne.s32.totalorder %s88, %s89
    %p103 = scmp.eq.s32.totalorder %s18, 3
    %p104 = por %p102, %p103
    %p106 = scmp.ne.s32.totalorder %s89, %s105
    %p107 = scmp.eq.s32.totalorder %s18, 0
    %p108 = por %p106, %p107
    %s109 = ssub.s32 %s12, %s19
    %p110 = scmp.eq.s32.totalorder %s109, 0
    %s112 = sadd.s32 %s111, 1
    %s113 = scalar_select %p110, %s111, %s112
    %p116 = pneg %p110
    %p117 = scmp.eq.s32.totalorder %s12, 3
    %p118 = por %p116, %p117
    %p119 = scmp.ne.s32.totalorder %s111, %s114
    %p120 = scmp.eq.s32.totalorder %s12, 0
    %p121 = por %p119, %p120
    %p122 = scmp.ne.s32.totalorder %s111, %s114
    %p123 = scmp.eq.s32.totalorder %s17, 3
    %p124 = por %p122, %p123
    %p125 = scmp.ne.s32.totalorder %s114, %s115
    %p126 = scmp.eq.s32.totalorder %s17, 0
    %p127 = por %p125, %p126
    %p128 = scmp.ne.s32.totalorder %s114, %s115
    %p129 = scmp.eq.s32.totalorder %s18, 3
    %p130 = por %p128, %p129
    %p132 = scmp.ne.s32.totalorder %s115, %s131
    %p133 = scmp.eq.s32.totalorder %s18, 0
    %p134 = por %p132, %p133
    %s135 = ssub.s32 %s12, %s19
    %p136 = scmp.eq.s32.totalorder %s135, 0
    %s138 = sadd.s32 %s137, 1
    %s139 = scalar_select %p136, %s137, %s138
    %p142 = pneg %p136
    %p143 = scmp.eq.s32.totalorder %s12, 3
    %p144 = por %p142, %p143
    %p145 = scmp.ne.s32.totalorder %s137, %s140
    %p146 = scmp.eq.s32.totalorder %s12, 0
    %p147 = por %p145, %p146
    %p148 = scmp.ne.s32.totalorder %s137, %s140
    %p149 = scmp.eq.s32.totalorder %s17, 3
    %p150 = por %p148, %p149
    %p151 = scmp.ne.s32.totalorder %s140, %s141
    %p152 = scmp.eq.s32.totalorder %s17, 0
    %p153 = por %p151, %p152
    %p154 = scmp.ne.s32.totalorder %s140, %s141
    %p155 = scmp.eq.s32.totalorder %s18, 3
    %p156 = por %p154, %p155
    %p158 = scmp.ne.s32.totalorder %s141, %s157
    %p159 = scmp.eq.s32.totalorder %s18, 0
    %p160 = por %p158, %p159
    %s161 = ssub.s32 %s12, %s19
    %p162 = scmp.eq.s32.totalorder %s161, 0
    %s164 = sadd.s32 %s163, 1
    %s165 = scalar_select %p162, %s163, %s164
    %p168 = pneg %p162
    %p169 = scmp.eq.s32.totalorder %s12, 3
    %p170 = por %p168, %p169
    %p171 = scmp.ne.s32.totalorder %s163, %s166
    %p172 = scmp.eq.s32.totalorder %s12, 0
    %p173 = por %p171, %p172
    %p174 = scmp.ne.s32.totalorder %s163, %s166
    %p175 = scmp.eq.s32.totalorder %s17, 3
    %p176 = por %p174, %p175
    %p177 = scmp.ne.s32.totalorder %s166, %s167
    %p178 = scmp.eq.s32.totalorder %s17, 0
    %p179 = por %p177, %p178
    %p180 = scmp.ne.s32.totalorder %s166, %s167
    %p181 = scmp.eq.s32.totalorder %s18, 3
    %p182 = por %p180, %p181
    %p184 = scmp.ne.s32.totalorder %s167, %s183
    %p185 = scmp.eq.s32.totalorder %s18, 0
    %p186 = por %p184, %p185
    %p187 = scmp.le.s32.totalorder 1, %s12
    %p188 = scmp.lt.s32.totalorder %s12, 5
    %p189 = pnand %p187, %p188
    %p190 = pneg %p189
    // Predicated region
    $region9: #{tpu_custom_call.1} parent=5 // pred_check
      _
    $region10: #{tpu_custom_call.1} parent=5 // pred_check_branch
      %192 = sbr.rel (%p189) target = $region12
    $region11: #{tpu_custom_call.1} parent=5 // pred_region
      %s193 = ssub.s32 %s12, 1
      // Predicated region
      $region13: #{tpu_custom_call.1} parent=11 // pred_check
        %p194 = pneg %p33
      $region14: #{tpu_custom_call.1} parent=11 // pred_check_branch
        %196 = sbr.rel (%p194) target = $region16
      $region15: #{tpu_custom_call.1} parent=11 // pred_region
        _
      $region16: #{tpu_custom_call.1} parent=11 // pred_fallthru
        _
      // Predicated region
      $region17: #{tpu_custom_call.1} parent=11 // pred_check
        %p197 = pneg %p54
      $region18: #{tpu_custom_call.1} parent=11 // pred_check_branch
        %199 = sbr.rel (%p197) target = $region20
      $region19: #{tpu_custom_call.1} parent=11 // pred_region
        _
      $region20: #{tpu_custom_call.1} parent=11 // pred_fallthru
        _
      // Predicated region
      $region21: #{tpu_custom_call.1} parent=11 // pred_check
        %p200 = pneg %p75
      $region22: #{tpu_custom_call.1} parent=11 // pred_check_branch
        %202 = sbr.rel (%p200) target = $region24
      $region23: #{tpu_custom_call.1} parent=11 // pred_region
        _
      $region24: #{tpu_custom_call.1} parent=11 // pred_fallthru
        _
    $region12: #{tpu_custom_call.1} parent=5 // pred_fallthru
      _
    %p203 = scmp.lt.s32.totalorder %s12, 4
    // Predicated region
    $region25: #{tpu_custom_call.1} parent=5 // pred_check
      %p204 = pneg %p203
    $region26: #{tpu_custom_call.1} parent=5 // pred_check_branch
      %206 = sbr.rel (%p204) target = $region28
    $region27: #{tpu_custom_call.1} parent=5 // pred_region
      // Predicated region
      $region29: #{tpu_custom_call.1} parent=27 // pred_check
        %p207 = pneg %p95
      $region30: #{tpu_custom_call.1} parent=27 // pred_check_branch
        %209 = sbr.rel (%p207) target = $region32
      $region31: #{tpu_custom_call.1} parent=27 // pred_region
        %s210 = smul.u32 32, %s12
        %p211 = scmp.lt.s32.totalorder %s210, 127
        %s212 = scalar_select %p211, %s210, 127
        %s213 = smul.addr %s212, 4
        %s214 = smul.addr %s213, 4
        %s215 = scalar_lea.vmem %s3, %s214
        %s216 = smul.u32 32, %s12
      $region32: #{tpu_custom_call.1} parent=27 // pred_fallthru
        _
      // Predicated region
      $region33: #{tpu_custom_call.1} parent=27 // pred_check
        %p217 = pneg %p121
      $region34: #{tpu_custom_call.1} parent=27 // pred_check_branch
        %219 = sbr.rel (%p217) target = $region36
      $region35: #{tpu_custom_call.1} parent=27 // pred_region
        %s220 = smul.u32 32, %s12
        %p221 = scmp.lt.s32.totalorder %s220, 127
        %s222 = scalar_select %p221, %s220, 127
        %s223 = smul.addr %s222, 8
        %s224 = scalar_lea.vmem %s4, %s223
        %s225 = smul.u32 32, %s12
      $region36: #{tpu_custom_call.1} parent=27 // pred_fallthru
        _
      // Predicated region
      $region37: #{tpu_custom_call.1} parent=27 // pred_check
        %p226 = pneg %p147
      $region38: #{tpu_custom_call.1} parent=27 // pred_check_branch
        %228 = sbr.rel (%p226) target = $region40
      $region39: #{tpu_custom_call.1} parent=27 // pred_region
        %s229 = smul.u32 32, %s12
        %p230 = scmp.lt.s32.totalorder %s229, 127
        %s231 = scalar_select %p230, %s229, 127
        %s232 = smul.addr %s231, 8
        %s233 = scalar_lea.vmem %s5, %s232
        %s234 = smul.u32 32, %s12
      $region40: #{tpu_custom_call.1} parent=27 // pred_fallthru
        _
    $region28: #{tpu_custom_call.1} parent=5 // pred_fallthru
      _
    %p235 = scmp.le.s32.totalorder 1, %s12
    %p236 = scmp.lt.s32.totalorder %s12, 5
    %p237 = pnand %p235, %p236
    %p238 = pneg %p237
    // Predicated region
    $region41: #{tpu_custom_call.1} parent=5 // pred_check
      _
    $region42: #{tpu_custom_call.1} parent=5 // pred_check_branch
      %240 = sbr.rel (%p237) target = $region44
    $region43: #{tpu_custom_call.1} parent=5 // pred_region
      %s241 = ssub.s32 %s12, 1
      %p242 = pneg %p33
      %p243 = pneg %p30
      %p244 = pneg %p54
      %p245 = pneg %p51
      %p246 = pneg %p75
      %p247 = pneg %p72
      %s248 = smul.u32 32, %s17
      %p249 = scmp.lt.s32.totalorder %s248, 127
      %s250 = scalar_select %p249, %s248, 127
      %s251 = smul.addr %s250, 4
      %s252 = smul.addr %s251, 4
      %s253 = scalar_lea.vmem %s3, %s252
      %p254 = pneg %p101
      %p255 = pneg %p98
      %s256 = smul.u32 32, %s17
      %p257 = scmp.lt.s32.totalorder %s256, 127
      %s258 = scalar_select %p257, %s256, 127
      %s259 = smul.addr %s258, 8
      %s260 = scalar_lea.vmem %s4, %s259
      %p261 = pneg %p127
      %p262 = pneg %p124
      %s263 = smul.u32 32, %s17
      %p264 = scmp.lt.s32.totalorder %s263, 127
      %s265 = scalar_select %p264, %s263, 127
      %s266 = smul.addr %s265, 8
      %s267 = scalar_lea.vmem %s5, %s266
      %p268 = pneg %p153
      %p269 = pneg %p150
      %p270 = pneg %p179
      %p271 = pneg %p176
      %s272 = smul.u32 32, %s17
      %p273 = scmp.lt.s32.totalorder %s272, 127
      %s274 = scalar_select %p273, %s272, 127
      %s275 = smul.addr %s274, 2
      %s276 = smul.addr %s275, 8
      %s277 = scalar_lea.vmem %s6, %s276
      %s278 = smul.u32 32, %s17
      %p279 = scmp.lt.s32.totalorder %s278, 127
      %s280 = scalar_select %p279, %s278, 127
      %s281 = smul.addr %s280, 4
      %s282 = smul.addr %s281, 4
      %s283 = scalar_lea.vmem %s3, %s282
      %s284 = smul.u32 32, %s17
      %s285 = smul.u32 32, %s17
      %p286 = scmp.lt.s32.totalorder %s285, 127
      %s287 = scalar_select %p286, %s285, 127
      %s288 = smul.addr %s287, 8
      %s289 = scalar_lea.vmem %s4, %s288
      %s290 = smul.u32 32, %s17
      %s291 = smul.u32 32, %s17
      %p292 = scmp.lt.s32.totalorder %s291, 127
      %s293 = scalar_select %p292, %s291, 127
      %s294 = smul.addr %s293, 8
      %s295 = scalar_lea.vmem %s5, %s294
      %s296 = smul.u32 32, %s17
      %s297 = smul.u32 32, %s17
      %p298 = scmp.lt.s32.totalorder %s297, 127
      %s299 = scalar_select %p298, %s297, 127
      %s300 = smul.addr %s299, 2
      %s301 = smul.addr %s300, 8
      %s302 = scalar_lea.vmem %s6, %s301
      %s303 = smul.u32 32, %s17
      %v304 = vld [vmem:[%s0] sm:$0xff]
      %v305 = vld [vmem:[%s0 + $0x8] sm:$0xff]
      %v306 = vld [vmem:[%s0 + $0x10] sm:$0xff]
      %v307 = vld [vmem:[%s0 + $0x18] sm:$0xff]
      %v308 = vld [vmem:[%s0 + $0x20] sm:$0xff]
      %v309 = vld [vmem:[%s0 + $0x28] sm:$0xff]
      %v310 = vld [vmem:[%s0 + $0x30] sm:$0xff]
      %v311 = vld [vmem:[%s0 + $0x38] sm:$0xff]
      %v312 = vld [vmem:[%s0 + $0x40] sm:$0xff]
      %v313 = vld [vmem:[%s0 + $0x48] sm:$0xff]
      %v314 = vld [vmem:[%s0 + $0x50] sm:$0xff]
      %v315 = vld [vmem:[%s0 + $0x58] sm:$0xff]
      %v316 = vld [vmem:[%s0 + $0x60] sm:$0xff]
      %v317 = vld [vmem:[%s0 + $0x68] sm:$0xff]
      %v318 = vld [vmem:[%s0 + $0x70] sm:$0xff]
      %v319 = vld [vmem:[%s0 + $0x78] sm:$0xff]
      %v320 = vld [vmem:[%s0 + $0x80] sm:$0xff]
      %v321 = vld [vmem:[%s0 + $0x88] sm:$0xff]
      %v322 = vld [vmem:[%s0 + $0x90] sm:$0xff]
      %v323 = vld [vmem:[%s0 + $0x98] sm:$0xff]
      %v324 = vld [vmem:[%s0 + $0xa0] sm:$0xff]
      %v325 = vld [vmem:[%s0 + $0xa8] sm:$0xff]
      %v326 = vld [vmem:[%s0 + $0xb0] sm:$0xff]
      %v327 = vld [vmem:[%s0 + $0xb8] sm:$0xff]
      %v328 = vld [vmem:[%s0 + $0xc0] sm:$0xff]
      %v329 = vld [vmem:[%s0 + $0xc8] sm:$0xff]
      %v330 = vld [vmem:[%s0 + $0xd0] sm:$0xff]
      %v331 = vld [vmem:[%s0 + $0xd8] sm:$0xff]
      %v332 = vld [vmem:[%s0 + $0xe0] sm:$0xff]
      %v333 = vld [vmem:[%s0 + $0xe8] sm:$0xff]
      %v334 = vld [vmem:[%s0 + $0xf0] sm:$0xff]
      %v335 = vld [vmem:[%s0 + $0xf8] sm:$0xff]
      %v336 = vld [vmem:[%s0 + $0x100] sm:$0xff]
      %v337 = vld [vmem:[%s0 + $0x108] sm:$0xff]
      %v338 = vld [vmem:[%s0 + $0x110] sm:$0xff]
      %v339 = vld [vmem:[%s0 + $0x118] sm:$0xff]
      %v340 = vld [vmem:[%s0 + $0x120] sm:$0xff]
      %v341 = vld [vmem:[%s0 + $0x128] sm:$0xff]
      %v342 = vld [vmem:[%s0 + $0x130] sm:$0xff]
      %v343 = vld [vmem:[%s0 + $0x138] sm:$0xff]
      %v344 = vld [vmem:[%s0 + $0x140] sm:$0xff]
      %v345 = vld [vmem:[%s0 + $0x148] sm:$0xff]
      %v346 = vld [vmem:[%s0 + $0x150] sm:$0xff]
      %v347 = vld [vmem:[%s0 + $0x158] sm:$0xff]
      %v348 = vld [vmem:[%s0 + $0x160] sm:$0xff]
      %v349 = vld [vmem:[%s0 + $0x168] sm:$0xff]
      %v350 = vld [vmem:[%s0 + $0x170] sm:$0xff]
      %v351 = vld [vmem:[%s0 + $0x178] sm:$0xff]
      %v352 = vld [vmem:[%s0 + $0x180] sm:$0xff]
      %v353 = vld [vmem:[%s0 + $0x188] sm:$0xff]
      %v354 = vld [vmem:[%s0 + $0x190] sm:$0xff]
      %v355 = vld [vmem:[%s0 + $0x198] sm:$0xff]
      %v356 = vld [vmem:[%s0 + $0x1a0] sm:$0xff]
      %v357 = vld [vmem:[%s0 + $0x1a8] sm:$0xff]
      %v358 = vld [vmem:[%s0 + $0x1b0] sm:$0xff]
      %v359 = vld [vmem:[%s0 + $0x1b8] sm:$0xff]
      %v360 = vld [vmem:[%s0 + $0x1c0] sm:$0xff]
      %v361 = vld [vmem:[%s0 + $0x1c8] sm:$0xff]
      %v362 = vld [vmem:[%s0 + $0x1d0] sm:$0xff]
      %v363 = vld [vmem:[%s0 + $0x1d8] sm:$0xff]
      %v364 = vld [vmem:[%s0 + $0x1e0] sm:$0xff]
      %v365 = vld [vmem:[%s0 + $0x1e8] sm:$0xff]
      %v366 = vld [vmem:[%s0 + $0x1f0] sm:$0xff]
      %v367 = vld [vmem:[%s0 + $0x1f8] sm:$0xff]
      %v368 = vld [vmem:[%s0 + $0x200] sm:$0xff]
      %v369 = vld [vmem:[%s0 + $0x208] sm:$0xff]
      %v370 = vld [vmem:[%s0 + $0x210] sm:$0xff]
      %v371 = vld [vmem:[%s0 + $0x218] sm:$0xff]
      %v372 = vld [vmem:[%s0 + $0x220] sm:$0xff]
      %v373 = vld [vmem:[%s0 + $0x228] sm:$0xff]
      %v374 = vld [vmem:[%s0 + $0x230] sm:$0xff]
      %v375 = vld [vmem:[%s0 + $0x238] sm:$0xff]
      %v376 = vld [vmem:[%s0 + $0x240] sm:$0xff]
      %v377 = vld [vmem:[%s0 + $0x248] sm:$0xff]
      %v378 = vld [vmem:[%s0 + $0x250] sm:$0xff]
      %v379 = vld [vmem:[%s0 + $0x258] sm:$0xff]
      %v380 = vld [vmem:[%s0 + $0x260] sm:$0xff]
      %v381 = vld [vmem:[%s0 + $0x268] sm:$0xff]
      %v382 = vld [vmem:[%s0 + $0x270] sm:$0xff]
      %v383 = vld [vmem:[%s0 + $0x278] sm:$0xff]
      %v384 = vld [vmem:[%s0 + $0x280] sm:$0xff]
      %v385 = vld [vmem:[%s0 + $0x288] sm:$0xff]
      %v386 = vld [vmem:[%s0 + $0x290] sm:$0xff]
      %v387 = vld [vmem:[%s0 + $0x298] sm:$0xff]
      %v388 = vld [vmem:[%s0 + $0x2a0] sm:$0xff]
      %v389 = vld [vmem:[%s0 + $0x2a8] sm:$0xff]
      %v390 = vld [vmem:[%s0 + $0x2b0] sm:$0xff]
      %v391 = vld [vmem:[%s0 + $0x2b8] sm:$0xff]
      %v392 = vld [vmem:[%s0 + $0x2c0] sm:$0xff]
      %v393 = vld [vmem:[%s0 + $0x2c8] sm:$0xff]
      %v394 = vld [vmem:[%s0 + $0x2d0] sm:$0xff]
      %v395 = vld [vmem:[%s0 + $0x2d8] sm:$0xff]
      %v396 = vld [vmem:[%s0 + $0x2e0] sm:$0xff]
      %v397 = vld [vmem:[%s0 + $0x2e8] sm:$0xff]
      %v398 = vld [vmem:[%s0 + $0x2f0] sm:$0xff]
      %v399 = vld [vmem:[%s0 + $0x2f8] sm:$0xff]
      %v400 = vld [vmem:[%s0 + $0x300] sm:$0xff]
      %v401 = vld [vmem:[%s0 + $0x308] sm:$0xff]
      %v402 = vld [vmem:[%s0 + $0x310] sm:$0xff]
      %v403 = vld [vmem:[%s0 + $0x318] sm:$0xff]
      %v404 = vld [vmem:[%s0 + $0x320] sm:$0xff]
      %v405 = vld [vmem:[%s0 + $0x328] sm:$0xff]
      %v406 = vld [vmem:[%s0 + $0x330] sm:$0xff]
      %v407 = vld [vmem:[%s0 + $0x338] sm:$0xff]
      %v408 = vld [vmem:[%s0 + $0x340] sm:$0xff]
      %v409 = vld [vmem:[%s0 + $0x348] sm:$0xff]
      %v410 = vld [vmem:[%s0 + $0x350] sm:$0xff]
      %v411 = vld [vmem:[%s0 + $0x358] sm:$0xff]
      %v412 = vld [vmem:[%s0 + $0x360] sm:$0xff]
      %v413 = vld [vmem:[%s0 + $0x368] sm:$0xff]
      %v414 = vld [vmem:[%s0 + $0x370] sm:$0xff]
      %v415 = vld [vmem:[%s0 + $0x378] sm:$0xff]
      %v416 = vld [vmem:[%s0 + $0x380] sm:$0xff]
      %v417 = vld [vmem:[%s0 + $0x388] sm:$0xff]
      %v418 = vld [vmem:[%s0 + $0x390] sm:$0xff]
      %v419 = vld [vmem:[%s0 + $0x398] sm:$0xff]
      %v420 = vld [vmem:[%s0 + $0x3a0] sm:$0xff]
      %v421 = vld [vmem:[%s0 + $0x3a8] sm:$0xff]
      %v422 = vld [vmem:[%s0 + $0x3b0] sm:$0xff]
      %v423 = vld [vmem:[%s0 + $0x3b8] sm:$0xff]
      %v424 = vld [vmem:[%s0 + $0x3c0] sm:$0xff]
      %v425 = vld [vmem:[%s0 + $0x3c8] sm:$0xff]
      %v426 = vld [vmem:[%s0 + $0x3d0] sm:$0xff]
      %v427 = vld [vmem:[%s0 + $0x3d8] sm:$0xff]
      %v428 = vld [vmem:[%s0 + $0x3e0] sm:$0xff]
      %v429 = vld [vmem:[%s0 + $0x3e8] sm:$0xff]
      %v430 = vld [vmem:[%s0 + $0x3f0] sm:$0xff]
      %v431 = vld [vmem:[%s0 + $0x3f8] sm:$0xff]
      %vm432 = vcmask 556032
      %v433 = vsel %vm432, %v305, 0.0
      %v434 = vadd.f32 %v304, %v433
      %435 = vadd.xlane.f32.xlu0 %v434
      %v436 = vpop.xlane.xlu0 %435
      %v437 = vsel %vm432, %v307, 0.0
      %v438 = vadd.f32 %v306, %v437
      %439 = vadd.xlane.f32.xlu0 %v438
      %v440 = vpop.xlane.xlu0 %439
      %v441 = vsel %vm432, %v309, 0.0
      %v442 = vadd.f32 %v308, %v441
      %443 = vadd.xlane.f32.xlu0 %v442
      %v444 = vpop.xlane.xlu0 %443
      %v445 = vsel %vm432, %v311, 0.0
      %v446 = vadd.f32 %v310, %v445
      %447 = vadd.xlane.f32.xlu0 %v446
      %v448 = vpop.xlane.xlu0 %447
      %v449 = vsel %vm432, %v313, 0.0
      %v450 = vadd.f32 %v312, %v449
      %451 = vadd.xlane.f32.xlu0 %v450
      %v452 = vpop.xlane.xlu0 %451
      %v453 = vsel %vm432, %v315, 0.0
      %v454 = vadd.f32 %v314, %v453
      %455 = vadd.xlane.f32.xlu0 %v454
      %v456 = vpop.xlane.xlu0 %455
      %v457 = vsel %vm432, %v317, 0.0
      %v458 = vadd.f32 %v316, %v457
      %459 = vadd.xlane.f32.xlu0 %v458
      %v460 = vpop.xlane.xlu0 %459
      %v461 = vsel %vm432, %v319, 0.0
      %v462 = vadd.f32 %v318, %v461
      %463 = vadd.xlane.f32.xlu0 %v462
      %v464 = vpop.xlane.xlu0 %463
      %v465 = vsel %vm432, %v321, 0.0
      %v466 = vadd.f32 %v320, %v465
      %467 = vadd.xlane.f32.xlu0 %v466
      %v468 = vpop.xlane.xlu0 %467
      %v469 = vsel %vm432, %v323, 0.0
      %v470 = vadd.f32 %v322, %v469
      %471 = vadd.xlane.f32.xlu0 %v470
      %v472 = vpop.xlane.xlu0 %471
      %v473 = vsel %vm432, %v325, 0.0
      %v474 = vadd.f32 %v324, %v473
      %475 = vadd.xlane.f32.xlu0 %v474
      %v476 = vpop.xlane.xlu0 %475
      %v477 = vsel %vm432, %v327, 0.0
      %v478 = vadd.f32 %v326, %v477
      %479 = vadd.xlane.f32.xlu0 %v478
      %v480 = vpop.xlane.xlu0 %479
      %v481 = vsel %vm432, %v329, 0.0
      %v482 = vadd.f32 %v328, %v481
      %483 = vadd.xlane.f32.xlu0 %v482
      %v484 = vpop.xlane.xlu0 %483
      %v485 = vsel %vm432, %v331, 0.0
      %v486 = vadd.f32 %v330, %v485
      %487 = vadd.xlane.f32.xlu0 %v486
      %v488 = vpop.xlane.xlu0 %487
      %v489 = vsel %vm432, %v333, 0.0
      %v490 = vadd.f32 %v332, %v489
      %491 = vadd.xlane.f32.xlu0 %v490
      %v492 = vpop.xlane.xlu0 %491
      %v493 = vsel %vm432, %v335, 0.0
      %v494 = vadd.f32 %v334, %v493
      %495 = vadd.xlane.f32.xlu0 %v494
      %v496 = vpop.xlane.xlu0 %495
      %v497 = vsel %vm432, %v337, 0.0
      %v498 = vadd.f32 %v336, %v497
      %499 = vadd.xlane.f32.xlu0 %v498
      %v500 = vpop.xlane.xlu0 %499
      %v501 = vsel %vm432, %v339, 0.0
      %v502 = vadd.f32 %v338, %v501
      %503 = vadd.xlane.f32.xlu0 %v502
      %v504 = vpop.xlane.xlu0 %503
      %v505 = vsel %vm432, %v341, 0.0
      %v506 = vadd.f32 %v340, %v505
      %507 = vadd.xlane.f32.xlu0 %v506
      %v508 = vpop.xlane.xlu0 %507
      %v509 = vsel %vm432, %v343, 0.0
      %v510 = vadd.f32 %v342, %v509
      %511 = vadd.xlane.f32.xlu0 %v510
      %v512 = vpop.xlane.xlu0 %511
      %v513 = vsel %vm432, %v345, 0.0
      %v514 = vadd.f32 %v344, %v513
      %515 = vadd.xlane.f32.xlu0 %v514
      %v516 = vpop.xlane.xlu0 %515
      %v517 = vsel %vm432, %v347, 0.0
      %v518 = vadd.f32 %v346, %v517
      %519 = vadd.xlane.f32.xlu0 %v518
      %v520 = vpop.xlane.xlu0 %519
      %v521 = vsel %vm432, %v349, 0.0
      %v522 = vadd.f32 %v348, %v521
      %523 = vadd.xlane.f32.xlu0 %v522
      %v524 = vpop.xlane.xlu0 %523
      %v525 = vsel %vm432, %v351, 0.0
      %v526 = vadd.f32 %v350, %v525
      %527 = vadd.xlane.f32.xlu0 %v526
      %v528 = vpop.xlane.xlu0 %527
      %v529 = vsel %vm432, %v353, 0.0
      %v530 = vadd.f32 %v352, %v529
      %531 = vadd.xlane.f32.xlu0 %v530
      %v532 = vpop.xlane.xlu0 %531
      %v533 = vsel %vm432, %v355, 0.0
      %v534 = vadd.f32 %v354, %v533
      %535 = vadd.xlane.f32.xlu0 %v534
      %v536 = vpop.xlane.xlu0 %535
      %v537 = vsel %vm432, %v357, 0.0
      %v538 = vadd.f32 %v356, %v537
      %539 = vadd.xlane.f32.xlu0 %v538
      %v540 = vpop.xlane.xlu0 %539
      %v541 = vsel %vm432, %v359, 0.0
      %v542 = vadd.f32 %v358, %v541
      %543 = vadd.xlane.f32.xlu0 %v542
      %v544 = vpop.xlane.xlu0 %543
      %v545 = vsel %vm432, %v361, 0.0
      %v546 = vadd.f32 %v360, %v545
      %547 = vadd.xlane.f32.xlu0 %v546
      %v548 = vpop.xlane.xlu0 %547
      %v549 = vsel %vm432, %v363, 0.0
      %v550 = vadd.f32 %v362, %v549
      %551 = vadd.xlane.f32.xlu0 %v550
      %v552 = vpop.xlane.xlu0 %551
      %v553 = vsel %vm432, %v365, 0.0
      %v554 = vadd.f32 %v364, %v553
      %555 = vadd.xlane.f32.xlu0 %v554
      %v556 = vpop.xlane.xlu0 %555
      %v557 = vsel %vm432, %v367, 0.0
      %v558 = vadd.f32 %v366, %v557
      %559 = vadd.xlane.f32.xlu0 %v558
      %v560 = vpop.xlane.xlu0 %559
      %v561 = vsel %vm432, %v369, 0.0
      %v562 = vadd.f32 %v368, %v561
      %563 = vadd.xlane.f32.xlu0 %v562
      %v564 = vpop.xlane.xlu0 %563
      %v565 = vsel %vm432, %v371, 0.0
      %v566 = vadd.f32 %v370, %v565
      %567 = vadd.xlane.f32.xlu0 %v566
      %v568 = vpop.xlane.xlu0 %567
      %v569 = vsel %vm432, %v373, 0.0
      %v570 = vadd.f32 %v372, %v569
      %571 = vadd.xlane.f32.xlu0 %v570
      %v572 = vpop.xlane.xlu0 %571
      %v573 = vsel %vm432, %v375, 0.0
      %v574 = vadd.f32 %v374, %v573
      %575 = vadd.xlane.f32.xlu0 %v574
      %v576 = vpop.xlane.xlu0 %575
      %v577 = vsel %vm432, %v377, 0.0
      %v578 = vadd.f32 %v376, %v577
      %579 = vadd.xlane.f32.xlu0 %v578
      %v580 = vpop.xlane.xlu0 %579
      %v581 = vsel %vm432, %v379, 0.0
      %v582 = vadd.f32 %v378, %v581
      %583 = vadd.xlane.f32.xlu0 %v582
      %v584 = vpop.xlane.xlu0 %583
      %v585 = vsel %vm432, %v381, 0.0
      %v586 = vadd.f32 %v380, %v585
      %587 = vadd.xlane.f32.xlu0 %v586
      %v588 = vpop.xlane.xlu0 %587
      %v589 = vsel %vm432, %v383, 0.0
      %v590 = vadd.f32 %v382, %v589
      %591 = vadd.xlane.f32.xlu0 %v590
      %v592 = vpop.xlane.xlu0 %591
      %v593 = vsel %vm432, %v385, 0.0
      %v594 = vadd.f32 %v384, %v593
      %595 = vadd.xlane.f32.xlu0 %v594
      %v596 = vpop.xlane.xlu0 %595
      %v597 = vsel %vm432, %v387, 0.0
      %v598 = vadd.f32 %v386, %v597
      %599 = vadd.xlane.f32.xlu0 %v598
      %v600 = vpop.xlane.xlu0 %599
      %v601 = vsel %vm432, %v389, 0.0
      %v602 = vadd.f32 %v388, %v601
      %603 = vadd.xlane.f32.xlu0 %v602
      %v604 = vpop.xlane.xlu0 %603
      %v605 = vsel %vm432, %v391, 0.0
      %v606 = vadd.f32 %v390, %v605
      %607 = vadd.xlane.f32.xlu0 %v606
      %v608 = vpop.xlane.xlu0 %607
      %v609 = vsel %vm432, %v393, 0.0
      %v610 = vadd.f32 %v392, %v609
      %611 = vadd.xlane.f32.xlu0 %v610
      %v612 = vpop.xlane.xlu0 %611
      %v613 = vsel %vm432, %v395, 0.0
      %v614 = vadd.f32 %v394, %v613
      %615 = vadd.xlane.f32.xlu0 %v614
      %v616 = vpop.xlane.xlu0 %615
      %v617 = vsel %vm432, %v397, 0.0
      %v618 = vadd.f32 %v396, %v617
      %619 = vadd.xlane.f32.xlu0 %v618
      %v620 = vpop.xlane.xlu0 %619
      %v621 = vsel %vm432, %v399, 0.0
      %v622 = vadd.f32 %v398, %v621
      %623 = vadd.xlane.f32.xlu0 %v622
      %v624 = vpop.xlane.xlu0 %623
      %v625 = vsel %vm432, %v401, 0.0
      %v626 = vadd.f32 %v400, %v625
      %627 = vadd.xlane.f32.xlu0 %v626
      %v628 = vpop.xlane.xlu0 %627
      %v629 = vsel %vm432, %v403, 0.0
      %v630 = vadd.f32 %v402, %v629
      %631 = vadd.xlane.f32.xlu0 %v630
      %v632 = vpop.xlane.xlu0 %631
      %v633 = vsel %vm432, %v405, 0.0
      %v634 = vadd.f32 %v404, %v633
      %635 = vadd.xlane.f32.xlu0 %v634
      %v636 = vpop.xlane.xlu0 %635
      %v637 = vsel %vm432, %v407, 0.0
      %v638 = vadd.f32 %v406, %v637
      %639 = vadd.xlane.f32.xlu0 %v638
      %v640 = vpop.xlane.xlu0 %639
      %v641 = vsel %vm432, %v409, 0.0
      %v642 = vadd.f32 %v408, %v641
      %643 = vadd.xlane.f32.xlu0 %v642
      %v644 = vpop.xlane.xlu0 %643
      %v645 = vsel %vm432, %v411, 0.0
      %v646 = vadd.f32 %v410, %v645
      %647 = vadd.xlane.f32.xlu0 %v646
      %v648 = vpop.xlane.xlu0 %647
      %v649 = vsel %vm432, %v413, 0.0
      %v650 = vadd.f32 %v412, %v649
      %651 = vadd.xlane.f32.xlu0 %v650
      %v652 = vpop.xlane.xlu0 %651
      %v653 = vsel %vm432, %v415, 0.0
      %v654 = vadd.f32 %v414, %v653
      %655 = vadd.xlane.f32.xlu0 %v654
      %v656 = vpop.xlane.xlu0 %655
      %v657 = vsel %vm432, %v417, 0.0
      %v658 = vadd.f32 %v416, %v657
      %659 = vadd.xlane.f32.xlu0 %v658
      %v660 = vpop.xlane.xlu0 %659
      %v661 = vsel %vm432, %v419, 0.0
      %v662 = vadd.f32 %v418, %v661
      %663 = vadd.xlane.f32.xlu0 %v662
      %v664 = vpop.xlane.xlu0 %663
      %v665 = vsel %vm432, %v421, 0.0
      %v666 = vadd.f32 %v420, %v665
      %667 = vadd.xlane.f32.xlu0 %v666
      %v668 = vpop.xlane.xlu0 %667
      %v669 = vsel %vm432, %v423, 0.0
      %v670 = vadd.f32 %v422, %v669
      %671 = vadd.xlane.f32.xlu0 %v670
      %v672 = vpop.xlane.xlu0 %671
      %v673 = vsel %vm432, %v425, 0.0
      %v674 = vadd.f32 %v424, %v673
      %675 = vadd.xlane.f32.xlu0 %v674
      %v676 = vpop.xlane.xlu0 %675
      %v677 = vsel %vm432, %v427, 0.0
      %v678 = vadd.f32 %v426, %v677
      %679 = vadd.xlane.f32.xlu0 %v678
      %v680 = vpop.xlane.xlu0 %679
      %v681 = vsel %vm432, %v429, 0.0
      %v682 = vadd.f32 %v428, %v681
      %683 = vadd.xlane.f32.xlu0 %v682
      %v684 = vpop.xlane.xlu0 %683
      %v685 = vsel %vm432, %v431, 0.0
      %v686 = vadd.f32 %v430, %v685
      %687 = vadd.xlane.f32.xlu0 %v686
      %v688 = vpop.xlane.xlu0 %687
      %v689 = vrcp.pop 196.0
      %v690 = vmul.f32 %v436, %v689
      %v691 = vmul.f32 %v440, %v689
      %v692 = vmul.f32 %v444, %v689
      %v693 = vmul.f32 %v448, %v689
      %v694 = vmul.f32 %v452, %v689
      %v695 = vmul.f32 %v456, %v689
      %v696 = vmul.f32 %v460, %v689
      %v697 = vmul.f32 %v464, %v689
      %v698 = vmul.f32 %v468, %v689
      %v699 = vmul.f32 %v472, %v689
      %v700 = vmul.f32 %v476, %v689
      %v701 = vmul.f32 %v480, %v689
      %v702 = vmul.f32 %v484, %v689
      %v703 = vmul.f32 %v488, %v689
      %v704 = vmul.f32 %v492, %v689
      %v705 = vmul.f32 %v496, %v689
      %v706 = vmul.f32 %v500, %v689
      %v707 = vmul.f32 %v504, %v689
      %v708 = vmul.f32 %v508, %v689
      %v709 = vmul.f32 %v512, %v689
      %v710 = vmul.f32 %v516, %v689
      %v711 = vmul.f32 %v520, %v689
      %v712 = vmul.f32 %v524, %v689
      %v713 = vmul.f32 %v528, %v689
      %v714 = vmul.f32 %v532, %v689
      %v715 = vmul.f32 %v536, %v689
      %v716 = vmul.f32 %v540, %v689
      %v717 = vmul.f32 %v544, %v689
      %v718 = vmul.f32 %v548, %v689
      %v719 = vmul.f32 %v552, %v689
      %v720 = vmul.f32 %v556, %v689
      %v721 = vmul.f32 %v560, %v689
      %v722 = vmul.f32 %v564, %v689
      %v723 = vmul.f32 %v568, %v689
      %v724 = vmul.f32 %v572, %v689
      %v725 = vmul.f32 %v576, %v689
      %v726 = vmul.f32 %v580, %v689
      %v727 = vmul.f32 %v584, %v689
      %v728 = vmul.f32 %v588, %v689
      %v729 = vmul.f32 %v592, %v689
      %v730 = vmul.f32 %v596, %v689
      %v731 = vmul.f32 %v600, %v689
      %v732 = vmul.f32 %v604, %v689
      %v733 = vmul.f32 %v608, %v689
      %v734 = vmul.f32 %v612, %v689
      %v735 = vmul.f32 %v616, %v689
      %v736 = vmul.f32 %v620, %v689
      %v737 = vmul.f32 %v624, %v689
      %v738 = vmul.f32 %v628, %v689
      %v739 = vmul.f32 %v632, %v689
      %v740 = vmul.f32 %v636, %v689
      %v741 = vmul.f32 %v640, %v689
      %v742 = vmul.f32 %v644, %v689
      %v743 = vmul.f32 %v648, %v689
      %v744 = vmul.f32 %v652, %v689
      %v745 = vmul.f32 %v656, %v689
      %v746 = vmul.f32 %v660, %v689
      %v747 = vmul.f32 %v664, %v689
      %v748 = vmul.f32 %v668, %v689
      %v749 = vmul.f32 %v672, %v689
      %v750 = vmul.f32 %v676, %v689
      %v751 = vmul.f32 %v680, %v689
      %v752 = vmul.f32 %v684, %v689
      %v753 = vmul.f32 %v688, %v689
      %v754 = vsub.f32 %v304, %v690
      %v755 = vsub.f32 %v305, %v690
      %v756 = vsub.f32 %v306, %v691
      %v757 = vsub.f32 %v307, %v691
      %v758 = vsub.f32 %v308, %v692
      %v759 = vsub.f32 %v309, %v692
      %v760 = vsub.f32 %v310, %v693
      %v761 = vsub.f32 %v311, %v693
      %v762 = vsub.f32 %v312, %v694
      %v763 = vsub.f32 %v313, %v694
      %v764 = vsub.f32 %v314, %v695
      %v765 = vsub.f32 %v315, %v695
      %v766 = vsub.f32 %v316, %v696
      %v767 = vsub.f32 %v317, %v696
      %v768 = vsub.f32 %v318, %v697
      %v769 = vsub.f32 %v319, %v697
      %v770 = vsub.f32 %v320, %v698
      %v771 = vsub.f32 %v321, %v698
      %v772 = vsub.f32 %v322, %v699
      %v773 = vsub.f32 %v323, %v699
      %v774 = vsub.f32 %v324, %v700
      %v775 = vsub.f32 %v325, %v700
      %v776 = vsub.f32 %v326, %v701
      %v777 = vsub.f32 %v327, %v701
      %v778 = vsub.f32 %v328, %v702
      %v779 = vsub.f32 %v329, %v702
      %v780 = vsub.f32 %v330, %v703
      %v781 = vsub.f32 %v331, %v703
      %v782 = vsub.f32 %v332, %v704
      %v783 = vsub.f32 %v333, %v704
      %v784 = vsub.f32 %v334, %v705
      %v785 = vsub.f32 %v335, %v705
      %v786 = vsub.f32 %v336, %v706
      %v787 = vsub.f32 %v337, %v706
      %v788 = vsub.f32 %v338, %v707
      %v789 = vsub.f32 %v339, %v707
      %v790 = vsub.f32 %v340, %v708
      %v791 = vsub.f32 %v341, %v708
      %v792 = vsub.f32 %v342, %v709
      %v793 = vsub.f32 %v343, %v709
      %v794 = vsub.f32 %v344, %v710
      %v795 = vsub.f32 %v345, %v710
      %v796 = vsub.f32 %v346, %v711
      %v797 = vsub.f32 %v347, %v711
      %v798 = vsub.f32 %v348, %v712
      %v799 = vsub.f32 %v349, %v712
      %v800 = vsub.f32 %v350, %v713
      %v801 = vsub.f32 %v351, %v713
      %v802 = vsub.f32 %v352, %v714
      %v803 = vsub.f32 %v353, %v714
      %v804 = vsub.f32 %v354, %v715
      %v805 = vsub.f32 %v355, %v715
      %v806 = vsub.f32 %v356, %v716
      %v807 = vsub.f32 %v357, %v716
      %v808 = vsub.f32 %v358, %v717
      %v809 = vsub.f32 %v359, %v717
      %v810 = vsub.f32 %v360, %v718
      %v811 = vsub.f32 %v361, %v718
      %v812 = vsub.f32 %v362, %v719
      %v813 = vsub.f32 %v363, %v719
      %v814 = vsub.f32 %v364, %v720
      %v815 = vsub.f32 %v365, %v720
      %v816 = vsub.f32 %v366, %v721
      %v817 = vsub.f32 %v367, %v721
      %v818 = vsub.f32 %v368, %v722
      %v819 = vsub.f32 %v369, %v722
      %v820 = vsub.f32 %v370, %v723
      %v821 = vsub.f32 %v371, %v723
      %v822 = vsub.f32 %v372, %v724
      %v823 = vsub.f32 %v373, %v724
      %v824 = vsub.f32 %v374, %v725
      %v825 = vsub.f32 %v375, %v725
      %v826 = vsub.f32 %v376, %v726
      %v827 = vsub.f32 %v377, %v726
      %v828 = vsub.f32 %v378, %v727
      %v829 = vsub.f32 %v379, %v727
      %v830 = vsub.f32 %v380, %v728
      %v831 = vsub.f32 %v381, %v728
      %v832 = vsub.f32 %v382, %v729
      %v833 = vsub.f32 %v383, %v729
      %v834 = vsub.f32 %v384, %v730
      %v835 = vsub.f32 %v385, %v730
      %v836 = vsub.f32 %v386, %v731
      %v837 = vsub.f32 %v387, %v731
      %v838 = vsub.f32 %v388, %v732
      %v839 = vsub.f32 %v389, %v732
      %v840 = vsub.f32 %v390, %v733
      %v841 = vsub.f32 %v391, %v733
      %v842 = vsub.f32 %v392, %v734
      %v843 = vsub.f32 %v393, %v734
      %v844 = vsub.f32 %v394, %v735
      %v845 = vsub.f32 %v395, %v735
      %v846 = vsub.f32 %v396, %v736
      %v847 = vsub.f32 %v397, %v736
      %v848 = vsub.f32 %v398, %v737
      %v849 = vsub.f32 %v399, %v737
      %v850 = vsub.f32 %v400, %v738
      %v851 = vsub.f32 %v401, %v738
      %v852 = vsub.f32 %v402, %v739
      %v853 = vsub.f32 %v403, %v739
      %v854 = vsub.f32 %v404, %v740
      %v855 = vsub.f32 %v405, %v740
      %v856 = vsub.f32 %v406, %v741
      %v857 = vsub.f32 %v407, %v741
      %v858 = vsub.f32 %v408, %v742
      %v859 = vsub.f32 %v409, %v742
      %v860 = vsub.f32 %v410, %v743
      %v861 = vsub.f32 %v411, %v743
      %v862 = vsub.f32 %v412, %v744
      %v863 = vsub.f32 %v413, %v744
      %v864 = vsub.f32 %v414, %v745
      %v865 = vsub.f32 %v415, %v745
      %v866 = vsub.f32 %v416, %v746
      %v867 = vsub.f32 %v417, %v746
      %v868 = vsub.f32 %v418, %v747
      %v869 = vsub.f32 %v419, %v747
      %v870 = vsub.f32 %v420, %v748
      %v871 = vsub.f32 %v421, %v748
      %v872 = vsub.f32 %v422, %v749
      %v873 = vsub.f32 %v423, %v749
      %v874 = vsub.f32 %v424, %v750
      %v875 = vsub.f32 %v425, %v750
      %v876 = vsub.f32 %v426, %v751
      %v877 = vsub.f32 %v427, %v751
      %v878 = vsub.f32 %v428, %v752
      %v879 = vsub.f32 %v429, %v752
      %v880 = vsub.f32 %v430, %v753
      %v881 = vsub.f32 %v431, %v753
      %v882 = vmul.f32 %v754, %v754
      %v883 = vmul.f32 %v755, %v755
      %v884 = vmul.f32 %v756, %v756
      %v885 = vmul.f32 %v757, %v757
      %v886 = vmul.f32 %v758, %v758
      %v887 = vmul.f32 %v759, %v759
      %v888 = vmul.f32 %v760, %v760
      %v889 = vmul.f32 %v761, %v761
      %v890 = vmul.f32 %v762, %v762
      %v891 = vmul.f32 %v763, %v763
      %v892 = vmul.f32 %v764, %v764
      %v893 = vmul.f32 %v765, %v765
      %v894 = vmul.f32 %v766, %v766
      %v895 = vmul.f32 %v767, %v767
      %v896 = vmul.f32 %v768, %v768
      %v897 = vmul.f32 %v769, %v769
      %v898 = vmul.f32 %v770, %v770
      %v899 = vmul.f32 %v771, %v771
      %v900 = vmul.f32 %v772, %v772
      %v901 = vmul.f32 %v773, %v773
      %v902 = vmul.f32 %v774, %v774
      %v903 = vmul.f32 %v775, %v775
      %v904 = vmul.f32 %v776, %v776
      %v905 = vmul.f32 %v777, %v777
      %v906 = vmul.f32 %v778, %v778
      %v907 = vmul.f32 %v779, %v779
      %v908 = vmul.f32 %v780, %v780
      %v909 = vmul.f32 %v781, %v781
      %v910 = vmul.f32 %v782, %v782
      %v911 = vmul.f32 %v783, %v783
      %v912 = vmul.f32 %v784, %v784
      %v913 = vmul.f32 %v785, %v785
      %v914 = vmul.f32 %v786, %v786
      %v915 = vmul.f32 %v787, %v787
      %v916 = vmul.f32 %v788, %v788
      %v917 = vmul.f32 %v789, %v789
      %v918 = vmul.f32 %v790, %v790
      %v919 = vmul.f32 %v791, %v791
      %v920 = vmul.f32 %v792, %v792
      %v921 = vmul.f32 %v793, %v793
      %v922 = vmul.f32 %v794, %v794
      %v923 = vmul.f32 %v795, %v795
      %v924 = vmul.f32 %v796, %v796
      %v925 = vmul.f32 %v797, %v797
      %v926 = vmul.f32 %v798, %v798
      %v927 = vmul.f32 %v799, %v799
      %v928 = vmul.f32 %v800, %v800
      %v929 = vmul.f32 %v801, %v801
      %v930 = vmul.f32 %v802, %v802
      %v931 = vmul.f32 %v803, %v803
      %v932 = vmul.f32 %v804, %v804
      %v933 = vmul.f32 %v805, %v805
      %v934 = vmul.f32 %v806, %v806
      %v935 = vmul.f32 %v807, %v807
      %v936 = vmul.f32 %v808, %v808
      %v937 = vmul.f32 %v809, %v809
      %v938 = vmul.f32 %v810, %v810
      %v939 = vmul.f32 %v811, %v811
      %v940 = vmul.f32 %v812, %v812
      %v941 = vmul.f32 %v813, %v813
      %v942 = vmul.f32 %v814, %v814
      %v943 = vmul.f32 %v815, %v815
      %v944 = vmul.f32 %v816, %v816
      %v945 = vmul.f32 %v817, %v817
      %v946 = vmul.f32 %v818, %v818
      %v947 = vmul.f32 %v819, %v819
      %v948 = vmul.f32 %v820, %v820
      %v949 = vmul.f32 %v821, %v821
      %v950 = vmul.f32 %v822, %v822
      %v951 = vmul.f32 %v823, %v823
      %v952 = vmul.f32 %v824, %v824
      %v953 = vmul.f32 %v825, %v825
      %v954 = vmul.f32 %v826, %v826
      %v955 = vmul.f32 %v827, %v827
      %v956 = vmul.f32 %v828, %v828
      %v957 = vmul.f32 %v829, %v829
      %v958 = vmul.f32 %v830, %v830
      %v959 = vmul.f32 %v831, %v831
      %v960 = vmul.f32 %v832, %v832
      %v961 = vmul.f32 %v833, %v833
      %v962 = vmul.f32 %v834, %v834
      %v963 = vmul.f32 %v835, %v835
      %v964 = vmul.f32 %v836, %v836
      %v965 = vmul.f32 %v837, %v837
      %v966 = vmul.f32 %v838, %v838
      %v967 = vmul.f32 %v839, %v839
      %v968 = vmul.f32 %v840, %v840
      %v969 = vmul.f32 %v841, %v841
      %v970 = vmul.f32 %v842, %v842
      %v971 = vmul.f32 %v843, %v843
      %v972 = vmul.f32 %v844, %v844
      %v973 = vmul.f32 %v845, %v845
      %v974 = vmul.f32 %v846, %v846
      %v975 = vmul.f32 %v847, %v847
      %v976 = vmul.f32 %v848, %v848
      %v977 = vmul.f32 %v849, %v849
      %v978 = vmul.f32 %v850, %v850
      %v979 = vmul.f32 %v851, %v851
      %v980 = vmul.f32 %v852, %v852
      %v981 = vmul.f32 %v853, %v853
      %v982 = vmul.f32 %v854, %v854
      %v983 = vmul.f32 %v855, %v855
      %v984 = vmul.f32 %v856, %v856
      %v985 = vmul.f32 %v857, %v857
      %v986 = vmul.f32 %v858, %v858
      %v987 = vmul.f32 %v859, %v859
      %v988 = vmul.f32 %v860, %v860
      %v989 = vmul.f32 %v861, %v861
      %v990 = vmul.f32 %v862, %v862
      %v991 = vmul.f32 %v863, %v863
      %v992 = vmul.f32 %v864, %v864
      %v993 = vmul.f32 %v865, %v865
      %v994 = vmul.f32 %v866, %v866
      %v995 = vmul.f32 %v867, %v867
      %v996 = vmul.f32 %v868, %v868
      %v997 = vmul.f32 %v869, %v869
      %v998 = vmul.f32 %v870, %v870
      %v999 = vmul.f32 %v871, %v871
      %v1000 = vmul.f32 %v872, %v872
      %v1001 = vmul.f32 %v873, %v873
      %v1002 = vmul.f32 %v874, %v874
      %v1003 = vmul.f32 %v875, %v875
      %v1004 = vmul.f32 %v876, %v876
      %v1005 = vmul.f32 %v877, %v877
      %v1006 = vmul.f32 %v878, %v878
      %v1007 = vmul.f32 %v879, %v879
      %v1008 = vmul.f32 %v880, %v880
      %v1009 = vmul.f32 %v881, %v881
      %v1010 = vsel %vm432, %v883, 0.0
      %v1011 = vadd.f32 %v882, %v1010
      %1012 = vadd.xlane.f32.xlu0 %v1011
      %v1013 = vpop.xlane.xlu0 %1012
      %v1014 = vsel %vm432, %v885, 0.0
      %v1015 = vadd.f32 %v884, %v1014
      %1016 = vadd.xlane.f32.xlu0 %v1015
      %v1017 = vpop.xlane.xlu0 %1016
      %v1018 = vsel %vm432, %v887, 0.0
      %v1019 = vadd.f32 %v886, %v1018
      %1020 = vadd.xlane.f32.xlu0 %v1019
      %v1021 = vpop.xlane.xlu0 %1020
      %v1022 = vsel %vm432, %v889, 0.0
      %v1023 = vadd.f32 %v888, %v1022
      %1024 = vadd.xlane.f32.xlu0 %v1023
      %v1025 = vpop.xlane.xlu0 %1024
      %v1026 = vsel %vm432, %v891, 0.0
      %v1027 = vadd.f32 %v890, %v1026
      %1028 = vadd.xlane.f32.xlu0 %v1027
      %v1029 = vpop.xlane.xlu0 %1028
      %v1030 = vsel %vm432, %v893, 0.0
      %v1031 = vadd.f32 %v892, %v1030
      %1032 = vadd.xlane.f32.xlu0 %v1031
      %v1033 = vpop.xlane.xlu0 %1032
      %v1034 = vsel %vm432, %v895, 0.0
      %v1035 = vadd.f32 %v894, %v1034
      %1036 = vadd.xlane.f32.xlu0 %v1035
      %v1037 = vpop.xlane.xlu0 %1036
      %v1038 = vsel %vm432, %v897, 0.0
      %v1039 = vadd.f32 %v896, %v1038
      %1040 = vadd.xlane.f32.xlu0 %v1039
      %v1041 = vpop.xlane.xlu0 %1040
      %v1042 = vsel %vm432, %v899, 0.0
      %v1043 = vadd.f32 %v898, %v1042
      %1044 = vadd.xlane.f32.xlu0 %v1043
      %v1045 = vpop.xlane.xlu0 %1044
      %v1046 = vsel %vm432, %v901, 0.0
      %v1047 = vadd.f32 %v900, %v1046
      %1048 = vadd.xlane.f32.xlu0 %v1047
      %v1049 = vpop.xlane.xlu0 %1048
      %v1050 = vsel %vm432, %v903, 0.0
      %v1051 = vadd.f32 %v902, %v1050
      %1052 = vadd.xlane.f32.xlu0 %v1051
      %v1053 = vpop.xlane.xlu0 %1052
      %v1054 = vsel %vm432, %v905, 0.0
      %v1055 = vadd.f32 %v904, %v1054
      %1056 = vadd.xlane.f32.xlu0 %v1055
      %v1057 = vpop.xlane.xlu0 %1056
      %v1058 = vsel %vm432, %v907, 0.0
      %v1059 = vadd.f32 %v906, %v1058
      %1060 = vadd.xlane.f32.xlu0 %v1059
      %v1061 = vpop.xlane.xlu0 %1060
      %v1062 = vsel %vm432, %v909, 0.0
      %v1063 = vadd.f32 %v908, %v1062
      %1064 = vadd.xlane.f32.xlu0 %v1063
      %v1065 = vpop.xlane.xlu0 %1064
      %v1066 = vsel %vm432, %v911, 0.0
      %v1067 = vadd.f32 %v910, %v1066
      %1068 = vadd.xlane.f32.xlu0 %v1067
      %v1069 = vpop.xlane.xlu0 %1068
      %v1070 = vsel %vm432, %v913, 0.0
      %v1071 = vadd.f32 %v912, %v1070
      %1072 = vadd.xlane.f32.xlu0 %v1071
      %v1073 = vpop.xlane.xlu0 %1072
      %v1074 = vsel %vm432, %v915, 0.0
      %v1075 = vadd.f32 %v914, %v1074
      %1076 = vadd.xlane.f32.xlu0 %v1075
      %v1077 = vpop.xlane.xlu0 %1076
      %v1078 = vsel %vm432, %v917, 0.0
      %v1079 = vadd.f32 %v916, %v1078
      %1080 = vadd.xlane.f32.xlu0 %v1079
      %v1081 = vpop.xlane.xlu0 %1080
      %v1082 = vsel %vm432, %v919, 0.0
      %v1083 = vadd.f32 %v918, %v1082
      %1084 = vadd.xlane.f32.xlu0 %v1083
      %v1085 = vpop.xlane.xlu0 %1084
      %v1086 = vsel %vm432, %v921, 0.0
      %v1087 = vadd.f32 %v920, %v1086
      %1088 = vadd.xlane.f32.xlu0 %v1087
      %v1089 = vpop.xlane.xlu0 %1088
      %v1090 = vsel %vm432, %v923, 0.0
      %v1091 = vadd.f32 %v922, %v1090
      %1092 = vadd.xlane.f32.xlu0 %v1091
      %v1093 = vpop.xlane.xlu0 %1092
      %v1094 = vsel %vm432, %v925, 0.0
      %v1095 = vadd.f32 %v924, %v1094
      %1096 = vadd.xlane.f32.xlu0 %v1095
      %v1097 = vpop.xlane.xlu0 %1096
      %v1098 = vsel %vm432, %v927, 0.0
      %v1099 = vadd.f32 %v926, %v1098
      %1100 = vadd.xlane.f32.xlu0 %v1099
      %v1101 = vpop.xlane.xlu0 %1100
      %v1102 = vsel %vm432, %v929, 0.0
      %v1103 = vadd.f32 %v928, %v1102
      %1104 = vadd.xlane.f32.xlu0 %v1103
      %v1105 = vpop.xlane.xlu0 %1104
      %v1106 = vsel %vm432, %v931, 0.0
      %v1107 = vadd.f32 %v930, %v1106
      %1108 = vadd.xlane.f32.xlu0 %v1107
      %v1109 = vpop.xlane.xlu0 %1108
      %v1110 = vsel %vm432, %v933, 0.0
      %v1111 = vadd.f32 %v932, %v1110
      %1112 = vadd.xlane.f32.xlu0 %v1111
      %v1113 = vpop.xlane.xlu0 %1112
      %v1114 = vsel %vm432, %v935, 0.0
      %v1115 = vadd.f32 %v934, %v1114
      %1116 = vadd.xlane.f32.xlu0 %v1115
      %v1117 = vpop.xlane.xlu0 %1116
      %v1118 = vsel %vm432, %v937, 0.0
      %v1119 = vadd.f32 %v936, %v1118
      %1120 = vadd.xlane.f32.xlu0 %v1119
      %v1121 = vpop.xlane.xlu0 %1120
      %v1122 = vsel %vm432, %v939, 0.0
      %v1123 = vadd.f32 %v938, %v1122
      %1124 = vadd.xlane.f32.xlu0 %v1123
      %v1125 = vpop.xlane.xlu0 %1124
      %v1126 = vsel %vm432, %v941, 0.0
      %v1127 = vadd.f32 %v940, %v1126
      %1128 = vadd.xlane.f32.xlu0 %v1127
      %v1129 = vpop.xlane.xlu0 %1128
      %v1130 = vsel %vm432, %v943, 0.0
      %v1131 = vadd.f32 %v942, %v1130
      %1132 = vadd.xlane.f32.xlu0 %v1131
      %v1133 = vpop.xlane.xlu0 %1132
      %v1134 = vsel %vm432, %v945, 0.0
      %v1135 = vadd.f32 %v944, %v1134
      %1136 = vadd.xlane.f32.xlu0 %v1135
      %v1137 = vpop.xlane.xlu0 %1136
      %v1138 = vsel %vm432, %v947, 0.0
      %v1139 = vadd.f32 %v946, %v1138
      %1140 = vadd.xlane.f32.xlu0 %v1139
      %v1141 = vpop.xlane.xlu0 %1140
      %v1142 = vsel %vm432, %v949, 0.0
      %v1143 = vadd.f32 %v948, %v1142
      %1144 = vadd.xlane.f32.xlu0 %v1143
      %v1145 = vpop.xlane.xlu0 %1144
      %v1146 = vsel %vm432, %v951, 0.0
      %v1147 = vadd.f32 %v950, %v1146
      %1148 = vadd.xlane.f32.xlu0 %v1147
      %v1149 = vpop.xlane.xlu0 %1148
      %v1150 = vsel %vm432, %v953, 0.0
      %v1151 = vadd.f32 %v952, %v1150
      %1152 = vadd.xlane.f32.xlu0 %v1151
      %v1153 = vpop.xlane.xlu0 %1152
      %v1154 = vsel %vm432, %v955, 0.0
      %v1155 = vadd.f32 %v954, %v1154
      %1156 = vadd.xlane.f32.xlu0 %v1155
      %v1157 = vpop.xlane.xlu0 %1156
      %v1158 = vsel %vm432, %v957, 0.0
      %v1159 = vadd.f32 %v956, %v1158
      %1160 = vadd.xlane.f32.xlu0 %v1159
      %v1161 = vpop.xlane.xlu0 %1160
      %v1162 = vsel %vm432, %v959, 0.0
      %v1163 = vadd.f32 %v958, %v1162
      %1164 = vadd.xlane.f32.xlu0 %v1163
      %v1165 = vpop.xlane.xlu0 %1164
      %v1166 = vsel %vm432, %v961, 0.0
      %v1167 = vadd.f32 %v960, %v1166
      %1168 = vadd.xlane.f32.xlu0 %v1167
      %v1169 = vpop.xlane.xlu0 %1168
      %v1170 = vsel %vm432, %v963, 0.0
      %v1171 = vadd.f32 %v962, %v1170
      %1172 = vadd.xlane.f32.xlu0 %v1171
      %v1173 = vpop.xlane.xlu0 %1172
      %v1174 = vsel %vm432, %v965, 0.0
      %v1175 = vadd.f32 %v964, %v1174
      %1176 = vadd.xlane.f32.xlu0 %v1175
      %v1177 = vpop.xlane.xlu0 %1176
      %v1178 = vsel %vm432, %v967, 0.0
      %v1179 = vadd.f32 %v966, %v1178
      %1180 = vadd.xlane.f32.xlu0 %v1179
      %v1181 = vpop.xlane.xlu0 %1180
      %v1182 = vsel %vm432, %v969, 0.0
      %v1183 = vadd.f32 %v968, %v1182
      %1184 = vadd.xlane.f32.xlu0 %v1183
      %v1185 = vpop.xlane.xlu0 %1184
      %v1186 = vsel %vm432, %v971, 0.0
      %v1187 = vadd.f32 %v970, %v1186
      %1188 = vadd.xlane.f32.xlu0 %v1187
      %v1189 = vpop.xlane.xlu0 %1188
      %v1190 = vsel %vm432, %v973, 0.0
      %v1191 = vadd.f32 %v972, %v1190
      %1192 = vadd.xlane.f32.xlu0 %v1191
      %v1193 = vpop.xlane.xlu0 %1192
      %v1194 = vsel %vm432, %v975, 0.0
      %v1195 = vadd.f32 %v974, %v1194
      %1196 = vadd.xlane.f32.xlu0 %v1195
      %v1197 = vpop.xlane.xlu0 %1196
      %v1198 = vsel %vm432, %v977, 0.0
      %v1199 = vadd.f32 %v976, %v1198
      %1200 = vadd.xlane.f32.xlu0 %v1199
      %v1201 = vpop.xlane.xlu0 %1200
      %v1202 = vsel %vm432, %v979, 0.0
      %v1203 = vadd.f32 %v978, %v1202
      %1204 = vadd.xlane.f32.xlu0 %v1203
      %v1205 = vpop.xlane.xlu0 %1204
      %v1206 = vsel %vm432, %v981, 0.0
      %v1207 = vadd.f32 %v980, %v1206
      %1208 = vadd.xlane.f32.xlu0 %v1207
      %v1209 = vpop.xlane.xlu0 %1208
      %v1210 = vsel %vm432, %v983, 0.0
      %v1211 = vadd.f32 %v982, %v1210
      %1212 = vadd.xlane.f32.xlu0 %v1211
      %v1213 = vpop.xlane.xlu0 %1212
      %v1214 = vsel %vm432, %v985, 0.0
      %v1215 = vadd.f32 %v984, %v1214
      %1216 = vadd.xlane.f32.xlu0 %v1215
      %v1217 = vpop.xlane.xlu0 %1216
      %v1218 = vsel %vm432, %v987, 0.0
      %v1219 = vadd.f32 %v986, %v1218
      %1220 = vadd.xlane.f32.xlu0 %v1219
      %v1221 = vpop.xlane.xlu0 %1220
      %v1222 = vsel %vm432, %v989, 0.0
      %v1223 = vadd.f32 %v988, %v1222
      %1224 = vadd.xlane.f32.xlu0 %v1223
      %v1225 = vpop.xlane.xlu0 %1224
      %v1226 = vsel %vm432, %v991, 0.0
      %v1227 = vadd.f32 %v990, %v1226
      %1228 = vadd.xlane.f32.xlu0 %v1227
      %v1229 = vpop.xlane.xlu0 %1228
      %v1230 = vsel %vm432, %v993, 0.0
      %v1231 = vadd.f32 %v992, %v1230
      %1232 = vadd.xlane.f32.xlu0 %v1231
      %v1233 = vpop.xlane.xlu0 %1232
      %v1234 = vsel %vm432, %v995, 0.0
      %v1235 = vadd.f32 %v994, %v1234
      %1236 = vadd.xlane.f32.xlu0 %v1235
      %v1237 = vpop.xlane.xlu0 %1236
      %v1238 = vsel %vm432, %v997, 0.0
      %v1239 = vadd.f32 %v996, %v1238
      %1240 = vadd.xlane.f32.xlu0 %v1239
      %v1241 = vpop.xlane.xlu0 %1240
      %v1242 = vsel %vm432, %v999, 0.0
      %v1243 = vadd.f32 %v998, %v1242
      %1244 = vadd.xlane.f32.xlu0 %v1243
      %v1245 = vpop.xlane.xlu0 %1244
      %v1246 = vsel %vm432, %v1001, 0.0
      %v1247 = vadd.f32 %v1000, %v1246
      %1248 = vadd.xlane.f32.xlu0 %v1247
      %v1249 = vpop.xlane.xlu0 %1248
      %v1250 = vsel %vm432, %v1003, 0.0
      %v1251 = vadd.f32 %v1002, %v1250
      %1252 = vadd.xlane.f32.xlu0 %v1251
      %v1253 = vpop.xlane.xlu0 %1252
      %v1254 = vsel %vm432, %v1005, 0.0
      %v1255 = vadd.f32 %v1004, %v1254
      %1256 = vadd.xlane.f32.xlu0 %v1255
      %v1257 = vpop.xlane.xlu0 %1256
      %v1258 = vsel %vm432, %v1007, 0.0
      %v1259 = vadd.f32 %v1006, %v1258
      %1260 = vadd.xlane.f32.xlu0 %v1259
      %v1261 = vpop.xlane.xlu0 %1260
      %v1262 = vsel %vm432, %v1009, 0.0
      %v1263 = vadd.f32 %v1008, %v1262
      %1264 = vadd.xlane.f32.xlu0 %v1263
      %v1265 = vpop.xlane.xlu0 %1264
      %v1266 = vmul.f32 %v1013, %v689
      %v1267 = vmul.f32 %v1017, %v689
      %v1268 = vmul.f32 %v1021, %v689
      %v1269 = vmul.f32 %v1025, %v689
      %v1270 = vmul.f32 %v1029, %v689
      %v1271 = vmul.f32 %v1033, %v689
      %v1272 = vmul.f32 %v1037, %v689
      %v1273 = vmul.f32 %v1041, %v689
      %v1274 = vmul.f32 %v1045, %v689
      %v1275 = vmul.f32 %v1049, %v689
      %v1276 = vmul.f32 %v1053, %v689
      %v1277 = vmul.f32 %v1057, %v689
      %v1278 = vmul.f32 %v1061, %v689
      %v1279 = vmul.f32 %v1065, %v689
      %v1280 = vmul.f32 %v1069, %v689
      %v1281 = vmul.f32 %v1073, %v689
      %v1282 = vmul.f32 %v1077, %v689
      %v1283 = vmul.f32 %v1081, %v689
      %v1284 = vmul.f32 %v1085, %v689
      %v1285 = vmul.f32 %v1089, %v689
      %v1286 = vmul.f32 %v1093, %v689
      %v1287 = vmul.f32 %v1097, %v689
      %v1288 = vmul.f32 %v1101, %v689
      %v1289 = vmul.f32 %v1105, %v689
      %v1290 = vmul.f32 %v1109, %v689
      %v1291 = vmul.f32 %v1113, %v689
      %v1292 = vmul.f32 %v1117, %v689
      %v1293 = vmul.f32 %v1121, %v689
      %v1294 = vmul.f32 %v1125, %v689
      %v1295 = vmul.f32 %v1129, %v689
      %v1296 = vmul.f32 %v1133, %v689
      %v1297 = vmul.f32 %v1137, %v689
      %v1298 = vmul.f32 %v1141, %v689
      %v1299 = vmul.f32 %v1145, %v689
      %v1300 = vmul.f32 %v1149, %v689
      %v1301 = vmul.f32 %v1153, %v689
      %v1302 = vmul.f32 %v1157, %v689
      %v1303 = vmul.f32 %v1161, %v689
      %v1304 = vmul.f32 %v1165, %v689
      %v1305 = vmul.f32 %v1169, %v689
      %v1306 = vmul.f32 %v1173, %v689
      %v1307 = vmul.f32 %v1177, %v689
      %v1308 = vmul.f32 %v1181, %v689
      %v1309 = vmul.f32 %v1185, %v689
      %v1310 = vmul.f32 %v1189, %v689
      %v1311 = vmul.f32 %v1193, %v689
      %v1312 = vmul.f32 %v1197, %v689
      %v1313 = vmul.f32 %v1201, %v689
      %v1314 = vmul.f32 %v1205, %v689
      %v1315 = vmul.f32 %v1209, %v689
      %v1316 = vmul.f32 %v1213, %v689
      %v1317 = vmul.f32 %v1217, %v689
      %v1318 = vmul.f32 %v1221, %v689
      %v1319 = vmul.f32 %v1225, %v689
      %v1320 = vmul.f32 %v1229, %v689
      %v1321 = vmul.f32 %v1233, %v689
      %v1322 = vmul.f32 %v1237, %v689
      %v1323 = vmul.f32 %v1241, %v689
      %v1324 = vmul.f32 %v1245, %v689
      %v1325 = vmul.f32 %v1249, %v689
      %v1326 = vmul.f32 %v1253, %v689
      %v1327 = vmul.f32 %v1257, %v689
      %v1328 = vmul.f32 %v1261, %v689
      %v1329 = vmul.f32 %v1265, %v689
      %v1330 = vld [vmem:[%s1] sm:$0xff]
      %v1331 = vld [vmem:[%s1 + $0x8] sm:$0xff]
      %v1332 = vld [vmem:[%s1 + $0x10] sm:$0xff]
      %v1333 = vld [vmem:[%s1 + $0x18] sm:$0xff]
      %v1334 = vld [vmem:[%s1 + $0x20] sm:$0xff]
      %v1335 = vld [vmem:[%s1 + $0x28] sm:$0xff]
      %v1336 = vld [vmem:[%s1 + $0x30] sm:$0xff]
      %v1337 = vld [vmem:[%s1 + $0x38] sm:$0xff]
      %v1338 = vld [vmem:[%s1 + $0x40] sm:$0xff]
      %v1339 = vld [vmem:[%s1 + $0x48] sm:$0xff]
      %v1340 = vld [vmem:[%s1 + $0x50] sm:$0xff]
      %v1341 = vld [vmem:[%s1 + $0x58] sm:$0xff]
      %v1342 = vld [vmem:[%s1 + $0x60] sm:$0xff]
      %v1343 = vld [vmem:[%s1 + $0x68] sm:$0xff]
      %v1344 = vld [vmem:[%s1 + $0x70] sm:$0xff]
      %v1345 = vld [vmem:[%s1 + $0x78] sm:$0xff]
      %v1346 = vld [vmem:[%s1 + $0x80] sm:$0xff]
      %v1347 = vld [vmem:[%s1 + $0x88] sm:$0xff]
      %v1348 = vld [vmem:[%s1 + $0x90] sm:$0xff]
      %v1349 = vld [vmem:[%s1 + $0x98] sm:$0xff]
      %v1350 = vld [vmem:[%s1 + $0xa0] sm:$0xff]
      %v1351 = vld [vmem:[%s1 + $0xa8] sm:$0xff]
      %v1352 = vld [vmem:[%s1 + $0xb0] sm:$0xff]
      %v1353 = vld [vmem:[%s1 + $0xb8] sm:$0xff]
      %v1354 = vld [vmem:[%s1 + $0xc0] sm:$0xff]
      %v1355 = vld [vmem:[%s1 + $0xc8] sm:$0xff]
      %v1356 = vld [vmem:[%s1 + $0xd0] sm:$0xff]
      %v1357 = vld [vmem:[%s1 + $0xd8] sm:$0xff]
      %v1358 = vld [vmem:[%s1 + $0xe0] sm:$0xff]
      %v1359 = vld [vmem:[%s1 + $0xe8] sm:$0xff]
      %v1360 = vld [vmem:[%s1 + $0xf0] sm:$0xff]
      %v1361 = vld [vmem:[%s1 + $0xf8] sm:$0xff]
      %v1362 = vld [vmem:[%s1 + $0x100] sm:$0xff]
      %v1363 = vld [vmem:[%s1 + $0x108] sm:$0xff]
      %v1364 = vld [vmem:[%s1 + $0x110] sm:$0xff]
      %v1365 = vld [vmem:[%s1 + $0x118] sm:$0xff]
      %v1366 = vld [vmem:[%s1 + $0x120] sm:$0xff]
      %v1367 = vld [vmem:[%s1 + $0x128] sm:$0xff]
      %v1368 = vld [vmem:[%s1 + $0x130] sm:$0xff]
      %v1369 = vld [vmem:[%s1 + $0x138] sm:$0xff]
      %v1370 = vld [vmem:[%s1 + $0x140] sm:$0xff]
      %v1371 = vld [vmem:[%s1 + $0x148] sm:$0xff]
      %v1372 = vld [vmem:[%s1 + $0x150] sm:$0xff]
      %v1373 = vld [vmem:[%s1 + $0x158] sm:$0xff]
      %v1374 = vld [vmem:[%s1 + $0x160] sm:$0xff]
      %v1375 = vld [vmem:[%s1 + $0x168] sm:$0xff]
      %v1376 = vld [vmem:[%s1 + $0x170] sm:$0xff]
      %v1377 = vld [vmem:[%s1 + $0x178] sm:$0xff]
      %v1378 = vld [vmem:[%s1 + $0x180] sm:$0xff]
      %v1379 = vld [vmem:[%s1 + $0x188] sm:$0xff]
      %v1380 = vld [vmem:[%s1 + $0x190] sm:$0xff]
      %v1381 = vld [vmem:[%s1 + $0x198] sm:$0xff]
      %v1382 = vld [vmem:[%s1 + $0x1a0] sm:$0xff]
      %v1383 = vld [vmem:[%s1 + $0x1a8] sm:$0xff]
      %v1384 = vld [vmem:[%s1 + $0x1b0] sm:$0xff]
      %v1385 = vld [vmem:[%s1 + $0x1b8] sm:$0xff]
      %v1386 = vld [vmem:[%s1 + $0x1c0] sm:$0xff]
      %v1387 = vld [vmem:[%s1 + $0x1c8] sm:$0xff]
      %v1388 = vld [vmem:[%s1 + $0x1d0] sm:$0xff]
      %v1389 = vld [vmem:[%s1 + $0x1d8] sm:$0xff]
      %v1390 = vld [vmem:[%s1 + $0x1e0] sm:$0xff]
      %v1391 = vld [vmem:[%s1 + $0x1e8] sm:$0xff]
      %v1392 = vld [vmem:[%s1 + $0x1f0] sm:$0xff]
      %v1393 = vld [vmem:[%s1 + $0x1f8] sm:$0xff]
      %v1394 = vadd.f32 %v1266, 1e-05
      %v1395 = vadd.f32 %v1267, 1e-05
      %v1396 = vadd.f32 %v1268, 1e-05
      %v1397 = vadd.f32 %v1269, 1e-05
      %v1398 = vadd.f32 %v1270, 1e-05
      %v1399 = vadd.f32 %v1271, 1e-05
      %v1400 = vadd.f32 %v1272, 1e-05
      %v1401 = vadd.f32 %v1273, 1e-05
      %v1402 = vadd.f32 %v1274, 1e-05
      %v1403 = vadd.f32 %v1275, 1e-05
      %v1404 = vadd.f32 %v1276, 1e-05
      %v1405 = vadd.f32 %v1277, 1e-05
      %v1406 = vadd.f32 %v1278, 1e-05
      %v1407 = vadd.f32 %v1279, 1e-05
      %v1408 = vadd.f32 %v1280, 1e-05
      %v1409 = vadd.f32 %v1281, 1e-05
      %v1410 = vadd.f32 %v1282, 1e-05
      %v1411 = vadd.f32 %v1283, 1e-05
      %v1412 = vadd.f32 %v1284, 1e-05
      %v1413 = vadd.f32 %v1285, 1e-05
      %v1414 = vadd.f32 %v1286, 1e-05
      %v1415 = vadd.f32 %v1287, 1e-05
      %v1416 = vadd.f32 %v1288, 1e-05
      %v1417 = vadd.f32 %v1289, 1e-05
      %v1418 = vadd.f32 %v1290, 1e-05
      %v1419 = vadd.f32 %v1291, 1e-05
      %v1420 = vadd.f32 %v1292, 1e-05
      %v1421 = vadd.f32 %v1293, 1e-05
      %v1422 = vadd.f32 %v1294, 1e-05
      %v1423 = vadd.f32 %v1295, 1e-05
      %v1424 = vadd.f32 %v1296, 1e-05
      %v1425 = vadd.f32 %v1297, 1e-05
      %v1426 = vadd.f32 %v1298, 1e-05
      %v1427 = vadd.f32 %v1299, 1e-05
      %v1428 = vadd.f32 %v1300, 1e-05
      %v1429 = vadd.f32 %v1301, 1e-05
      %v1430 = vadd.f32 %v1302, 1e-05
      %v1431 = vadd.f32 %v1303, 1e-05
      %v1432 = vadd.f32 %v1304, 1e-05
      %v1433 = vadd.f32 %v1305, 1e-05
      %v1434 = vadd.f32 %v1306, 1e-05
      %v1435 = vadd.f32 %v1307, 1e-05
      %v1436 = vadd.f32 %v1308, 1e-05
      %v1437 = vadd.f32 %v1309, 1e-05
      %v1438 = vadd.f32 %v1310, 1e-05
      %v1439 = vadd.f32 %v1311, 1e-05
      %v1440 = vadd.f32 %v1312, 1e-05
      %v1441 = vadd.f32 %v1313, 1e-05
      %v1442 = vadd.f32 %v1314, 1e-05
      %v1443 = vadd.f32 %v1315, 1e-05
      %v1444 = vadd.f32 %v1316, 1e-05
      %v1445 = vadd.f32 %v1317, 1e-05
      %v1446 = vadd.f32 %v1318, 1e-05
      %v1447 = vadd.f32 %v1319, 1e-05
      %v1448 = vadd.f32 %v1320, 1e-05
      %v1449 = vadd.f32 %v1321, 1e-05
      %v1450 = vadd.f32 %v1322, 1e-05
      %v1451 = vadd.f32 %v1323, 1e-05
      %v1452 = vadd.f32 %v1324, 1e-05
      %v1453 = vadd.f32 %v1325, 1e-05
      %v1454 = vadd.f32 %v1326, 1e-05
      %v1455 = vadd.f32 %v1327, 1e-05
      %v1456 = vadd.f32 %v1328, 1e-05
      %v1457 = vadd.f32 %v1329, 1e-05
      %v1458 = vrsqrt.pop %v1394
      %v1459 = vrsqrt.pop %v1395
      %v1460 = vrsqrt.pop %v1396
      %v1461 = vrsqrt.pop %v1397
      %v1462 = vrsqrt.pop %v1398
      %v1463 = vrsqrt.pop %v1399
      %v1464 = vrsqrt.pop %v1400
      %v1465 = vrsqrt.pop %v1401
      %v1466 = vrsqrt.pop %v1402
      %v1467 = vrsqrt.pop %v1403
      %v1468 = vrsqrt.pop %v1404
      %v1469 = vrsqrt.pop %v1405
      %v1470 = vrsqrt.pop %v1406
      %v1471 = vrsqrt.pop %v1407
      %v1472 = vrsqrt.pop %v1408
      %v1473 = vrsqrt.pop %v1409
      %v1474 = vrsqrt.pop %v1410
      %v1475 = vrsqrt.pop %v1411
      %v1476 = vrsqrt.pop %v1412
      %v1477 = vrsqrt.pop %v1413
      %v1478 = vrsqrt.pop %v1414
      %v1479 = vrsqrt.pop %v1415
      %v1480 = vrsqrt.pop %v1416
      %v1481 = vrsqrt.pop %v1417
      %v1482 = vrsqrt.pop %v1418
      %v1483 = vrsqrt.pop %v1419
      %v1484 = vrsqrt.pop %v1420
      %v1485 = vrsqrt.pop %v1421
      %v1486 = vrsqrt.pop %v1422
      %v1487 = vrsqrt.pop %v1423
      %v1488 = vrsqrt.pop %v1424
      %v1489 = vrsqrt.pop %v1425
      %v1490 = vrsqrt.pop %v1426
      %v1491 = vrsqrt.pop %v1427
      %v1492 = vrsqrt.pop %v1428
      %v1493 = vrsqrt.pop %v1429
      %v1494 = vrsqrt.pop %v1430
      %v1495 = vrsqrt.pop %v1431
      %v1496 = vrsqrt.pop %v1432
      %v1497 = vrsqrt.pop %v1433
      %v1498 = vrsqrt.pop %v1434
      %v1499 = vrsqrt.pop %v1435
      %v1500 = vrsqrt.pop %v1436
      %v1501 = vrsqrt.pop %v1437
      %v1502 = vrsqrt.pop %v1438
      %v1503 = vrsqrt.pop %v1439
      %v1504 = vrsqrt.pop %v1440
      %v1505 = vrsqrt.pop %v1441
      %v1506 = vrsqrt.pop %v1442
      %v1507 = vrsqrt.pop %v1443
      %v1508 = vrsqrt.pop %v1444
      %v1509 = vrsqrt.pop %v1445
      %v1510 = vrsqrt.pop %v1446
      %v1511 = vrsqrt.pop %v1447
      %v1512 = vrsqrt.pop %v1448
      %v1513 = vrsqrt.pop %v1449
      %v1514 = vrsqrt.pop %v1450
      %v1515 = vrsqrt.pop %v1451
      %v1516 = vrsqrt.pop %v1452
      %v1517 = vrsqrt.pop %v1453
      %v1518 = vrsqrt.pop %v1454
      %v1519 = vrsqrt.pop %v1455
      %v1520 = vrsqrt.pop %v1456
      %v1521 = vrsqrt.pop %v1457
      %v1522 = vmul.f32 %v1330, %v1458
      %v1523 = vmul.f32 %v1331, %v1459
      %v1524 = vmul.f32 %v1332, %v1460
      %v1525 = vmul.f32 %v1333, %v1461
      %v1526 = vmul.f32 %v1334, %v1462
      %v1527 = vmul.f32 %v1335, %v1463
      %v1528 = vmul.f32 %v1336, %v1464
      %v1529 = vmul.f32 %v1337, %v1465
      %v1530 = vmul.f32 %v1338, %v1466
      %v1531 = vmul.f32 %v1339, %v1467
      %v1532 = vmul.f32 %v1340, %v1468
      %v1533 = vmul.f32 %v1341, %v1469
      %v1534 = vmul.f32 %v1342, %v1470
      %v1535 = vmul.f32 %v1343, %v1471
      %v1536 = vmul.f32 %v1344, %v1472
      %v1537 = vmul.f32 %v1345, %v1473
      %v1538 = vmul.f32 %v1346, %v1474
      %v1539 = vmul.f32 %v1347, %v1475
      %v1540 = vmul.f32 %v1348, %v1476
      %v1541 = vmul.f32 %v1349, %v1477
      %v1542 = vmul.f32 %v1350, %v1478
      %v1543 = vmul.f32 %v1351, %v1479
      %v1544 = vmul.f32 %v1352, %v1480
      %v1545 = vmul.f32 %v1353, %v1481
      %v1546 = vmul.f32 %v1354, %v1482
      %v1547 = vmul.f32 %v1355, %v1483
      %v1548 = vmul.f32 %v1356, %v1484
      %v1549 = vmul.f32 %v1357, %v1485
      %v1550 = vmul.f32 %v1358, %v1486
      %v1551 = vmul.f32 %v1359, %v1487
      %v1552 = vmul.f32 %v1360, %v1488
      %v1553 = vmul.f32 %v1361, %v1489
      %v1554 = vmul.f32 %v1362, %v1490
      %v1555 = vmul.f32 %v1363, %v1491
      %v1556 = vmul.f32 %v1364, %v1492
      %v1557 = vmul.f32 %v1365, %v1493
      %v1558 = vmul.f32 %v1366, %v1494
      %v1559 = vmul.f32 %v1367, %v1495
      %v1560 = vmul.f32 %v1368, %v1496
      %v1561 = vmul.f32 %v1369, %v1497
      %v1562 = vmul.f32 %v1370, %v1498
      %v1563 = vmul.f32 %v1371, %v1499
      %v1564 = vmul.f32 %v1372, %v1500
      %v1565 = vmul.f32 %v1373, %v1501
      %v1566 = vmul.f32 %v1374, %v1502
      %v1567 = vmul.f32 %v1375, %v1503
      %v1568 = vmul.f32 %v1376, %v1504
      %v1569 = vmul.f32 %v1377, %v1505
      %v1570 = vmul.f32 %v1378, %v1506
      %v1571 = vmul.f32 %v1379, %v1507
      %v1572 = vmul.f32 %v1380, %v1508
      %v1573 = vmul.f32 %v1381, %v1509
      %v1574 = vmul.f32 %v1382, %v1510
      %v1575 = vmul.f32 %v1383, %v1511
      %v1576 = vmul.f32 %v1384, %v1512
      %v1577 = vmul.f32 %v1385, %v1513
      %v1578 = vmul.f32 %v1386, %v1514
      %v1579 = vmul.f32 %v1387, %v1515
      %v1580 = vmul.f32 %v1388, %v1516
      %v1581 = vmul.f32 %v1389, %v1517
      %v1582 = vmul.f32 %v1390, %v1518
      %v1583 = vmul.f32 %v1391, %v1519
      %v1584 = vmul.f32 %v1392, %v1520
      %v1585 = vmul.f32 %v1393, %v1521
      %v1586 = vld [vmem:[%s2] sm:$0xff]
      %v1587 = vld [vmem:[%s2 + $0x8] sm:$0xff]
      %v1588 = vld [vmem:[%s2 + $0x10] sm:$0xff]
      %v1589 = vld [vmem:[%s2 + $0x18] sm:$0xff]
      %v1590 = vld [vmem:[%s2 + $0x20] sm:$0xff]
      %v1591 = vld [vmem:[%s2 + $0x28] sm:$0xff]
      %v1592 = vld [vmem:[%s2 + $0x30] sm:$0xff]
      %v1593 = vld [vmem:[%s2 + $0x38] sm:$0xff]
      %v1594 = vld [vmem:[%s2 + $0x40] sm:$0xff]
      %v1595 = vld [vmem:[%s2 + $0x48] sm:$0xff]
      %v1596 = vld [vmem:[%s2 + $0x50] sm:$0xff]
      %v1597 = vld [vmem:[%s2 + $0x58] sm:$0xff]
      %v1598 = vld [vmem:[%s2 + $0x60] sm:$0xff]
      %v1599 = vld [vmem:[%s2 + $0x68] sm:$0xff]
      %v1600 = vld [vmem:[%s2 + $0x70] sm:$0xff]
      %v1601 = vld [vmem:[%s2 + $0x78] sm:$0xff]
      %v1602 = vld [vmem:[%s2 + $0x80] sm:$0xff]
      %v1603 = vld [vmem:[%s2 + $0x88] sm:$0xff]
      %v1604 = vld [vmem:[%s2 + $0x90] sm:$0xff]
      %v1605 = vld [vmem:[%s2 + $0x98] sm:$0xff]
      %v1606 = vld [vmem:[%s2 + $0xa0] sm:$0xff]
      %v1607 = vld [vmem:[%s2 + $0xa8] sm:$0xff]
      %v1608 = vld [vmem:[%s2 + $0xb0] sm:$0xff]
      %v1609 = vld [vmem:[%s2 + $0xb8] sm:$0xff]
      %v1610 = vld [vmem:[%s2 + $0xc0] sm:$0xff]
      %v1611 = vld [vmem:[%s2 + $0xc8] sm:$0xff]
      %v1612 = vld [vmem:[%s2 + $0xd0] sm:$0xff]
      %v1613 = vld [vmem:[%s2 + $0xd8] sm:$0xff]
      %v1614 = vld [vmem:[%s2 + $0xe0] sm:$0xff]
      %v1615 = vld [vmem:[%s2 + $0xe8] sm:$0xff]
      %v1616 = vld [vmem:[%s2 + $0xf0] sm:$0xff]
      %v1617 = vld [vmem:[%s2 + $0xf8] sm:$0xff]
      %v1618 = vld [vmem:[%s2 + $0x100] sm:$0xff]
      %v1619 = vld [vmem:[%s2 + $0x108] sm:$0xff]
      %v1620 = vld [vmem:[%s2 + $0x110] sm:$0xff]
      %v1621 = vld [vmem:[%s2 + $0x118] sm:$0xff]
      %v1622 = vld [vmem:[%s2 + $0x120] sm:$0xff]
      %v1623 = vld [vmem:[%s2 + $0x128] sm:$0xff]
      %v1624 = vld [vmem:[%s2 + $0x130] sm:$0xff]
      %v1625 = vld [vmem:[%s2 + $0x138] sm:$0xff]
      %v1626 = vld [vmem:[%s2 + $0x140] sm:$0xff]
      %v1627 = vld [vmem:[%s2 + $0x148] sm:$0xff]
      %v1628 = vld [vmem:[%s2 + $0x150] sm:$0xff]
      %v1629 = vld [vmem:[%s2 + $0x158] sm:$0xff]
      %v1630 = vld [vmem:[%s2 + $0x160] sm:$0xff]
      %v1631 = vld [vmem:[%s2 + $0x168] sm:$0xff]
      %v1632 = vld [vmem:[%s2 + $0x170] sm:$0xff]
      %v1633 = vld [vmem:[%s2 + $0x178] sm:$0xff]
      %v1634 = vld [vmem:[%s2 + $0x180] sm:$0xff]
      %v1635 = vld [vmem:[%s2 + $0x188] sm:$0xff]
      %v1636 = vld [vmem:[%s2 + $0x190] sm:$0xff]
      %v1637 = vld [vmem:[%s2 + $0x198] sm:$0xff]
      %v1638 = vld [vmem:[%s2 + $0x1a0] sm:$0xff]
      %v1639 = vld [vmem:[%s2 + $0x1a8] sm:$0xff]
      %v1640 = vld [vmem:[%s2 + $0x1b0] sm:$0xff]
      %v1641 = vld [vmem:[%s2 + $0x1b8] sm:$0xff]
      %v1642 = vld [vmem:[%s2 + $0x1c0] sm:$0xff]
      %v1643 = vld [vmem:[%s2 + $0x1c8] sm:$0xff]
      %v1644 = vld [vmem:[%s2 + $0x1d0] sm:$0xff]
      %v1645 = vld [vmem:[%s2 + $0x1d8] sm:$0xff]
      %v1646 = vld [vmem:[%s2 + $0x1e0] sm:$0xff]
      %v1647 = vld [vmem:[%s2 + $0x1e8] sm:$0xff]
      %v1648 = vld [vmem:[%s2 + $0x1f0] sm:$0xff]
      %v1649 = vld [vmem:[%s2 + $0x1f8] sm:$0xff]
      %v1650 = vmul.f32 %v690, %v1522
      %v1651 = vmul.f32 %v691, %v1523
      %v1652 = vmul.f32 %v692, %v1524
      %v1653 = vmul.f32 %v693, %v1525
      %v1654 = vmul.f32 %v694, %v1526
      %v1655 = vmul.f32 %v695, %v1527
      %v1656 = vmul.f32 %v696, %v1528
      %v1657 = vmul.f32 %v697, %v1529
      %v1658 = vmul.f32 %v698, %v1530
      %v1659 = vmul.f32 %v699, %v1531
      %v1660 = vmul.f32 %v700, %v1532
      %v1661 = vmul.f32 %v701, %v1533
      %v1662 = vmul.f32 %v702, %v1534
      %v1663 = vmul.f32 %v703, %v1535
      %v1664 = vmul.f32 %v704, %v1536
      %v1665 = vmul.f32 %v705, %v1537
      %v1666 = vmul.f32 %v706, %v1538
      %v1667 = vmul.f32 %v707, %v1539
      %v1668 = vmul.f32 %v708, %v1540
      %v1669 = vmul.f32 %v709, %v1541
      %v1670 = vmul.f32 %v710, %v1542
      %v1671 = vmul.f32 %v711, %v1543
      %v1672 = vmul.f32 %v712, %v1544
      %v1673 = vmul.f32 %v713, %v1545
      %v1674 = vmul.f32 %v714, %v1546
      %v1675 = vmul.f32 %v715, %v1547
      %v1676 = vmul.f32 %v716, %v1548
      %v1677 = vmul.f32 %v717, %v1549
      %v1678 = vmul.f32 %v718, %v1550
      %v1679 = vmul.f32 %v719, %v1551
      %v1680 = vmul.f32 %v720, %v1552
      %v1681 = vmul.f32 %v721, %v1553
      %v1682 = vmul.f32 %v722, %v1554
      %v1683 = vmul.f32 %v723, %v1555
      %v1684 = vmul.f32 %v724, %v1556
      %v1685 = vmul.f32 %v725, %v1557
      %v1686 = vmul.f32 %v726, %v1558
      %v1687 = vmul.f32 %v727, %v1559
      %v1688 = vmul.f32 %v728, %v1560
      %v1689 = vmul.f32 %v729, %v1561
      %v1690 = vmul.f32 %v730, %v1562
      %v1691 = vmul.f32 %v731, %v1563
      %v1692 = vmul.f32 %v732, %v1564
      %v1693 = vmul.f32 %v733, %v1565
      %v1694 = vmul.f32 %v734, %v1566
      %v1695 = vmul.f32 %v735, %v1567
      %v1696 = vmul.f32 %v736, %v1568
      %v1697 = vmul.f32 %v737, %v1569
      %v1698 = vmul.f32 %v738, %v1570
      %v1699 = vmul.f32 %v739, %v1571
      %v1700 = vmul.f32 %v740, %v1572
      %v1701 = vmul.f32 %v741, %v1573
      %v1702 = vmul.f32 %v742, %v1574
      %v1703 = vmul.f32 %v743, %v1575
      %v1704 = vmul.f32 %v744, %v1576
      %v1705 = vmul.f32 %v745, %v1577
      %v1706 = vmul.f32 %v746, %v1578
      %v1707 = vmul.f32 %v747, %v1579
      %v1708 = vmul.f32 %v748, %v1580
      %v1709 = vmul.f32 %v749, %v1581
      %v1710 = vmul.f32 %v750, %v1582
      %v1711 = vmul.f32 %v751, %v1583
      %v1712 = vmul.f32 %v752, %v1584
      %v1713 = vmul.f32 %v753, %v1585
      %v1714 = vsub.f32 %v1586, %v1650
      %v1715 = vsub.f32 %v1587, %v1651
      %v1716 = vsub.f32 %v1588, %v1652
      %v1717 = vsub.f32 %v1589, %v1653
      %v1718 = vsub.f32 %v1590, %v1654
      %v1719 = vsub.f32 %v1591, %v1655
      %v1720 = vsub.f32 %v1592, %v1656
      %v1721 = vsub.f32 %v1593, %v1657
      %v1722 = vsub.f32 %v1594, %v1658
      %v1723 = vsub.f32 %v1595, %v1659
      %v1724 = vsub.f32 %v1596, %v1660
      %v1725 = vsub.f32 %v1597, %v1661
      %v1726 = vsub.f32 %v1598, %v1662
      %v1727 = vsub.f32 %v1599, %v1663
      %v1728 = vsub.f32 %v1600, %v1664
      %v1729 = vsub.f32 %v1601, %v1665
      %v1730 = vsub.f32 %v1602, %v1666
      %v1731 = vsub.f32 %v1603, %v1667
      %v1732 = vsub.f32 %v1604, %v1668
      %v1733 = vsub.f32 %v1605, %v1669
      %v1734 = vsub.f32 %v1606, %v1670
      %v1735 = vsub.f32 %v1607, %v1671
      %v1736 = vsub.f32 %v1608, %v1672
      %v1737 = vsub.f32 %v1609, %v1673
      %v1738 = vsub.f32 %v1610, %v1674
      %v1739 = vsub.f32 %v1611, %v1675
      %v1740 = vsub.f32 %v1612, %v1676
      %v1741 = vsub.f32 %v1613, %v1677
      %v1742 = vsub.f32 %v1614, %v1678
      %v1743 = vsub.f32 %v1615, %v1679
      %v1744 = vsub.f32 %v1616, %v1680
      %v1745 = vsub.f32 %v1617, %v1681
      %v1746 = vsub.f32 %v1618, %v1682
      %v1747 = vsub.f32 %v1619, %v1683
      %v1748 = vsub.f32 %v1620, %v1684
      %v1749 = vsub.f32 %v1621, %v1685
      %v1750 = vsub.f32 %v1622, %v1686
      %v1751 = vsub.f32 %v1623, %v1687
      %v1752 = vsub.f32 %v1624, %v1688
      %v1753 = vsub.f32 %v1625, %v1689
      %v1754 = vsub.f32 %v1626, %v1690
      %v1755 = vsub.f32 %v1627, %v1691
      %v1756 = vsub.f32 %v1628, %v1692
      %v1757 = vsub.f32 %v1629, %v1693
      %v1758 = vsub.f32 %v1630, %v1694
      %v1759 = vsub.f32 %v1631, %v1695
      %v1760 = vsub.f32 %v1632, %v1696
      %v1761 = vsub.f32 %v1633, %v1697
      %v1762 = vsub.f32 %v1634, %v1698
      %v1763 = vsub.f32 %v1635, %v1699
      %v1764 = vsub.f32 %v1636, %v1700
      %v1765 = vsub.f32 %v1637, %v1701
      %v1766 = vsub.f32 %v1638, %v1702
      %v1767 = vsub.f32 %v1639, %v1703
      %v1768 = vsub.f32 %v1640, %v1704
      %v1769 = vsub.f32 %v1641, %v1705
      %v1770 = vsub.f32 %v1642, %v1706
      %v1771 = vsub.f32 %v1643, %v1707
      %v1772 = vsub.f32 %v1644, %v1708
      %v1773 = vsub.f32 %v1645, %v1709
      %v1774 = vsub.f32 %v1646, %v1710
      %v1775 = vsub.f32 %v1647, %v1711
      %v1776 = vsub.f32 %v1648, %v1712
      %v1777 = vsub.f32 %v1649, %v1713
      %1779 = vset.pattern.permute.xlu0 0
      %1780 = vperm.xlu0 %1779, %v1522
      %v1781 = vpop.permute.xlu0 %1780
      %1784 = vset.pattern.permute.xlu0 0
      %1785 = vperm.xlu0 %1784, %v1523
      %v1786 = vpop.permute.xlu0 %1785
      %1789 = vset.pattern.permute.xlu0 0
      %1790 = vperm.xlu0 %1789, %v1524
      %v1791 = vpop.permute.xlu0 %1790
      %1794 = vset.pattern.permute.xlu0 0
      %1795 = vperm.xlu0 %1794, %v1525
      %v1796 = vpop.permute.xlu0 %1795
      %1799 = vset.pattern.permute.xlu0 0
      %1800 = vperm.xlu0 %1799, %v1526
      %v1801 = vpop.permute.xlu0 %1800
      %1804 = vset.pattern.permute.xlu0 0
      %1805 = vperm.xlu0 %1804, %v1527
      %v1806 = vpop.permute.xlu0 %1805
      %1809 = vset.pattern.permute.xlu0 0
      %1810 = vperm.xlu0 %1809, %v1528
      %v1811 = vpop.permute.xlu0 %1810
      %1814 = vset.pattern.permute.xlu0 0
      %1815 = vperm.xlu0 %1814, %v1529
      %v1816 = vpop.permute.xlu0 %1815
      %1819 = vset.pattern.permute.xlu0 0
      %1820 = vperm.xlu0 %1819, %v1530
      %v1821 = vpop.permute.xlu0 %1820
      %1824 = vset.pattern.permute.xlu0 0
      %1825 = vperm.xlu0 %1824, %v1531
      %v1826 = vpop.permute.xlu0 %1825
      %1829 = vset.pattern.permute.xlu0 0
      %1830 = vperm.xlu0 %1829, %v1532
      %v1831 = vpop.permute.xlu0 %1830
      %1834 = vset.pattern.permute.xlu0 0
      %1835 = vperm.xlu0 %1834, %v1533
      %v1836 = vpop.permute.xlu0 %1835
      %1839 = vset.pattern.permute.xlu0 0
      %1840 = vperm.xlu0 %1839, %v1534
      %v1841 = vpop.permute.xlu0 %1840
      %1844 = vset.pattern.permute.xlu0 0
      %1845 = vperm.xlu0 %1844, %v1535
      %v1846 = vpop.permute.xlu0 %1845
      %1849 = vset.pattern.permute.xlu0 0
      %1850 = vperm.xlu0 %1849, %v1536
      %v1851 = vpop.permute.xlu0 %1850
      %1854 = vset.pattern.permute.xlu0 0
      %1855 = vperm.xlu0 %1854, %v1537
      %v1856 = vpop.permute.xlu0 %1855
      %1859 = vset.pattern.permute.xlu0 0
      %1860 = vperm.xlu0 %1859, %v1538
      %v1861 = vpop.permute.xlu0 %1860
      %1864 = vset.pattern.permute.xlu0 0
      %1865 = vperm.xlu0 %1864, %v1539
      %v1866 = vpop.permute.xlu0 %1865
      %1869 = vset.pattern.permute.xlu0 0
      %1870 = vperm.xlu0 %1869, %v1540
      %v1871 = vpop.permute.xlu0 %1870
      %1874 = vset.pattern.permute.xlu0 0
      %1875 = vperm.xlu0 %1874, %v1541
      %v1876 = vpop.permute.xlu0 %1875
      %1879 = vset.pattern.permute.xlu0 0
      %1880 = vperm.xlu0 %1879, %v1542
      %v1881 = vpop.permute.xlu0 %1880
      %1884 = vset.pattern.permute.xlu0 0
      %1885 = vperm.xlu0 %1884, %v1543
      %v1886 = vpop.permute.xlu0 %1885
      %1889 = vset.pattern.permute.xlu0 0
      %1890 = vperm.xlu0 %1889, %v1544
      %v1891 = vpop.permute.xlu0 %1890
      %1894 = vset.pattern.permute.xlu0 0
      %1895 = vperm.xlu0 %1894, %v1545
      %v1896 = vpop.permute.xlu0 %1895
      %1899 = vset.pattern.permute.xlu0 0
      %1900 = vperm.xlu0 %1899, %v1546
      %v1901 = vpop.permute.xlu0 %1900
      %1904 = vset.pattern.permute.xlu0 0
      %1905 = vperm.xlu0 %1904, %v1547
      %v1906 = vpop.permute.xlu0 %1905
      %1909 = vset.pattern.permute.xlu0 0
      %1910 = vperm.xlu0 %1909, %v1548
      %v1911 = vpop.permute.xlu0 %1910
      %1914 = vset.pattern.permute.xlu0 0
      %1915 = vperm.xlu0 %1914, %v1549
      %v1916 = vpop.permute.xlu0 %1915
      %1919 = vset.pattern.permute.xlu0 0
      %1920 = vperm.xlu0 %1919, %v1550
      %v1921 = vpop.permute.xlu0 %1920
      %1924 = vset.pattern.permute.xlu0 0
      %1925 = vperm.xlu0 %1924, %v1551
      %v1926 = vpop.permute.xlu0 %1925
      %1929 = vset.pattern.permute.xlu0 0
      %1930 = vperm.xlu0 %1929, %v1552
      %v1931 = vpop.permute.xlu0 %1930
      %1934 = vset.pattern.permute.xlu0 0
      %1935 = vperm.xlu0 %1934, %v1553
      %v1936 = vpop.permute.xlu0 %1935
      %1939 = vset.pattern.permute.xlu0 0
      %1940 = vperm.xlu0 %1939, %v1554
      %v1941 = vpop.permute.xlu0 %1940
      %1944 = vset.pattern.permute.xlu0 0
      %1945 = vperm.xlu0 %1944, %v1555
      %v1946 = vpop.permute.xlu0 %1945
      %1949 = vset.pattern.permute.xlu0 0
      %1950 = vperm.xlu0 %1949, %v1556
      %v1951 = vpop.permute.xlu0 %1950
      %1954 = vset.pattern.permute.xlu0 0
      %1955 = vperm.xlu0 %1954, %v1557
      %v1956 = vpop.permute.xlu0 %1955
      %1959 = vset.pattern.permute.xlu0 0
      %1960 = vperm.xlu0 %1959, %v1558
      %v1961 = vpop.permute.xlu0 %1960
      %1964 = vset.pattern.permute.xlu0 0
      %1965 = vperm.xlu0 %1964, %v1559
      %v1966 = vpop.permute.xlu0 %1965
      %1969 = vset.pattern.permute.xlu0 0
      %1970 = vperm.xlu0 %1969, %v1560
      %v1971 = vpop.permute.xlu0 %1970
      %1974 = vset.pattern.permute.xlu0 0
      %1975 = vperm.xlu0 %1974, %v1561
      %v1976 = vpop.permute.xlu0 %1975
      %1979 = vset.pattern.permute.xlu0 0
      %1980 = vperm.xlu0 %1979, %v1562
      %v1981 = vpop.permute.xlu0 %1980
      %1984 = vset.pattern.permute.xlu0 0
      %1985 = vperm.xlu0 %1984, %v1563
      %v1986 = vpop.permute.xlu0 %1985
      %1989 = vset.pattern.permute.xlu0 0
      %1990 = vperm.xlu0 %1989, %v1564
      %v1991 = vpop.permute.xlu0 %1990
      %1994 = vset.pattern.permute.xlu0 0
      %1995 = vperm.xlu0 %1994, %v1565
      %v1996 = vpop.permute.xlu0 %1995
      %1999 = vset.pattern.permute.xlu0 0
      %2000 = vperm.xlu0 %1999, %v1566
      %v2001 = vpop.permute.xlu0 %2000
      %2004 = vset.pattern.permute.xlu0 0
      %2005 = vperm.xlu0 %2004, %v1567
      %v2006 = vpop.permute.xlu0 %2005
      %2009 = vset.pattern.permute.xlu0 0
      %2010 = vperm.xlu0 %2009, %v1568
      %v2011 = vpop.permute.xlu0 %2010
      %2014 = vset.pattern.permute.xlu0 0
      %2015 = vperm.xlu0 %2014, %v1569
      %v2016 = vpop.permute.xlu0 %2015
      %2019 = vset.pattern.permute.xlu0 0
      %2020 = vperm.xlu0 %2019, %v1570
      %v2021 = vpop.permute.xlu0 %2020
      %2024 = vset.pattern.permute.xlu0 0
      %2025 = vperm.xlu0 %2024, %v1571
      %v2026 = vpop.permute.xlu0 %2025
      %2029 = vset.pattern.permute.xlu0 0
      %2030 = vperm.xlu0 %2029, %v1572
      %v2031 = vpop.permute.xlu0 %2030
      %2034 = vset.pattern.permute.xlu0 0
      %2035 = vperm.xlu0 %2034, %v1573
      %v2036 = vpop.permute.xlu0 %2035
      %2039 = vset.pattern.permute.xlu0 0
      %2040 = vperm.xlu0 %2039, %v1574
      %v2041 = vpop.permute.xlu0 %2040
      %2044 = vset.pattern.permute.xlu0 0
      %2045 = vperm.xlu0 %2044, %v1575
      %v2046 = vpop.permute.xlu0 %2045
      %2049 = vset.pattern.permute.xlu0 0
      %2050 = vperm.xlu0 %2049, %v1576
      %v2051 = vpop.permute.xlu0 %2050
      %2054 = vset.pattern.permute.xlu0 0
      %2055 = vperm.xlu0 %2054, %v1577
      %v2056 = vpop.permute.xlu0 %2055
      %2059 = vset.pattern.permute.xlu0 0
      %2060 = vperm.xlu0 %2059, %v1578
      %v2061 = vpop.permute.xlu0 %2060
      %2064 = vset.pattern.permute.xlu0 0
      %2065 = vperm.xlu0 %2064, %v1579
      %v2066 = vpop.permute.xlu0 %2065
      %2069 = vset.pattern.permute.xlu0 0
      %2070 = vperm.xlu0 %2069, %v1580
      %v2071 = vpop.permute.xlu0 %2070
      %2074 = vset.pattern.permute.xlu0 0
      %2075 = vperm.xlu0 %2074, %v1581
      %v2076 = vpop.permute.xlu0 %2075
      %2079 = vset.pattern.permute.xlu0 0
      %2080 = vperm.xlu0 %2079, %v1582
      %v2081 = vpop.permute.xlu0 %2080
      %2084 = vset.pattern.permute.xlu0 0
      %2085 = vperm.xlu0 %2084, %v1583
      %v2086 = vpop.permute.xlu0 %2085
      %2089 = vset.pattern.permute.xlu0 0
      %2090 = vperm.xlu0 %2089, %v1584
      %v2091 = vpop.permute.xlu0 %2090
      %2094 = vset.pattern.permute.xlu0 0
      %2095 = vperm.xlu0 %2094, %v1585
      %v2096 = vpop.permute.xlu0 %2095
      %v2098 = vmul.f32 %v304, %v1781
      %v2099 = vmul.f32 %v305, %v1781
      %v2100 = vmul.f32 %v306, %v1786
      %v2101 = vmul.f32 %v307, %v1786
      %v2102 = vmul.f32 %v308, %v1791
      %v2103 = vmul.f32 %v309, %v1791
      %v2104 = vmul.f32 %v310, %v1796
      %v2105 = vmul.f32 %v311, %v1796
      %v2106 = vmul.f32 %v312, %v1801
      %v2107 = vmul.f32 %v313, %v1801
      %v2108 = vmul.f32 %v314, %v1806
      %v2109 = vmul.f32 %v315, %v1806
      %v2110 = vmul.f32 %v316, %v1811
      %v2111 = vmul.f32 %v317, %v1811
      %v2112 = vmul.f32 %v318, %v1816
      %v2113 = vmul.f32 %v319, %v1816
      %v2114 = vmul.f32 %v320, %v1821
      %v2115 = vmul.f32 %v321, %v1821
      %v2116 = vmul.f32 %v322, %v1826
      %v2117 = vmul.f32 %v323, %v1826
      %v2118 = vmul.f32 %v324, %v1831
      %v2119 = vmul.f32 %v325, %v1831
      %v2120 = vmul.f32 %v326, %v1836
      %v2121 = vmul.f32 %v327, %v1836
      %v2122 = vmul.f32 %v328, %v1841
      %v2123 = vmul.f32 %v329, %v1841
      %v2124 = vmul.f32 %v330, %v1846
      %v2125 = vmul.f32 %v331, %v1846
      %v2126 = vmul.f32 %v332, %v1851
      %v2127 = vmul.f32 %v333, %v1851
      %v2128 = vmul.f32 %v334, %v1856
      %v2129 = vmul.f32 %v335, %v1856
      %v2130 = vmul.f32 %v336, %v1861
      %v2131 = vmul.f32 %v337, %v1861
      %v2132 = vmul.f32 %v338, %v1866
      %v2133 = vmul.f32 %v339, %v1866
      %v2134 = vmul.f32 %v340, %v1871
      %v2135 = vmul.f32 %v341, %v1871
      %v2136 = vmul.f32 %v342, %v1876
      %v2137 = vmul.f32 %v343, %v1876
      %v2138 = vmul.f32 %v344, %v1881
      %v2139 = vmul.f32 %v345, %v1881
      %v2140 = vmul.f32 %v346, %v1886
      %v2141 = vmul.f32 %v347, %v1886
      %v2142 = vmul.f32 %v348, %v1891
      %v2143 = vmul.f32 %v349, %v1891
      %v2144 = vmul.f32 %v350, %v1896
      %v2145 = vmul.f32 %v351, %v1896
      %v2146 = vmul.f32 %v352, %v1901
      %v2147 = vmul.f32 %v353, %v1901
      %v2148 = vmul.f32 %v354, %v1906
      %v2149 = vmul.f32 %v355, %v1906
      %v2150 = vmul.f32 %v356, %v1911
      %v2151 = vmul.f32 %v357, %v1911
      %v2152 = vmul.f32 %v358, %v1916
      %v2153 = vmul.f32 %v359, %v1916
      %v2154 = vmul.f32 %v360, %v1921
      %v2155 = vmul.f32 %v361, %v1921
      %v2156 = vmul.f32 %v362, %v1926
      %v2157 = vmul.f32 %v363, %v1926
      %v2158 = vmul.f32 %v364, %v1931
      %v2159 = vmul.f32 %v365, %v1931
      %v2160 = vmul.f32 %v366, %v1936
      %v2161 = vmul.f32 %v367, %v1936
      %v2162 = vmul.f32 %v368, %v1941
      %v2163 = vmul.f32 %v369, %v1941
      %v2164 = vmul.f32 %v370, %v1946
      %v2165 = vmul.f32 %v371, %v1946
      %v2166 = vmul.f32 %v372, %v1951
      %v2167 = vmul.f32 %v373, %v1951
      %v2168 = vmul.f32 %v374, %v1956
      %v2169 = vmul.f32 %v375, %v1956
      %v2170 = vmul.f32 %v376, %v1961
      %v2171 = vmul.f32 %v377, %v1961
      %v2172 = vmul.f32 %v378, %v1966
      %v2173 = vmul.f32 %v379, %v1966
      %v2174 = vmul.f32 %v380, %v1971
      %v2175 = vmul.f32 %v381, %v1971
      %v2176 = vmul.f32 %v382, %v1976
      %v2177 = vmul.f32 %v383, %v1976
      %v2178 = vmul.f32 %v384, %v1981
      %v2179 = vmul.f32 %v385, %v1981
      %v2180 = vmul.f32 %v386, %v1986
      %v2181 = vmul.f32 %v387, %v1986
      %v2182 = vmul.f32 %v388, %v1991
      %v2183 = vmul.f32 %v389, %v1991
      %v2184 = vmul.f32 %v390, %v1996
      %v2185 = vmul.f32 %v391, %v1996
      %v2186 = vmul.f32 %v392, %v2001
      %v2187 = vmul.f32 %v393, %v2001
      %v2188 = vmul.f32 %v394, %v2006
      %v2189 = vmul.f32 %v395, %v2006
      %v2190 = vmul.f32 %v396, %v2011
      %v2191 = vmul.f32 %v397, %v2011
      %v2192 = vmul.f32 %v398, %v2016
      %v2193 = vmul.f32 %v399, %v2016
      %v2194 = vmul.f32 %v400, %v2021
      %v2195 = vmul.f32 %v401, %v2021
      %v2196 = vmul.f32 %v402, %v2026
      %v2197 = vmul.f32 %v403, %v2026
      %v2198 = vmul.f32 %v404, %v2031
      %v2199 = vmul.f32 %v405, %v2031
      %v2200 = vmul.f32 %v406, %v2036
      %v2201 = vmul.f32 %v407, %v2036
      %v2202 = vmul.f32 %v408, %v2041
      %v2203 = vmul.f32 %v409, %v2041
      %v2204 = vmul.f32 %v410, %v2046
      %v2205 = vmul.f32 %v411, %v2046
      %v2206 = vmul.f32 %v412, %v2051
      %v2207 = vmul.f32 %v413, %v2051
      %v2208 = vmul.f32 %v414, %v2056
      %v2209 = vmul.f32 %v415, %v2056
      %v2210 = vmul.f32 %v416, %v2061
      %v2211 = vmul.f32 %v417, %v2061
      %v2212 = vmul.f32 %v418, %v2066
      %v2213 = vmul.f32 %v419, %v2066
      %v2214 = vmul.f32 %v420, %v2071
      %v2215 = vmul.f32 %v421, %v2071
      %v2216 = vmul.f32 %v422, %v2076
      %v2217 = vmul.f32 %v423, %v2076
      %v2218 = vmul.f32 %v424, %v2081
      %v2219 = vmul.f32 %v425, %v2081
      %v2220 = vmul.f32 %v426, %v2086
      %v2221 = vmul.f32 %v427, %v2086
      %v2222 = vmul.f32 %v428, %v2091
      %v2223 = vmul.f32 %v429, %v2091
      %v2224 = vmul.f32 %v430, %v2096
      %v2225 = vmul.f32 %v431, %v2096
      %2227 = vset.pattern.permute.xlu0 0
      %2228 = vperm.xlu0 %2227, %v1714
      %v2229 = vpop.permute.xlu0 %2228
      %2232 = vset.pattern.permute.xlu0 0
      %2233 = vperm.xlu0 %2232, %v1715
      %v2234 = vpop.permute.xlu0 %2233
      %2237 = vset.pattern.permute.xlu0 0
      %2238 = vperm.xlu0 %2237, %v1716
      %v2239 = vpop.permute.xlu0 %2238
      %2242 = vset.pattern.permute.xlu0 0
      %2243 = vperm.xlu0 %2242, %v1717
      %v2244 = vpop.permute.xlu0 %2243
      %2247 = vset.pattern.permute.xlu0 0
      %2248 = vperm.xlu0 %2247, %v1718
      %v2249 = vpop.permute.xlu0 %2248
      %2252 = vset.pattern.permute.xlu0 0
      %2253 = vperm.xlu0 %2252, %v1719
      %v2254 = vpop.permute.xlu0 %2253
      %2257 = vset.pattern.permute.xlu0 0
      %2258 = vperm.xlu0 %2257, %v1720
      %v2259 = vpop.permute.xlu0 %2258
      %2262 = vset.pattern.permute.xlu0 0
      %2263 = vperm.xlu0 %2262, %v1721
      %v2264 = vpop.permute.xlu0 %2263
      %2267 = vset.pattern.permute.xlu0 0
      %2268 = vperm.xlu0 %2267, %v1722
      %v2269 = vpop.permute.xlu0 %2268
      %2272 = vset.pattern.permute.xlu0 0
      %2273 = vperm.xlu0 %2272, %v1723
      %v2274 = vpop.permute.xlu0 %2273
      %2277 = vset.pattern.permute.xlu0 0
      %2278 = vperm.xlu0 %2277, %v1724
      %v2279 = vpop.permute.xlu0 %2278
      %2282 = vset.pattern.permute.xlu0 0
      %2283 = vperm.xlu0 %2282, %v1725
      %v2284 = vpop.permute.xlu0 %2283
      %2287 = vset.pattern.permute.xlu0 0
      %2288 = vperm.xlu0 %2287, %v1726
      %v2289 = vpop.permute.xlu0 %2288
      %2292 = vset.pattern.permute.xlu0 0
      %2293 = vperm.xlu0 %2292, %v1727
      %v2294 = vpop.permute.xlu0 %2293
      %2297 = vset.pattern.permute.xlu0 0
      %2298 = vperm.xlu0 %2297, %v1728
      %v2299 = vpop.permute.xlu0 %2298
      %2302 = vset.pattern.permute.xlu0 0
      %2303 = vperm.xlu0 %2302, %v1729
      %v2304 = vpop.permute.xlu0 %2303
      %2307 = vset.pattern.permute.xlu0 0
      %2308 = vperm.xlu0 %2307, %v1730
      %v2309 = vpop.permute.xlu0 %2308
      %2312 = vset.pattern.permute.xlu0 0
      %2313 = vperm.xlu0 %2312, %v1731
      %v2314 = vpop.permute.xlu0 %2313
      %2317 = vset.pattern.permute.xlu0 0
      %2318 = vperm.xlu0 %2317, %v1732
      %v2319 = vpop.permute.xlu0 %2318
      %2322 = vset.pattern.permute.xlu0 0
      %2323 = vperm.xlu0 %2322, %v1733
      %v2324 = vpop.permute.xlu0 %2323
      %2327 = vset.pattern.permute.xlu0 0
      %2328 = vperm.xlu0 %2327, %v1734
      %v2329 = vpop.permute.xlu0 %2328
      %2332 = vset.pattern.permute.xlu0 0
      %2333 = vperm.xlu0 %2332, %v1735
      %v2334 = vpop.permute.xlu0 %2333
      %2337 = vset.pattern.permute.xlu0 0
      %2338 = vperm.xlu0 %2337, %v1736
      %v2339 = vpop.permute.xlu0 %2338
      %2342 = vset.pattern.permute.xlu0 0
      %2343 = vperm.xlu0 %2342, %v1737
      %v2344 = vpop.permute.xlu0 %2343
      %2347 = vset.pattern.permute.xlu0 0
      %2348 = vperm.xlu0 %2347, %v1738
      %v2349 = vpop.permute.xlu0 %2348
      %2352 = vset.pattern.permute.xlu0 0
      %2353 = vperm.xlu0 %2352, %v1739
      %v2354 = vpop.permute.xlu0 %2353
      %2357 = vset.pattern.permute.xlu0 0
      %2358 = vperm.xlu0 %2357, %v1740
      %v2359 = vpop.permute.xlu0 %2358
      %2362 = vset.pattern.permute.xlu0 0
      %2363 = vperm.xlu0 %2362, %v1741
      %v2364 = vpop.permute.xlu0 %2363
      %2367 = vset.pattern.permute.xlu0 0
      %2368 = vperm.xlu0 %2367, %v1742
      %v2369 = vpop.permute.xlu0 %2368
      %2372 = vset.pattern.permute.xlu0 0
      %2373 = vperm.xlu0 %2372, %v1743
      %v2374 = vpop.permute.xlu0 %2373
      %2377 = vset.pattern.permute.xlu0 0
      %2378 = vperm.xlu0 %2377, %v1744
      %v2379 = vpop.permute.xlu0 %2378
      %2382 = vset.pattern.permute.xlu0 0
      %2383 = vperm.xlu0 %2382, %v1745
      %v2384 = vpop.permute.xlu0 %2383
      %2387 = vset.pattern.permute.xlu0 0
      %2388 = vperm.xlu0 %2387, %v1746
      %v2389 = vpop.permute.xlu0 %2388
      %2392 = vset.pattern.permute.xlu0 0
      %2393 = vperm.xlu0 %2392, %v1747
      %v2394 = vpop.permute.xlu0 %2393
      %2397 = vset.pattern.permute.xlu0 0
      %2398 = vperm.xlu0 %2397, %v1748
      %v2399 = vpop.permute.xlu0 %2398
      %2402 = vset.pattern.permute.xlu0 0
      %2403 = vperm.xlu0 %2402, %v1749
      %v2404 = vpop.permute.xlu0 %2403
      %2407 = vset.pattern.permute.xlu0 0
      %2408 = vperm.xlu0 %2407, %v1750
      %v2409 = vpop.permute.xlu0 %2408
      %2412 = vset.pattern.permute.xlu0 0
      %2413 = vperm.xlu0 %2412, %v1751
      %v2414 = vpop.permute.xlu0 %2413
      %2417 = vset.pattern.permute.xlu0 0
      %2418 = vperm.xlu0 %2417, %v1752
      %v2419 = vpop.permute.xlu0 %2418
      %2422 = vset.pattern.permute.xlu0 0
      %2423 = vperm.xlu0 %2422, %v1753
      %v2424 = vpop.permute.xlu0 %2423
      %2427 = vset.pattern.permute.xlu0 0
      %2428 = vperm.xlu0 %2427, %v1754
      %v2429 = vpop.permute.xlu0 %2428
      %2432 = vset.pattern.permute.xlu0 0
      %2433 = vperm.xlu0 %2432, %v1755
      %v2434 = vpop.permute.xlu0 %2433
      %2437 = vset.pattern.permute.xlu0 0
      %2438 = vperm.xlu0 %2437, %v1756
      %v2439 = vpop.permute.xlu0 %2438
      %2442 = vset.pattern.permute.xlu0 0
      %2443 = vperm.xlu0 %2442, %v1757
      %v2444 = vpop.permute.xlu0 %2443
      %2447 = vset.pattern.permute.xlu0 0
      %2448 = vperm.xlu0 %2447, %v1758
      %v2449 = vpop.permute.xlu0 %2448
      %2452 = vset.pattern.permute.xlu0 0
      %2453 = vperm.xlu0 %2452, %v1759
      %v2454 = vpop.permute.xlu0 %2453
      %2457 = vset.pattern.permute.xlu0 0
      %2458 = vperm.xlu0 %2457, %v1760
      %v2459 = vpop.permute.xlu0 %2458
      %2462 = vset.pattern.permute.xlu0 0
      %2463 = vperm.xlu0 %2462, %v1761
      %v2464 = vpop.permute.xlu0 %2463
      %2467 = vset.pattern.permute.xlu0 0
      %2468 = vperm.xlu0 %2467, %v1762
      %v2469 = vpop.permute.xlu0 %2468
      %2472 = vset.pattern.permute.xlu0 0
      %2473 = vperm.xlu0 %2472, %v1763
      %v2474 = vpop.permute.xlu0 %2473
      %2477 = vset.pattern.permute.xlu0 0
      %2478 = vperm.xlu0 %2477, %v1764
      %v2479 = vpop.permute.xlu0 %2478
      %2482 = vset.pattern.permute.xlu0 0
      %2483 = vperm.xlu0 %2482, %v1765
      %v2484 = vpop.permute.xlu0 %2483
      %2487 = vset.pattern.permute.xlu0 0
      %2488 = vperm.xlu0 %2487, %v1766
      %v2489 = vpop.permute.xlu0 %2488
      %2492 = vset.pattern.permute.xlu0 0
      %2493 = vperm.xlu0 %2492, %v1767
      %v2494 = vpop.permute.xlu0 %2493
      %2497 = vset.pattern.permute.xlu0 0
      %2498 = vperm.xlu0 %2497, %v1768
      %v2499 = vpop.permute.xlu0 %2498
      %2502 = vset.pattern.permute.xlu0 0
      %2503 = vperm.xlu0 %2502, %v1769
      %v2504 = vpop.permute.xlu0 %2503
      %2507 = vset.pattern.permute.xlu0 0
      %2508 = vperm.xlu0 %2507, %v1770
      %v2509 = vpop.permute.xlu0 %2508
      %2512 = vset.pattern.permute.xlu0 0
      %2513 = vperm.xlu0 %2512, %v1771
      %v2514 = vpop.permute.xlu0 %2513
      %2517 = vset.pattern.permute.xlu0 0
      %2518 = vperm.xlu0 %2517, %v1772
      %v2519 = vpop.permute.xlu0 %2518
      %2522 = vset.pattern.permute.xlu0 0
      %2523 = vperm.xlu0 %2522, %v1773
      %v2524 = vpop.permute.xlu0 %2523
      %2527 = vset.pattern.permute.xlu0 0
      %2528 = vperm.xlu0 %2527, %v1774
      %v2529 = vpop.permute.xlu0 %2528
      %2532 = vset.pattern.permute.xlu0 0
      %2533 = vperm.xlu0 %2532, %v1775
      %v2534 = vpop.permute.xlu0 %2533
      %2537 = vset.pattern.permute.xlu0 0
      %2538 = vperm.xlu0 %2537, %v1776
      %v2539 = vpop.permute.xlu0 %2538
      %2542 = vset.pattern.permute.xlu0 0
      %2543 = vperm.xlu0 %2542, %v1777
      %v2544 = vpop.permute.xlu0 %2543
      %v2546 = vadd.f32 %v2098, %v2229
      %v2547 = vadd.f32 %v2099, %v2229
      %v2548 = vadd.f32 %v2100, %v2234
      %v2549 = vadd.f32 %v2101, %v2234
      %v2550 = vadd.f32 %v2102, %v2239
      %v2551 = vadd.f32 %v2103, %v2239
      %v2552 = vadd.f32 %v2104, %v2244
      %v2553 = vadd.f32 %v2105, %v2244
      %v2554 = vadd.f32 %v2106, %v2249
      %v2555 = vadd.f32 %v2107, %v2249
      %v2556 = vadd.f32 %v2108, %v2254
      %v2557 = vadd.f32 %v2109, %v2254
      %v2558 = vadd.f32 %v2110, %v2259
      %v2559 = vadd.f32 %v2111, %v2259
      %v2560 = vadd.f32 %v2112, %v2264
      %v2561 = vadd.f32 %v2113, %v2264
      %v2562 = vadd.f32 %v2114, %v2269
      %v2563 = vadd.f32 %v2115, %v2269
      %v2564 = vadd.f32 %v2116, %v2274
      %v2565 = vadd.f32 %v2117, %v2274
      %v2566 = vadd.f32 %v2118, %v2279
      %v2567 = vadd.f32 %v2119, %v2279
      %v2568 = vadd.f32 %v2120, %v2284
      %v2569 = vadd.f32 %v2121, %v2284
      %v2570 = vadd.f32 %v2122, %v2289
      %v2571 = vadd.f32 %v2123, %v2289
      %v2572 = vadd.f32 %v2124, %v2294
      %v2573 = vadd.f32 %v2125, %v2294
      %v2574 = vadd.f32 %v2126, %v2299
      %v2575 = vadd.f32 %v2127, %v2299
      %v2576 = vadd.f32 %v2128, %v2304
      %v2577 = vadd.f32 %v2129, %v2304
      %v2578 = vadd.f32 %v2130, %v2309
      %v2579 = vadd.f32 %v2131, %v2309
      %v2580 = vadd.f32 %v2132, %v2314
      %v2581 = vadd.f32 %v2133, %v2314
      %v2582 = vadd.f32 %v2134, %v2319
      %v2583 = vadd.f32 %v2135, %v2319
      %v2584 = vadd.f32 %v2136, %v2324
      %v2585 = vadd.f32 %v2137, %v2324
      %v2586 = vadd.f32 %v2138, %v2329
      %v2587 = vadd.f32 %v2139, %v2329
      %v2588 = vadd.f32 %v2140, %v2334
      %v2589 = vadd.f32 %v2141, %v2334
      %v2590 = vadd.f32 %v2142, %v2339
      %v2591 = vadd.f32 %v2143, %v2339
      %v2592 = vadd.f32 %v2144, %v2344
      %v2593 = vadd.f32 %v2145, %v2344
      %v2594 = vadd.f32 %v2146, %v2349
      %v2595 = vadd.f32 %v2147, %v2349
      %v2596 = vadd.f32 %v2148, %v2354
      %v2597 = vadd.f32 %v2149, %v2354
      %v2598 = vadd.f32 %v2150, %v2359
      %v2599 = vadd.f32 %v2151, %v2359
      %v2600 = vadd.f32 %v2152, %v2364
      %v2601 = vadd.f32 %v2153, %v2364
      %v2602 = vadd.f32 %v2154, %v2369
      %v2603 = vadd.f32 %v2155, %v2369
      %v2604 = vadd.f32 %v2156, %v2374
      %v2605 = vadd.f32 %v2157, %v2374
      %v2606 = vadd.f32 %v2158, %v2379
      %v2607 = vadd.f32 %v2159, %v2379
      %v2608 = vadd.f32 %v2160, %v2384
      %v2609 = vadd.f32 %v2161, %v2384
      %v2610 = vadd.f32 %v2162, %v2389
      %v2611 = vadd.f32 %v2163, %v2389
      %v2612 = vadd.f32 %v2164, %v2394
      %v2613 = vadd.f32 %v2165, %v2394
      %v2614 = vadd.f32 %v2166, %v2399
      %v2615 = vadd.f32 %v2167, %v2399
      %v2616 = vadd.f32 %v2168, %v2404
      %v2617 = vadd.f32 %v2169, %v2404
      %v2618 = vadd.f32 %v2170, %v2409
      %v2619 = vadd.f32 %v2171, %v2409
      %v2620 = vadd.f32 %v2172, %v2414
      %v2621 = vadd.f32 %v2173, %v2414
      %v2622 = vadd.f32 %v2174, %v2419
      %v2623 = vadd.f32 %v2175, %v2419
      %v2624 = vadd.f32 %v2176, %v2424
      %v2625 = vadd.f32 %v2177, %v2424
      %v2626 = vadd.f32 %v2178, %v2429
      %v2627 = vadd.f32 %v2179, %v2429
      %v2628 = vadd.f32 %v2180, %v2434
      %v2629 = vadd.f32 %v2181, %v2434
      %v2630 = vadd.f32 %v2182, %v2439
      %v2631 = vadd.f32 %v2183, %v2439
      %v2632 = vadd.f32 %v2184, %v2444
      %v2633 = vadd.f32 %v2185, %v2444
      %v2634 = vadd.f32 %v2186, %v2449
      %v2635 = vadd.f32 %v2187, %v2449
      %v2636 = vadd.f32 %v2188, %v2454
      %v2637 = vadd.f32 %v2189, %v2454
      %v2638 = vadd.f32 %v2190, %v2459
      %v2639 = vadd.f32 %v2191, %v2459
      %v2640 = vadd.f32 %v2192, %v2464
      %v2641 = vadd.f32 %v2193, %v2464
      %v2642 = vadd.f32 %v2194, %v2469
      %v2643 = vadd.f32 %v2195, %v2469
      %v2644 = vadd.f32 %v2196, %v2474
      %v2645 = vadd.f32 %v2197, %v2474
      %v2646 = vadd.f32 %v2198, %v2479
      %v2647 = vadd.f32 %v2199, %v2479
      %v2648 = vadd.f32 %v2200, %v2484
      %v2649 = vadd.f32 %v2201, %v2484
      %v2650 = vadd.f32 %v2202, %v2489
      %v2651 = vadd.f32 %v2203, %v2489
      %v2652 = vadd.f32 %v2204, %v2494
      %v2653 = vadd.f32 %v2205, %v2494
      %v2654 = vadd.f32 %v2206, %v2499
      %v2655 = vadd.f32 %v2207, %v2499
      %v2656 = vadd.f32 %v2208, %v2504
      %v2657 = vadd.f32 %v2209, %v2504
      %v2658 = vadd.f32 %v2210, %v2509
      %v2659 = vadd.f32 %v2211, %v2509
      %v2660 = vadd.f32 %v2212, %v2514
      %v2661 = vadd.f32 %v2213, %v2514
      %v2662 = vadd.f32 %v2214, %v2519
      %v2663 = vadd.f32 %v2215, %v2519
      %v2664 = vadd.f32 %v2216, %v2524
      %v2665 = vadd.f32 %v2217, %v2524
      %v2666 = vadd.f32 %v2218, %v2529
      %v2667 = vadd.f32 %v2219, %v2529
      %v2668 = vadd.f32 %v2220, %v2534
      %v2669 = vadd.f32 %v2221, %v2534
      %v2670 = vadd.f32 %v2222, %v2539
      %v2671 = vadd.f32 %v2223, %v2539
      %v2672 = vadd.f32 %v2224, %v2544
      %v2673 = vadd.f32 %v2225, %v2544
      %v2674 = vmax.f32 %v2546, 0.0
      %v2675 = vmax.f32 %v2547, 0.0
      %v2676 = vmax.f32 %v2548, 0.0
      %v2677 = vmax.f32 %v2549, 0.0
      %v2678 = vmax.f32 %v2550, 0.0
      %v2679 = vmax.f32 %v2551, 0.0
      %v2680 = vmax.f32 %v2552, 0.0
      %v2681 = vmax.f32 %v2553, 0.0
      %v2682 = vmax.f32 %v2554, 0.0
      %v2683 = vmax.f32 %v2555, 0.0
      %v2684 = vmax.f32 %v2556, 0.0
      %v2685 = vmax.f32 %v2557, 0.0
      %v2686 = vmax.f32 %v2558, 0.0
      %v2687 = vmax.f32 %v2559, 0.0
      %v2688 = vmax.f32 %v2560, 0.0
      %v2689 = vmax.f32 %v2561, 0.0
      %v2690 = vmax.f32 %v2562, 0.0
      %v2691 = vmax.f32 %v2563, 0.0
      %v2692 = vmax.f32 %v2564, 0.0
      %v2693 = vmax.f32 %v2565, 0.0
      %v2694 = vmax.f32 %v2566, 0.0
      %v2695 = vmax.f32 %v2567, 0.0
      %v2696 = vmax.f32 %v2568, 0.0
      %v2697 = vmax.f32 %v2569, 0.0
      %v2698 = vmax.f32 %v2570, 0.0
      %v2699 = vmax.f32 %v2571, 0.0
      %v2700 = vmax.f32 %v2572, 0.0
      %v2701 = vmax.f32 %v2573, 0.0
      %v2702 = vmax.f32 %v2574, 0.0
      %v2703 = vmax.f32 %v2575, 0.0
      %v2704 = vmax.f32 %v2576, 0.0
      %v2705 = vmax.f32 %v2577, 0.0
      %v2706 = vmax.f32 %v2578, 0.0
      %v2707 = vmax.f32 %v2579, 0.0
      %v2708 = vmax.f32 %v2580, 0.0
      %v2709 = vmax.f32 %v2581, 0.0
      %v2710 = vmax.f32 %v2582, 0.0
      %v2711 = vmax.f32 %v2583, 0.0
      %v2712 = vmax.f32 %v2584, 0.0
      %v2713 = vmax.f32 %v2585, 0.0
      %v2714 = vmax.f32 %v2586, 0.0
      %v2715 = vmax.f32 %v2587, 0.0
      %v2716 = vmax.f32 %v2588, 0.0
      %v2717 = vmax.f32 %v2589, 0.0
      %v2718 = vmax.f32 %v2590, 0.0
      %v2719 = vmax.f32 %v2591, 0.0
      %v2720 = vmax.f32 %v2592, 0.0
      %v2721 = vmax.f32 %v2593, 0.0
      %v2722 = vmax.f32 %v2594, 0.0
      %v2723 = vmax.f32 %v2595, 0.0
      %v2724 = vmax.f32 %v2596, 0.0
      %v2725 = vmax.f32 %v2597, 0.0
      %v2726 = vmax.f32 %v2598, 0.0
      %v2727 = vmax.f32 %v2599, 0.0
      %v2728 = vmax.f32 %v2600, 0.0
      %v2729 = vmax.f32 %v2601, 0.0
      %v2730 = vmax.f32 %v2602, 0.0
      %v2731 = vmax.f32 %v2603, 0.0
      %v2732 = vmax.f32 %v2604, 0.0
      %v2733 = vmax.f32 %v2605, 0.0
      %v2734 = vmax.f32 %v2606, 0.0
      %v2735 = vmax.f32 %v2607, 0.0
      %v2736 = vmax.f32 %v2608, 0.0
      %v2737 = vmax.f32 %v2609, 0.0
      %v2738 = vmax.f32 %v2610, 0.0
      %v2739 = vmax.f32 %v2611, 0.0
      %v2740 = vmax.f32 %v2612, 0.0
      %v2741 = vmax.f32 %v2613, 0.0
      %v2742 = vmax.f32 %v2614, 0.0
      %v2743 = vmax.f32 %v2615, 0.0
      %v2744 = vmax.f32 %v2616, 0.0
      %v2745 = vmax.f32 %v2617, 0.0
      %v2746 = vmax.f32 %v2618, 0.0
      %v2747 = vmax.f32 %v2619, 0.0
      %v2748 = vmax.f32 %v2620, 0.0
      %v2749 = vmax.f32 %v2621, 0.0
      %v2750 = vmax.f32 %v2622, 0.0
      %v2751 = vmax.f32 %v2623, 0.0
      %v2752 = vmax.f32 %v2624, 0.0
      %v2753 = vmax.f32 %v2625, 0.0
      %v2754 = vmax.f32 %v2626, 0.0
      %v2755 = vmax.f32 %v2627, 0.0
      %v2756 = vmax.f32 %v2628, 0.0
      %v2757 = vmax.f32 %v2629, 0.0
      %v2758 = vmax.f32 %v2630, 0.0
      %v2759 = vmax.f32 %v2631, 0.0
      %v2760 = vmax.f32 %v2632, 0.0
      %v2761 = vmax.f32 %v2633, 0.0
      %v2762 = vmax.f32 %v2634, 0.0
      %v2763 = vmax.f32 %v2635, 0.0
      %v2764 = vmax.f32 %v2636, 0.0
      %v2765 = vmax.f32 %v2637, 0.0
      %v2766 = vmax.f32 %v2638, 0.0
      %v2767 = vmax.f32 %v2639, 0.0
      %v2768 = vmax.f32 %v2640, 0.0
      %v2769 = vmax.f32 %v2641, 0.0
      %v2770 = vmax.f32 %v2642, 0.0
      %v2771 = vmax.f32 %v2643, 0.0
      %v2772 = vmax.f32 %v2644, 0.0
      %v2773 = vmax.f32 %v2645, 0.0
      %v2774 = vmax.f32 %v2646, 0.0
      %v2775 = vmax.f32 %v2647, 0.0
      %v2776 = vmax.f32 %v2648, 0.0
      %v2777 = vmax.f32 %v2649, 0.0
      %v2778 = vmax.f32 %v2650, 0.0
      %v2779 = vmax.f32 %v2651, 0.0
      %v2780 = vmax.f32 %v2652, 0.0
      %v2781 = vmax.f32 %v2653, 0.0
      %v2782 = vmax.f32 %v2654, 0.0
      %v2783 = vmax.f32 %v2655, 0.0
      %v2784 = vmax.f32 %v2656, 0.0
      %v2785 = vmax.f32 %v2657, 0.0
      %v2786 = vmax.f32 %v2658, 0.0
      %v2787 = vmax.f32 %v2659, 0.0
      %v2788 = vmax.f32 %v2660, 0.0
      %v2789 = vmax.f32 %v2661, 0.0
      %v2790 = vmax.f32 %v2662, 0.0
      %v2791 = vmax.f32 %v2663, 0.0
      %v2792 = vmax.f32 %v2664, 0.0
      %v2793 = vmax.f32 %v2665, 0.0
      %v2794 = vmax.f32 %v2666, 0.0
      %v2795 = vmax.f32 %v2667, 0.0
      %v2796 = vmax.f32 %v2668, 0.0
      %v2797 = vmax.f32 %v2669, 0.0
      %v2798 = vmax.f32 %v2670, 0.0
      %v2799 = vmax.f32 %v2671, 0.0
      %v2800 = vmax.f32 %v2672, 0.0
      %v2801 = vmax.f32 %v2673, 0.0
      %v2802 = vpack.c.bf16 %v2676, %v2674
      %v2803 = vpack.c.bf16 %v2677, %v2675
      %v2804 = vpack.c.bf16 %v2680, %v2678
      %v2805 = vpack.c.bf16 %v2681, %v2679
      %v2806 = vpack.c.bf16 %v2684, %v2682
      %v2807 = vpack.c.bf16 %v2685, %v2683
      %v2808 = vpack.c.bf16 %v2688, %v2686
      %v2809 = vpack.c.bf16 %v2689, %v2687
      %v2810 = vpack.c.bf16 %v2692, %v2690
      %v2811 = vpack.c.bf16 %v2693, %v2691
      %v2812 = vpack.c.bf16 %v2696, %v2694
      %v2813 = vpack.c.bf16 %v2697, %v2695
      %v2814 = vpack.c.bf16 %v2700, %v2698
      %v2815 = vpack.c.bf16 %v2701, %v2699
      %v2816 = vpack.c.bf16 %v2704, %v2702
      %v2817 = vpack.c.bf16 %v2705, %v2703
      %v2818 = vpack.c.bf16 %v2708, %v2706
      %v2819 = vpack.c.bf16 %v2709, %v2707
      %v2820 = vpack.c.bf16 %v2712, %v2710
      %v2821 = vpack.c.bf16 %v2713, %v2711
      %v2822 = vpack.c.bf16 %v2716, %v2714
      %v2823 = vpack.c.bf16 %v2717, %v2715
      %v2824 = vpack.c.bf16 %v2720, %v2718
      %v2825 = vpack.c.bf16 %v2721, %v2719
      %v2826 = vpack.c.bf16 %v2724, %v2722
      %v2827 = vpack.c.bf16 %v2725, %v2723
      %v2828 = vpack.c.bf16 %v2728, %v2726
      %v2829 = vpack.c.bf16 %v2729, %v2727
      %v2830 = vpack.c.bf16 %v2732, %v2730
      %v2831 = vpack.c.bf16 %v2733, %v2731
      %v2832 = vpack.c.bf16 %v2736, %v2734
      %v2833 = vpack.c.bf16 %v2737, %v2735
      %v2834 = vpack.c.bf16 %v2740, %v2738
      %v2835 = vpack.c.bf16 %v2741, %v2739
      %v2836 = vpack.c.bf16 %v2744, %v2742
      %v2837 = vpack.c.bf16 %v2745, %v2743
      %v2838 = vpack.c.bf16 %v2748, %v2746
      %v2839 = vpack.c.bf16 %v2749, %v2747
      %v2840 = vpack.c.bf16 %v2752, %v2750
      %v2841 = vpack.c.bf16 %v2753, %v2751
      %v2842 = vpack.c.bf16 %v2756, %v2754
      %v2843 = vpack.c.bf16 %v2757, %v2755
      %v2844 = vpack.c.bf16 %v2760, %v2758
      %v2845 = vpack.c.bf16 %v2761, %v2759
      %v2846 = vpack.c.bf16 %v2764, %v2762
      %v2847 = vpack.c.bf16 %v2765, %v2763
      %v2848 = vpack.c.bf16 %v2768, %v2766
      %v2849 = vpack.c.bf16 %v2769, %v2767
      %v2850 = vpack.c.bf16 %v2772, %v2770
      %v2851 = vpack.c.bf16 %v2773, %v2771
      %v2852 = vpack.c.bf16 %v2776, %v2774
      %v2853 = vpack.c.bf16 %v2777, %v2775
      %v2854 = vpack.c.bf16 %v2780, %v2778
      %v2855 = vpack.c.bf16 %v2781, %v2779
      %v2856 = vpack.c.bf16 %v2784, %v2782
      %v2857 = vpack.c.bf16 %v2785, %v2783
      %v2858 = vpack.c.bf16 %v2788, %v2786
      %v2859 = vpack.c.bf16 %v2789, %v2787
      %v2860 = vpack.c.bf16 %v2792, %v2790
      %v2861 = vpack.c.bf16 %v2793, %v2791
      %v2862 = vpack.c.bf16 %v2796, %v2794
      %v2863 = vpack.c.bf16 %v2797, %v2795
      %v2864 = vpack.c.bf16 %v2800, %v2798
      %v2865 = vpack.c.bf16 %v2801, %v2799
      %v2866 = vld [vmem:[%s283] sm:$0xff]
      %v2867 = vld [vmem:[%s283 + $0x8] sm:$0xff]
      %v2868 = vld [vmem:[%s283 + $0x10] sm:$0xff]
      %v2869 = vld [vmem:[%s283 + $0x18] sm:$0xff]
      %v2870 = vld [vmem:[%s283 + $0x20] sm:$0xff]
      %v2871 = vld [vmem:[%s283 + $0x28] sm:$0xff]
      %v2872 = vld [vmem:[%s283 + $0x30] sm:$0xff]
      %v2873 = vld [vmem:[%s283 + $0x38] sm:$0xff]
      %v2874 = vld [vmem:[%s283 + $0x40] sm:$0xff]
      %v2875 = vld [vmem:[%s283 + $0x48] sm:$0xff]
      %v2876 = vld [vmem:[%s283 + $0x50] sm:$0xff]
      %v2877 = vld [vmem:[%s283 + $0x58] sm:$0xff]
      %v2878 = vld [vmem:[%s283 + $0x60] sm:$0xff]
      %v2879 = vld [vmem:[%s283 + $0x68] sm:$0xff]
      %v2880 = vld [vmem:[%s283 + $0x70] sm:$0xff]
      %v2881 = vld [vmem:[%s283 + $0x78] sm:$0xff]
      %v2882 = vld [vmem:[%s283 + $0x80] sm:$0xff]
      %v2883 = vld [vmem:[%s283 + $0x88] sm:$0xff]
      %v2884 = vld [vmem:[%s283 + $0x90] sm:$0xff]
      %v2885 = vld [vmem:[%s283 + $0x98] sm:$0xff]
      %v2886 = vld [vmem:[%s283 + $0xa0] sm:$0xff]
      %v2887 = vld [vmem:[%s283 + $0xa8] sm:$0xff]
      %v2888 = vld [vmem:[%s283 + $0xb0] sm:$0xff]
      %v2889 = vld [vmem:[%s283 + $0xb8] sm:$0xff]
      %v2890 = vld [vmem:[%s283 + $0xc0] sm:$0xff]
      %v2891 = vld [vmem:[%s283 + $0xc8] sm:$0xff]
      %v2892 = vld [vmem:[%s283 + $0xd0] sm:$0xff]
      %v2893 = vld [vmem:[%s283 + $0xd8] sm:$0xff]
      %v2894 = vld [vmem:[%s283 + $0xe0] sm:$0xff]
      %v2895 = vld [vmem:[%s283 + $0xe8] sm:$0xff]
      %v2896 = vld [vmem:[%s283 + $0xf0] sm:$0xff]
      %v2897 = vld [vmem:[%s283 + $0xf8] sm:$0xff]
      %v2898 = vld [vmem:[%s283 + $0x100] sm:$0xff]
      %v2899 = vld [vmem:[%s283 + $0x108] sm:$0xff]
      %v2900 = vld [vmem:[%s283 + $0x110] sm:$0xff]
      %v2901 = vld [vmem:[%s283 + $0x118] sm:$0xff]
      %v2902 = vld [vmem:[%s283 + $0x120] sm:$0xff]
      %v2903 = vld [vmem:[%s283 + $0x128] sm:$0xff]
      %v2904 = vld [vmem:[%s283 + $0x130] sm:$0xff]
      %v2905 = vld [vmem:[%s283 + $0x138] sm:$0xff]
      %v2906 = vld [vmem:[%s283 + $0x140] sm:$0xff]
      %v2907 = vld [vmem:[%s283 + $0x148] sm:$0xff]
      %v2908 = vld [vmem:[%s283 + $0x150] sm:$0xff]
      %v2909 = vld [vmem:[%s283 + $0x158] sm:$0xff]
      %v2910 = vld [vmem:[%s283 + $0x160] sm:$0xff]
      %v2911 = vld [vmem:[%s283 + $0x168] sm:$0xff]
      %v2912 = vld [vmem:[%s283 + $0x170] sm:$0xff]
      %v2913 = vld [vmem:[%s283 + $0x178] sm:$0xff]
      %v2914 = vld [vmem:[%s283 + $0x180] sm:$0xff]
      %v2915 = vld [vmem:[%s283 + $0x188] sm:$0xff]
      %v2916 = vld [vmem:[%s283 + $0x190] sm:$0xff]
      %v2917 = vld [vmem:[%s283 + $0x198] sm:$0xff]
      %v2918 = vld [vmem:[%s283 + $0x1a0] sm:$0xff]
      %v2919 = vld [vmem:[%s283 + $0x1a8] sm:$0xff]
      %v2920 = vld [vmem:[%s283 + $0x1b0] sm:$0xff]
      %v2921 = vld [vmem:[%s283 + $0x1b8] sm:$0xff]
      %v2922 = vld [vmem:[%s283 + $0x1c0] sm:$0xff]
      %v2923 = vld [vmem:[%s283 + $0x1c8] sm:$0xff]
      %v2924 = vld [vmem:[%s283 + $0x1d0] sm:$0xff]
      %v2925 = vld [vmem:[%s283 + $0x1d8] sm:$0xff]
      %v2926 = vld [vmem:[%s283 + $0x1e0] sm:$0xff]
      %v2927 = vld [vmem:[%s283 + $0x1e8] sm:$0xff]
      %v2928 = vld [vmem:[%s283 + $0x1f0] sm:$0xff]
      %v2929 = vld [vmem:[%s283 + $0x1f8] sm:$0xff]
      %v2994 = vunpack.c.l.b16 %v2866
      %v2995 = vunpack.c.h.b16 %v2866
      %v2996 = vunpack.c.l.b16 %v2867
      %v2997 = vunpack.c.h.b16 %v2867
      %v2998 = vunpack.c.l.b16 %v2868
      %v2999 = vunpack.c.h.b16 %v2868
      %v3000 = vunpack.c.l.b16 %v2869
      %v3001 = vunpack.c.h.b16 %v2869
      %v3002 = vunpack.c.l.b16 %v2870
      %v3003 = vunpack.c.h.b16 %v2870
      %v3004 = vunpack.c.l.b16 %v2871
      %v3005 = vunpack.c.h.b16 %v2871
      %v3006 = vunpack.c.l.b16 %v2872
      %v3007 = vunpack.c.h.b16 %v2872
      %v3008 = vunpack.c.l.b16 %v2873
      %v3009 = vunpack.c.h.b16 %v2873
      %v3010 = vunpack.c.l.b16 %v2874
      %v3011 = vunpack.c.h.b16 %v2874
      %v3012 = vunpack.c.l.b16 %v2875
      %v3013 = vunpack.c.h.b16 %v2875
      %v3014 = vunpack.c.l.b16 %v2876
      %v3015 = vunpack.c.h.b16 %v2876
      %v3016 = vunpack.c.l.b16 %v2877
      %v3017 = vunpack.c.h.b16 %v2877
      %v3018 = vunpack.c.l.b16 %v2878
      %v3019 = vunpack.c.h.b16 %v2878
      %v3020 = vunpack.c.l.b16 %v2879
      %v3021 = vunpack.c.h.b16 %v2879
      %v3022 = vunpack.c.l.b16 %v2880
      %v3023 = vunpack.c.h.b16 %v2880
      %v3024 = vunpack.c.l.b16 %v2881
      %v3025 = vunpack.c.h.b16 %v2881
      %v3026 = vunpack.c.l.b16 %v2882
      %v3027 = vunpack.c.h.b16 %v2882
      %v3028 = vunpack.c.l.b16 %v2883
      %v3029 = vunpack.c.h.b16 %v2883
      %v3030 = vunpack.c.l.b16 %v2884
      %v3031 = vunpack.c.h.b16 %v2884
      %v3032 = vunpack.c.l.b16 %v2885
      %v3033 = vunpack.c.h.b16 %v2885
      %v3034 = vunpack.c.l.b16 %v2886
      %v3035 = vunpack.c.h.b16 %v2886
      %v3036 = vunpack.c.l.b16 %v2887
      %v3037 = vunpack.c.h.b16 %v2887
      %v3038 = vunpack.c.l.b16 %v2888
      %v3039 = vunpack.c.h.b16 %v2888
      %v3040 = vunpack.c.l.b16 %v2889
      %v3041 = vunpack.c.h.b16 %v2889
      %v3042 = vunpack.c.l.b16 %v2890
      %v3043 = vunpack.c.h.b16 %v2890
      %v3044 = vunpack.c.l.b16 %v2891
      %v3045 = vunpack.c.h.b16 %v2891
      %v3046 = vunpack.c.l.b16 %v2892
      %v3047 = vunpack.c.h.b16 %v2892
      %v3048 = vunpack.c.l.b16 %v2893
      %v3049 = vunpack.c.h.b16 %v2893
      %v3050 = vunpack.c.l.b16 %v2894
      %v3051 = vunpack.c.h.b16 %v2894
      %v3052 = vunpack.c.l.b16 %v2895
      %v3053 = vunpack.c.h.b16 %v2895
      %v3054 = vunpack.c.l.b16 %v2896
      %v3055 = vunpack.c.h.b16 %v2896
      %v3056 = vunpack.c.l.b16 %v2897
      %v3057 = vunpack.c.h.b16 %v2897
      %v3058 = vunpack.c.l.b16 %v2898
      %v3059 = vunpack.c.h.b16 %v2898
      %v3060 = vunpack.c.l.b16 %v2899
      %v3061 = vunpack.c.h.b16 %v2899
      %v3062 = vunpack.c.l.b16 %v2900
      %v3063 = vunpack.c.h.b16 %v2900
      %v3064 = vunpack.c.l.b16 %v2901
      %v3065 = vunpack.c.h.b16 %v2901
      %v3066 = vunpack.c.l.b16 %v2902
      %v3067 = vunpack.c.h.b16 %v2902
      %v3068 = vunpack.c.l.b16 %v2903
      %v3069 = vunpack.c.h.b16 %v2903
      %v3070 = vunpack.c.l.b16 %v2904
      %v3071 = vunpack.c.h.b16 %v2904
      %v3072 = vunpack.c.l.b16 %v2905
      %v3073 = vunpack.c.h.b16 %v2905
      %v3074 = vunpack.c.l.b16 %v2906
      %v3075 = vunpack.c.h.b16 %v2906
      %v3076 = vunpack.c.l.b16 %v2907
      %v3077 = vunpack.c.h.b16 %v2907
      %v3078 = vunpack.c.l.b16 %v2908
      %v3079 = vunpack.c.h.b16 %v2908
      %v3080 = vunpack.c.l.b16 %v2909
      %v3081 = vunpack.c.h.b16 %v2909
      %v3082 = vunpack.c.l.b16 %v2910
      %v3083 = vunpack.c.h.b16 %v2910
      %v3084 = vunpack.c.l.b16 %v2911
      %v3085 = vunpack.c.h.b16 %v2911
      %v3086 = vunpack.c.l.b16 %v2912
      %v3087 = vunpack.c.h.b16 %v2912
      %v3088 = vunpack.c.l.b16 %v2913
      %v3089 = vunpack.c.h.b16 %v2913
      %v3090 = vunpack.c.l.b16 %v2914
      %v3091 = vunpack.c.h.b16 %v2914
      %v3092 = vunpack.c.l.b16 %v2915
      %v3093 = vunpack.c.h.b16 %v2915
      %v3094 = vunpack.c.l.b16 %v2916
      %v3095 = vunpack.c.h.b16 %v2916
      %v3096 = vunpack.c.l.b16 %v2917
      %v3097 = vunpack.c.h.b16 %v2917
      %v3098 = vunpack.c.l.b16 %v2918
      %v3099 = vunpack.c.h.b16 %v2918
      %v3100 = vunpack.c.l.b16 %v2919
      %v3101 = vunpack.c.h.b16 %v2919
      %v3102 = vunpack.c.l.b16 %v2920
      %v3103 = vunpack.c.h.b16 %v2920
      %v3104 = vunpack.c.l.b16 %v2921
      %v3105 = vunpack.c.h.b16 %v2921
      %v3106 = vunpack.c.l.b16 %v2922
      %v3107 = vunpack.c.h.b16 %v2922
      %v3108 = vunpack.c.l.b16 %v2923
      %v3109 = vunpack.c.h.b16 %v2923
      %v3110 = vunpack.c.l.b16 %v2924
      %v3111 = vunpack.c.h.b16 %v2924
      %v3112 = vunpack.c.l.b16 %v2925
      %v3113 = vunpack.c.h.b16 %v2925
      %v3114 = vunpack.c.l.b16 %v2926
      %v3115 = vunpack.c.h.b16 %v2926
      %v3116 = vunpack.c.l.b16 %v2927
      %v3117 = vunpack.c.h.b16 %v2927
      %v3118 = vunpack.c.l.b16 %v2928
      %v3119 = vunpack.c.h.b16 %v2928
      %v3120 = vunpack.c.l.b16 %v2929
      %v3121 = vunpack.c.h.b16 %v2929
      %v3122 = vpack.c.b16 %v2998, %v2994
      %v3123 = vpack.c.b16 %v2999, %v2995
      %v3124 = vpack.c.b16 %v3000, %v2996
      %v3125 = vpack.c.b16 %v3001, %v2997
      %v3126 = vpack.c.b16 %v3006, %v3002
      %v3127 = vpack.c.b16 %v3007, %v3003
      %v3128 = vpack.c.b16 %v3008, %v3004
      %v3129 = vpack.c.b16 %v3009, %v3005
      %v3130 = vpack.c.b16 %v3014, %v3010
      %v3131 = vpack.c.b16 %v3015, %v3011
      %v3132 = vpack.c.b16 %v3016, %v3012
      %v3133 = vpack.c.b16 %v3017, %v3013
      %v3134 = vpack.c.b16 %v3022, %v3018
      %v3135 = vpack.c.b16 %v3023, %v3019
      %v3136 = vpack.c.b16 %v3024, %v3020
      %v3137 = vpack.c.b16 %v3025, %v3021
      %v3138 = vpack.c.b16 %v3030, %v3026
      %v3139 = vpack.c.b16 %v3031, %v3027
      %v3140 = vpack.c.b16 %v3032, %v3028
      %v3141 = vpack.c.b16 %v3033, %v3029
      %v3142 = vpack.c.b16 %v3038, %v3034
      %v3143 = vpack.c.b16 %v3039, %v3035
      %v3144 = vpack.c.b16 %v3040, %v3036
      %v3145 = vpack.c.b16 %v3041, %v3037
      %v3146 = vpack.c.b16 %v3046, %v3042
      %v3147 = vpack.c.b16 %v3047, %v3043
      %v3148 = vpack.c.b16 %v3048, %v3044
      %v3149 = vpack.c.b16 %v3049, %v3045
      %v3150 = vpack.c.b16 %v3054, %v3050
      %v3151 = vpack.c.b16 %v3055, %v3051
      %v3152 = vpack.c.b16 %v3056, %v3052
      %v3153 = vpack.c.b16 %v3057, %v3053
      %v3154 = vpack.c.b16 %v3062, %v3058
      %v3155 = vpack.c.b16 %v3063, %v3059
      %v3156 = vpack.c.b16 %v3064, %v3060
      %v3157 = vpack.c.b16 %v3065, %v3061
      %v3158 = vpack.c.b16 %v3070, %v3066
      %v3159 = vpack.c.b16 %v3071, %v3067
      %v3160 = vpack.c.b16 %v3072, %v3068
      %v3161 = vpack.c.b16 %v3073, %v3069
      %v3162 = vpack.c.b16 %v3078, %v3074
      %v3163 = vpack.c.b16 %v3079, %v3075
      %v3164 = vpack.c.b16 %v3080, %v3076
      %v3165 = vpack.c.b16 %v3081, %v3077
      %v3166 = vpack.c.b16 %v3086, %v3082
      %v3167 = vpack.c.b16 %v3087, %v3083
      %v3168 = vpack.c.b16 %v3088, %v3084
      %v3169 = vpack.c.b16 %v3089, %v3085
      %v3170 = vpack.c.b16 %v3094, %v3090
      %v3171 = vpack.c.b16 %v3095, %v3091
      %v3172 = vpack.c.b16 %v3096, %v3092
      %v3173 = vpack.c.b16 %v3097, %v3093
      %v3174 = vpack.c.b16 %v3102, %v3098
      %v3175 = vpack.c.b16 %v3103, %v3099
      %v3176 = vpack.c.b16 %v3104, %v3100
      %v3177 = vpack.c.b16 %v3105, %v3101
      %v3178 = vpack.c.b16 %v3110, %v3106
      %v3179 = vpack.c.b16 %v3111, %v3107
      %v3180 = vpack.c.b16 %v3112, %v3108
      %v3181 = vpack.c.b16 %v3113, %v3109
      %v3182 = vpack.c.b16 %v3118, %v3114
      %v3183 = vpack.c.b16 %v3119, %v3115
      %v3184 = vpack.c.b16 %v3120, %v3116
      %v3185 = vpack.c.b16 %v3121, %v3117
      %3250 = vmatprep.subr.bf16.mxu0 %v2803
      %3251 = vmatpush1.bf16.msra.mxu0 %v2802
      %3252 = vmatprep.subr.bf16.mxu0 %v2805
      %3253 = vmatpush1.bf16.msra.mxu0 %v2804
      %3254 = vmatprep.subr.bf16.mxu0 %v2807
      %3255 = vmatpush1.bf16.msra.mxu0 %v2806
      %3256 = vmatprep.subr.bf16.mxu0 %v2809
      %3257 = vmatpush1.bf16.msra.mxu0 %v2808
      %3258 = vmatprep.subr.bf16.mxu0 %v2811
      %3259 = vmatpush1.bf16.msra.mxu0 %v2810
      %3260 = vmatprep.subr.bf16.mxu0 %v2813
      %3261 = vmatpush1.bf16.msra.mxu0 %v2812
      %3262 = vmatprep.subr.bf16.mxu0 %v2815
      %3263 = vmatpush1.bf16.msra.mxu0 %v2814
      %3264 = vmatprep.subr.bf16.mxu0 %v2817
      %3265 = vmatpush1.bf16.msra.mxu0 %v2816
      %3266 = vmatprep.subr.bf16.mxu0 %v2819
      %3267 = vmatpush1.bf16.msra.mxu0 %v2818
      %3268 = vmatprep.subr.bf16.mxu0 %v2821
      %3269 = vmatpush1.bf16.msra.mxu0 %v2820
      %3270 = vmatprep.subr.bf16.mxu0 %v2823
      %3271 = vmatpush1.bf16.msra.mxu0 %v2822
      %3272 = vmatprep.subr.bf16.mxu0 %v2825
      %3273 = vmatpush1.bf16.msra.mxu0 %v2824
      %3274 = vmatprep.subr.bf16.mxu0 %v2827
      %3275 = vmatpush1.bf16.msra.mxu0 %v2826
      %3276 = vmatprep.subr.bf16.mxu0 %v2829
      %3277 = vmatpush1.bf16.msra.mxu0 %v2828
      %3278 = vmatprep.subr.bf16.mxu0 %v2831
      %3279 = vmatpush1.bf16.msra.mxu0 %v2830
      %3280 = vmatprep.subr.bf16.mxu0 %v2833
      %3281 = vmatpush1.bf16.msra.mxu0 %v2832
      %3282 = vmatprep.mubr.bf16.mxu0 %v3123
      %3283 = vmatmul.mubr.bf16.gmra.mrb[0].mxu0 %v3122
      %v3284 = vpop.f32.mrb[0].mxu0
      %v3285 = vadd.f32 0.0, %v3284
      %v3286 = vpop.f32.mrb[0].mxu0
      %v3287 = vadd.f32 0.0, %v3286
      %v3288 = vpop.f32.mrb[0].mxu0
      %v3289 = vadd.f32 0.0, %v3288
      %v3290 = vpop.f32.mrb[0].mxu0
      %v3291 = vadd.f32 0.0, %v3290
      %3292 = vmatprep.mubr.bf16.mxu0 %v3127
      %3293 = vmatmul.mubr.bf16.gmra.mrb[0].mxu0 %v3126
      %v3294 = vpop.f32.mrb[0].mxu0
      %v3295 = vadd.f32 0.0, %v3294
      %v3296 = vpop.f32.mrb[0].mxu0
      %v3297 = vadd.f32 0.0, %v3296
      %v3298 = vpop.f32.mrb[0].mxu0
      %v3299 = vadd.f32 0.0, %v3298
      %v3300 = vpop.f32.mrb[0].mxu0
      %v3301 = vadd.f32 0.0, %v3300
      %3302 = vmatprep.mubr.bf16.mxu0 %v3131
      %3303 = vmatmul.mubr.bf16.gmra.mrb[0].mxu0 %v3130
      %v3304 = vpop.f32.mrb[0].mxu0
      %v3305 = vadd.f32 0.0, %v3304
      %v3306 = vpop.f32.mrb[0].mxu0
      %v3307 = vadd.f32 0.0, %v3306
      %v3308 = vpop.f32.mrb[0].mxu0
      %v3309 = vadd.f32 0.0, %v3308
      %v3310 = vpop.f32.mrb[0].mxu0
      %v3311 = vadd.f32 0.0, %v3310
      %3312 = vmatprep.mubr.bf16.mxu0 %v3135
      %3313 = vmatmul.mubr.bf16.gmra.mrb[0].mxu0 %v3134
      %v3314 = vpop.f32.mrb[0].mxu0
      %v3315 = vadd.f32 0.0, %v3314
      %v3316 = vpop.f32.mrb[0].mxu0
      %v3317 = vadd.f32 0.0, %v3316
      %v3318 = vpop.f32.mrb[0].mxu0
      %v3319 = vadd.f32 0.0, %v3318
      %v3320 = vpop.f32.mrb[0].mxu0
      %v3321 = vadd.f32 0.0, %v3320
      %3322 = vmatprep.mubr.bf16.mxu0 %v3139
      %3323 = vmatmul.mubr.bf16.gmra.mrb[0].mxu0 %v3138
      %v3324 = vpop.f32.mrb[0].mxu0
      %v3325 = vadd.f32 0.0, %v3324
      %v3326 = vpop.f32.mrb[0].mxu0
      %v3327 = vadd.f32 0.0, %v3326
      %v3328 = vpop.f32.mrb[0].mxu0
      %v3329 = vadd.f32 0.0, %v3328
      %v3330 = vpop.f32.mrb[0].mxu0
      %v3331 = vadd.f32 0.0, %v3330
      %3332 = vmatprep.mubr.bf16.mxu0 %v3143
      %3333 = vmatmul.mubr.bf16.gmra.mrb[0].mxu0 %v3142
      %v3334 = vpop.f32.mrb[0].mxu0
      %v3335 = vadd.f32 0.0, %v3334
      %v3336 = vpop.f32.mrb[0].mxu0
      %v3337 = vadd.f32 0.0, %v3336
      %v3338 = vpop.f32.mrb[0].mxu0
      %v3339 = vadd.f32 0.0, %v3338
      %v3340 = vpop.f32.mrb[0].mxu0
      %v3341 = vadd.f32 0.0, %v3340
      %3342 = vmatprep.mubr.bf16.mxu0 %v3147
      %3343 = vmatmul.mubr.bf16.gmra.mrb[0].mxu0 %v3146
      %v3344 = vpop.f32.mrb[0].mxu0
      %v3345 = vadd.f32 0.0, %v3344
      %v3346 = vpop.f32.mrb[0].mxu0
      %v3347 = vadd.f32 0.0, %v3346
      %v3348 = vpop.f32.mrb[0].mxu0
      %v3349 = vadd.f32 0.0, %v3348
      %v3350 = vpop.f32.mrb[0].mxu0
      %v3351 = vadd.f32 0.0, %v3350
      %3352 = vmatprep.mubr.bf16.mxu0 %v3151
      %3353 = vmatmul.mubr.bf16.gmra.mrb[0].mxu0 %v3150
      %v3354 = vpop.f32.mrb[0].mxu0
      %v3355 = vadd.f32 0.0, %v3354
      %v3356 = vpop.f32.mrb[0].mxu0
      %v3357 = vadd.f32 0.0, %v3356
      %v3358 = vpop.f32.mrb[0].mxu0
      %v3359 = vadd.f32 0.0, %v3358
      %v3360 = vpop.f32.mrb[0].mxu0
      %v3361 = vadd.f32 0.0, %v3360
      %3362 = vmatprep.mubr.bf16.mxu0 %v3155
      %3363 = vmatmul.mubr.bf16.gmra.mrb[0].mxu0 %v3154
      %v3364 = vpop.f32.mrb[0].mxu0
      %v3365 = vadd.f32 0.0, %v3364
      %v3366 = vpop.f32.mrb[0].mxu0
      %v3367 = vadd.f32 0.0, %v3366
      %v3368 = vpop.f32.mrb[0].mxu0
      %v3369 = vadd.f32 0.0, %v3368
      %v3370 = vpop.f32.mrb[0].mxu0
      %v3371 = vadd.f32 0.0, %v3370
      %3372 = vmatprep.mubr.bf16.mxu0 %v3159
      %3373 = vmatmul.mubr.bf16.gmra.mrb[0].mxu0 %v3158
      %v3374 = vpop.f32.mrb[0].mxu0
      %v3375 = vadd.f32 0.0, %v3374
      %v3376 = vpop.f32.mrb[0].mxu0
      %v3377 = vadd.f32 0.0, %v3376
      %v3378 = vpop.f32.mrb[0].mxu0
      %v3379 = vadd.f32 0.0, %v3378
      %v3380 = vpop.f32.mrb[0].mxu0
      %v3381 = vadd.f32 0.0, %v3380
      %3382 = vmatprep.mubr.bf16.mxu0 %v3163
      %3383 = vmatmul.mubr.bf16.gmra.mrb[0].mxu0 %v3162
      %v3384 = vpop.f32.mrb[0].mxu0
      %v3385 = vadd.f32 0.0, %v3384
      %v3386 = vpop.f32.mrb[0].mxu0
      %v3387 = vadd.f32 0.0, %v3386
      %v3388 = vpop.f32.mrb[0].mxu0
      %v3389 = vadd.f32 0.0, %v3388
      %v3390 = vpop.f32.mrb[0].mxu0
      %v3391 = vadd.f32 0.0, %v3390
      %3392 = vmatprep.mubr.bf16.mxu0 %v3167
      %3393 = vmatmul.mubr.bf16.gmra.mrb[0].mxu0 %v3166
      %v3394 = vpop.f32.mrb[0].mxu0
      %v3395 = vadd.f32 0.0, %v3394
      %v3396 = vpop.f32.mrb[0].mxu0
      %v3397 = vadd.f32 0.0, %v3396
      %v3398 = vpop.f32.mrb[0].mxu0
      %v3399 = vadd.f32 0.0, %v3398
      %v3400 = vpop.f32.mrb[0].mxu0
      %v3401 = vadd.f32 0.0, %v3400
      %3402 = vmatprep.mubr.bf16.mxu0 %v3171
      %3403 = vmatmul.mubr.bf16.gmra.mrb[0].mxu0 %v3170
      %v3404 = vpop.f32.mrb[0].mxu0
      %v3405 = vadd.f32 0.0, %v3404
      %v3406 = vpop.f32.mrb[0].mxu0
      %v3407 = vadd.f32 0.0, %v3406
      %v3408 = vpop.f32.mrb[0].mxu0
      %v3409 = vadd.f32 0.0, %v3408
      %v3410 = vpop.f32.mrb[0].mxu0
      %v3411 = vadd.f32 0.0, %v3410
      %3412 = vmatprep.mubr.bf16.mxu0 %v3175
      %3413 = vmatmul.mubr.bf16.gmra.mrb[0].mxu0 %v3174
      %v3414 = vpop.f32.mrb[0].mxu0
      %v3415 = vadd.f32 0.0, %v3414
      %v3416 = vpop.f32.mrb[0].mxu0
      %v3417 = vadd.f32 0.0, %v3416
      %v3418 = vpop.f32.mrb[0].mxu0
      %v3419 = vadd.f32 0.0, %v3418
      %v3420 = vpop.f32.mrb[0].mxu0
      %v3421 = vadd.f32 0.0, %v3420
      %3422 = vmatprep.mubr.bf16.mxu0 %v3179
      %3423 = vmatmul.mubr.bf16.gmra.mrb[0].mxu0 %v3178
      %v3424 = vpop.f32.mrb[0].mxu0
      %v3425 = vadd.f32 0.0, %v3424
      %v3426 = vpop.f32.mrb[0].mxu0
      %v3427 = vadd.f32 0.0, %v3426
      %v3428 = vpop.f32.mrb[0].mxu0
      %v3429 = vadd.f32 0.0, %v3428
      %v3430 = vpop.f32.mrb[0].mxu0
      %v3431 = vadd.f32 0.0, %v3430
      %3432 = vmatprep.mubr.bf16.mxu0 %v3183
      %3433 = vmatmul.mubr.bf16.gmra.mrb[0].mxu0 %v3182
      %v3434 = vpop.f32.mrb[0].mxu0
      %v3435 = vadd.f32 0.0, %v3434
      %v3436 = vpop.f32.mrb[0].mxu0
      %v3437 = vadd.f32 0.0, %v3436
      %v3438 = vpop.f32.mrb[0].mxu0
      %v3439 = vadd.f32 0.0, %v3438
      %v3440 = vpop.f32.mrb[0].mxu0
      %v3441 = vadd.f32 0.0, %v3440
      %3442 = vdwg.mxu0
      %3443 = vmatprep.subr.bf16.mxu0 %v2835
      %3444 = vmatpush1.bf16.msra.mxu0 %v2834
      %3445 = vmatprep.subr.bf16.mxu0 %v2837
      %3446 = vmatpush1.bf16.msra.mxu0 %v2836
      %3447 = vmatprep.subr.bf16.mxu0 %v2839
      %3448 = vmatpush1.bf16.msra.mxu0 %v2838
      %3449 = vmatprep.subr.bf16.mxu0 %v2841
      %3450 = vmatpush1.bf16.msra.mxu0 %v2840
      %3451 = vmatprep.subr.bf16.mxu0 %v2843
      %3452 = vmatpush1.bf16.msra.mxu0 %v2842
      %3453 = vmatprep.subr.bf16.mxu0 %v2845
      %3454 = vmatpush1.bf16.msra.mxu0 %v2844
      %3455 = vmatprep.subr.bf16.mxu0 %v2847
      %3456 = vmatpush1.bf16.msra.mxu0 %v2846
      %3457 = vmatprep.subr.bf16.mxu0 %v2849
      %3458 = vmatpush1.bf16.msra.mxu0 %v2848
      %3459 = vmatprep.subr.bf16.mxu0 %v2851
      %3460 = vmatpush1.bf16.msra.mxu0 %v2850
      %3461 = vmatprep.subr.bf16.mxu0 %v2853
      %3462 = vmatpush1.bf16.msra.mxu0 %v2852
      %3463 = vmatprep.subr.bf16.mxu0 %v2855
      %3464 = vmatpush1.bf16.msra.mxu0 %v2854
      %3465 = vmatprep.subr.bf16.mxu0 %v2857
      %3466 = vmatpush1.bf16.msra.mxu0 %v2856
      %3467 = vmatprep.subr.bf16.mxu0 %v2859
      %3468 = vmatpush1.bf16.msra.mxu0 %v2858
      %3469 = vmatprep.subr.bf16.mxu0 %v2861
      %3470 = vmatpush1.bf16.msra.mxu0 %v2860
      %3471 = vmatprep.subr.bf16.mxu0 %v2863
      %3472 = vmatpush1.bf16.msra.mxu0 %v2862
      %3473 = vmatprep.subr.bf16.mxu0 %v2865
      %3474 = vmatpush1.bf16.msra.mxu0 %v2864
      %3475 = vmatprep.mubr.bf16.mxu0 %v3125
      %3476 = vmatmul.mubr.bf16.gmra.mrb[0].mxu0 %v3124
      %v3477 = vpop.f32.mrb[0].mxu0
      %v3478 = vadd.f32 %v3285, %v3477
      %v3479 = vpop.f32.mrb[0].mxu0
      %v3480 = vadd.f32 %v3287, %v3479
      %v3481 = vpop.f32.mrb[0].mxu0
      %v3482 = vadd.f32 %v3289, %v3481
      %v3483 = vpop.f32.mrb[0].mxu0
      %v3484 = vadd.f32 %v3291, %v3483
      %3485 = vmatprep.mubr.bf16.mxu0 %v3129
      %3486 = vmatmul.mubr.bf16.gmra.mrb[0].mxu0 %v3128
      %v3487 = vpop.f32.mrb[0].mxu0
      %v3488 = vadd.f32 %v3295, %v3487
      %v3489 = vpop.f32.mrb[0].mxu0
      %v3490 = vadd.f32 %v3297, %v3489
      %v3491 = vpop.f32.mrb[0].mxu0
      %v3492 = vadd.f32 %v3299, %v3491
      %v3493 = vpop.f32.mrb[0].mxu0
      %v3494 = vadd.f32 %v3301, %v3493
      %3495 = vmatprep.mubr.bf16.mxu0 %v3133
      %3496 = vmatmul.mubr.bf16.gmra.mrb[0].mxu0 %v3132
      %v3497 = vpop.f32.mrb[0].mxu0
      %v3498 = vadd.f32 %v3305, %v3497
      %v3499 = vpop.f32.mrb[0].mxu0
      %v3500 = vadd.f32 %v3307, %v3499
      %v3501 = vpop.f32.mrb[0].mxu0
      %v3502 = vadd.f32 %v3309, %v3501
      %v3503 = vpop.f32.mrb[0].mxu0
      %v3504 = vadd.f32 %v3311, %v3503
      %3505 = vmatprep.mubr.bf16.mxu0 %v3137
      %3506 = vmatmul.mubr.bf16.gmra.mrb[0].mxu0 %v3136
      %v3507 = vpop.f32.mrb[0].mxu0
      %v3508 = vadd.f32 %v3315, %v3507
      %v3509 = vpop.f32.mrb[0].mxu0
      %v3510 = vadd.f32 %v3317, %v3509
      %v3511 = vpop.f32.mrb[0].mxu0
      %v3512 = vadd.f32 %v3319, %v3511
      %v3513 = vpop.f32.mrb[0].mxu0
      %v3514 = vadd.f32 %v3321, %v3513
      %3515 = vmatprep.mubr.bf16.mxu0 %v3141
      %3516 = vmatmul.mubr.bf16.gmra.mrb[0].mxu0 %v3140
      %v3517 = vpop.f32.mrb[0].mxu0
      %v3518 = vadd.f32 %v3325, %v3517
      %v3519 = vpop.f32.mrb[0].mxu0
      %v3520 = vadd.f32 %v3327, %v3519
      %v3521 = vpop.f32.mrb[0].mxu0
      %v3522 = vadd.f32 %v3329, %v3521
      %v3523 = vpop.f32.mrb[0].mxu0
      %v3524 = vadd.f32 %v3331, %v3523
      %3525 = vmatprep.mubr.bf16.mxu0 %v3145
      %3526 = vmatmul.mubr.bf16.gmra.mrb[0].mxu0 %v3144
      %v3527 = vpop.f32.mrb[0].mxu0
      %v3528 = vadd.f32 %v3335, %v3527
      %v3529 = vpop.f32.mrb[0].mxu0
      %v3530 = vadd.f32 %v3337, %v3529
      %v3531 = vpop.f32.mrb[0].mxu0
      %v3532 = vadd.f32 %v3339, %v3531
      %v3533 = vpop.f32.mrb[0].mxu0
      %v3534 = vadd.f32 %v3341, %v3533
      %3535 = vmatprep.mubr.bf16.mxu0 %v3149
      %3536 = vmatmul.mubr.bf16.gmra.mrb[0].mxu0 %v3148
      %v3537 = vpop.f32.mrb[0].mxu0
      %v3538 = vadd.f32 %v3345, %v3537
      %v3539 = vpop.f32.mrb[0].mxu0
      %v3540 = vadd.f32 %v3347, %v3539
      %v3541 = vpop.f32.mrb[0].mxu0
      %v3542 = vadd.f32 %v3349, %v3541
      %v3543 = vpop.f32.mrb[0].mxu0
      %v3544 = vadd.f32 %v3351, %v3543
      %3545 = vmatprep.mubr.bf16.mxu0 %v3153
      %3546 = vmatmul.mubr.bf16.gmra.mrb[0].mxu0 %v3152
      %v3547 = vpop.f32.mrb[0].mxu0
      %v3548 = vadd.f32 %v3355, %v3547
      %v3549 = vpop.f32.mrb[0].mxu0
      %v3550 = vadd.f32 %v3357, %v3549
      %v3551 = vpop.f32.mrb[0].mxu0
      %v3552 = vadd.f32 %v3359, %v3551
      %v3553 = vpop.f32.mrb[0].mxu0
      %v3554 = vadd.f32 %v3361, %v3553
      %3555 = vmatprep.mubr.bf16.mxu0 %v3157
      %3556 = vmatmul.mubr.bf16.gmra.mrb[0].mxu0 %v3156
      %v3557 = vpop.f32.mrb[0].mxu0
      %v3558 = vadd.f32 %v3365, %v3557
      %v3559 = vpop.f32.mrb[0].mxu0
      %v3560 = vadd.f32 %v3367, %v3559
      %v3561 = vpop.f32.mrb[0].mxu0
      %v3562 = vadd.f32 %v3369, %v3561
      %v3563 = vpop.f32.mrb[0].mxu0
      %v3564 = vadd.f32 %v3371, %v3563
      %3565 = vmatprep.mubr.bf16.mxu0 %v3161
      %3566 = vmatmul.mubr.bf16.gmra.mrb[0].mxu0 %v3160
      %v3567 = vpop.f32.mrb[0].mxu0
      %v3568 = vadd.f32 %v3375, %v3567
      %v3569 = vpop.f32.mrb[0].mxu0
      %v3570 = vadd.f32 %v3377, %v3569
      %v3571 = vpop.f32.mrb[0].mxu0
      %v3572 = vadd.f32 %v3379, %v3571
      %v3573 = vpop.f32.mrb[0].mxu0
      %v3574 = vadd.f32 %v3381, %v3573
      %3575 = vmatprep.mubr.bf16.mxu0 %v3165
      %3576 = vmatmul.mubr.bf16.gmra.mrb[0].mxu0 %v3164
      %v3577 = vpop.f32.mrb[0].mxu0
      %v3578 = vadd.f32 %v3385, %v3577
      %v3579 = vpop.f32.mrb[0].mxu0
      %v3580 = vadd.f32 %v3387, %v3579
      %v3581 = vpop.f32.mrb[0].mxu0
      %v3582 = vadd.f32 %v3389, %v3581
      %v3583 = vpop.f32.mrb[0].mxu0
      %v3584 = vadd.f32 %v3391, %v3583
      %3585 = vmatprep.mubr.bf16.mxu0 %v3169
      %3586 = vmatmul.mubr.bf16.gmra.mrb[0].mxu0 %v3168
      %v3587 = vpop.f32.mrb[0].mxu0
      %v3588 = vadd.f32 %v3395, %v3587
      %v3589 = vpop.f32.mrb[0].mxu0
      %v3590 = vadd.f32 %v3397, %v3589
      %v3591 = vpop.f32.mrb[0].mxu0
      %v3592 = vadd.f32 %v3399, %v3591
      %v3593 = vpop.f32.mrb[0].mxu0
      %v3594 = vadd.f32 %v3401, %v3593
      %3595 = vmatprep.mubr.bf16.mxu0 %v3173
      %3596 = vmatmul.mubr.bf16.gmra.mrb[0].mxu0 %v3172
      %v3597 = vpop.f32.mrb[0].mxu0
      %v3598 = vadd.f32 %v3405, %v3597
      %v3599 = vpop.f32.mrb[0].mxu0
      %v3600 = vadd.f32 %v3407, %v3599
      %v3601 = vpop.f32.mrb[0].mxu0
      %v3602 = vadd.f32 %v3409, %v3601
      %v3603 = vpop.f32.mrb[0].mxu0
      %v3604 = vadd.f32 %v3411, %v3603
      %3605 = vmatprep.mubr.bf16.mxu0 %v3177
      %3606 = vmatmul.mubr.bf16.gmra.mrb[0].mxu0 %v3176
      %v3607 = vpop.f32.mrb[0].mxu0
      %v3608 = vadd.f32 %v3415, %v3607
      %v3609 = vpop.f32.mrb[0].mxu0
      %v3610 = vadd.f32 %v3417, %v3609
      %v3611 = vpop.f32.mrb[0].mxu0
      %v3612 = vadd.f32 %v3419, %v3611
      %v3613 = vpop.f32.mrb[0].mxu0
      %v3614 = vadd.f32 %v3421, %v3613
      %3615 = vmatprep.mubr.bf16.mxu0 %v3181
      %3616 = vmatmul.mubr.bf16.gmra.mrb[0].mxu0 %v3180
      %v3617 = vpop.f32.mrb[0].mxu0
      %v3618 = vadd.f32 %v3425, %v3617
      %v3619 = vpop.f32.mrb[0].mxu0
      %v3620 = vadd.f32 %v3427, %v3619
      %v3621 = vpop.f32.mrb[0].mxu0
      %v3622 = vadd.f32 %v3429, %v3621
      %v3623 = vpop.f32.mrb[0].mxu0
      %v3624 = vadd.f32 %v3431, %v3623
      %3625 = vmatprep.mubr.bf16.mxu0 %v3185
      %3626 = vmatmul.mubr.bf16.gmra.mrb[0].mxu0 %v3184
      %v3627 = vpop.f32.mrb[0].mxu0
      %v3628 = vadd.f32 %v3435, %v3627
      %v3629 = vpop.f32.mrb[0].mxu0
      %v3630 = vadd.f32 %v3437, %v3629
      %v3631 = vpop.f32.mrb[0].mxu0
      %v3632 = vadd.f32 %v3439, %v3631
      %v3633 = vpop.f32.mrb[0].mxu0
      %v3634 = vadd.f32 %v3441, %v3633
      %3635 = vdwg.mxu0
      %v3636 = vsel %vm432, %v3480, 0.0
      %v3637 = vadd.f32 %v3478, %v3636
      %3638 = vadd.xlane.f32.xlu0 %v3637
      %v3639 = vpop.xlane.xlu0 %3638
      %v3640 = vsel %vm432, %v3484, 0.0
      %v3641 = vadd.f32 %v3482, %v3640
      %3642 = vadd.xlane.f32.xlu0 %v3641
      %v3643 = vpop.xlane.xlu0 %3642
      %v3644 = vsel %vm432, %v3490, 0.0
      %v3645 = vadd.f32 %v3488, %v3644
      %3646 = vadd.xlane.f32.xlu0 %v3645
      %v3647 = vpop.xlane.xlu0 %3646
      %v3648 = vsel %vm432, %v3494, 0.0
      %v3649 = vadd.f32 %v3492, %v3648
      %3650 = vadd.xlane.f32.xlu0 %v3649
      %v3651 = vpop.xlane.xlu0 %3650
      %v3652 = vsel %vm432, %v3500, 0.0
      %v3653 = vadd.f32 %v3498, %v3652
      %3654 = vadd.xlane.f32.xlu0 %v3653
      %v3655 = vpop.xlane.xlu0 %3654
      %v3656 = vsel %vm432, %v3504, 0.0
      %v3657 = vadd.f32 %v3502, %v3656
      %3658 = vadd.xlane.f32.xlu0 %v3657
      %v3659 = vpop.xlane.xlu0 %3658
      %v3660 = vsel %vm432, %v3510, 0.0
      %v3661 = vadd.f32 %v3508, %v3660
      %3662 = vadd.xlane.f32.xlu0 %v3661
      %v3663 = vpop.xlane.xlu0 %3662
      %v3664 = vsel %vm432, %v3514, 0.0
      %v3665 = vadd.f32 %v3512, %v3664
      %3666 = vadd.xlane.f32.xlu0 %v3665
      %v3667 = vpop.xlane.xlu0 %3666
      %v3668 = vsel %vm432, %v3520, 0.0
      %v3669 = vadd.f32 %v3518, %v3668
      %3670 = vadd.xlane.f32.xlu0 %v3669
      %v3671 = vpop.xlane.xlu0 %3670
      %v3672 = vsel %vm432, %v3524, 0.0
      %v3673 = vadd.f32 %v3522, %v3672
      %3674 = vadd.xlane.f32.xlu0 %v3673
      %v3675 = vpop.xlane.xlu0 %3674
      %v3676 = vsel %vm432, %v3530, 0.0
      %v3677 = vadd.f32 %v3528, %v3676
      %3678 = vadd.xlane.f32.xlu0 %v3677
      %v3679 = vpop.xlane.xlu0 %3678
      %v3680 = vsel %vm432, %v3534, 0.0
      %v3681 = vadd.f32 %v3532, %v3680
      %3682 = vadd.xlane.f32.xlu0 %v3681
      %v3683 = vpop.xlane.xlu0 %3682
      %v3684 = vsel %vm432, %v3540, 0.0
      %v3685 = vadd.f32 %v3538, %v3684
      %3686 = vadd.xlane.f32.xlu0 %v3685
      %v3687 = vpop.xlane.xlu0 %3686
      %v3688 = vsel %vm432, %v3544, 0.0
      %v3689 = vadd.f32 %v3542, %v3688
      %3690 = vadd.xlane.f32.xlu0 %v3689
      %v3691 = vpop.xlane.xlu0 %3690
      %v3692 = vsel %vm432, %v3550, 0.0
      %v3693 = vadd.f32 %v3548, %v3692
      %3694 = vadd.xlane.f32.xlu0 %v3693
      %v3695 = vpop.xlane.xlu0 %3694
      %v3696 = vsel %vm432, %v3554, 0.0
      %v3697 = vadd.f32 %v3552, %v3696
      %3698 = vadd.xlane.f32.xlu0 %v3697
      %v3699 = vpop.xlane.xlu0 %3698
      %v3700 = vsel %vm432, %v3560, 0.0
      %v3701 = vadd.f32 %v3558, %v3700
      %3702 = vadd.xlane.f32.xlu0 %v3701
      %v3703 = vpop.xlane.xlu0 %3702
      %v3704 = vsel %vm432, %v3564, 0.0
      %v3705 = vadd.f32 %v3562, %v3704
      %3706 = vadd.xlane.f32.xlu0 %v3705
      %v3707 = vpop.xlane.xlu0 %3706
      %v3708 = vsel %vm432, %v3570, 0.0
      %v3709 = vadd.f32 %v3568, %v3708
      %3710 = vadd.xlane.f32.xlu0 %v3709
      %v3711 = vpop.xlane.xlu0 %3710
      %v3712 = vsel %vm432, %v3574, 0.0
      %v3713 = vadd.f32 %v3572, %v3712
      %3714 = vadd.xlane.f32.xlu0 %v3713
      %v3715 = vpop.xlane.xlu0 %3714
      %v3716 = vsel %vm432, %v3580, 0.0
      %v3717 = vadd.f32 %v3578, %v3716
      %3718 = vadd.xlane.f32.xlu0 %v3717
      %v3719 = vpop.xlane.xlu0 %3718
      %v3720 = vsel %vm432, %v3584, 0.0
      %v3721 = vadd.f32 %v3582, %v3720
      %3722 = vadd.xlane.f32.xlu0 %v3721
      %v3723 = vpop.xlane.xlu0 %3722
      %v3724 = vsel %vm432, %v3590, 0.0
      %v3725 = vadd.f32 %v3588, %v3724
      %3726 = vadd.xlane.f32.xlu0 %v3725
      %v3727 = vpop.xlane.xlu0 %3726
      %v3728 = vsel %vm432, %v3594, 0.0
      %v3729 = vadd.f32 %v3592, %v3728
      %3730 = vadd.xlane.f32.xlu0 %v3729
      %v3731 = vpop.xlane.xlu0 %3730
      %v3732 = vsel %vm432, %v3600, 0.0
      %v3733 = vadd.f32 %v3598, %v3732
      %3734 = vadd.xlane.f32.xlu0 %v3733
      %v3735 = vpop.xlane.xlu0 %3734
      %v3736 = vsel %vm432, %v3604, 0.0
      %v3737 = vadd.f32 %v3602, %v3736
      %3738 = vadd.xlane.f32.xlu0 %v3737
      %v3739 = vpop.xlane.xlu0 %3738
      %v3740 = vsel %vm432, %v3610, 0.0
      %v3741 = vadd.f32 %v3608, %v3740
      %3742 = vadd.xlane.f32.xlu0 %v3741
      %v3743 = vpop.xlane.xlu0 %3742
      %v3744 = vsel %vm432, %v3614, 0.0
      %v3745 = vadd.f32 %v3612, %v3744
      %3746 = vadd.xlane.f32.xlu0 %v3745
      %v3747 = vpop.xlane.xlu0 %3746
      %v3748 = vsel %vm432, %v3620, 0.0
      %v3749 = vadd.f32 %v3618, %v3748
      %3750 = vadd.xlane.f32.xlu0 %v3749
      %v3751 = vpop.xlane.xlu0 %3750
      %v3752 = vsel %vm432, %v3624, 0.0
      %v3753 = vadd.f32 %v3622, %v3752
      %3754 = vadd.xlane.f32.xlu0 %v3753
      %v3755 = vpop.xlane.xlu0 %3754
      %v3756 = vsel %vm432, %v3630, 0.0
      %v3757 = vadd.f32 %v3628, %v3756
      %3758 = vadd.xlane.f32.xlu0 %v3757
      %v3759 = vpop.xlane.xlu0 %3758
      %v3760 = vsel %vm432, %v3634, 0.0
      %v3761 = vadd.f32 %v3632, %v3760
      %3762 = vadd.xlane.f32.xlu0 %v3761
      %v3763 = vpop.xlane.xlu0 %3762
      %v3764 = vmul.f32 %v3639, %v689
      %v3765 = vmul.f32 %v3643, %v689
      %v3766 = vmul.f32 %v3647, %v689
      %v3767 = vmul.f32 %v3651, %v689
      %v3768 = vmul.f32 %v3655, %v689
      %v3769 = vmul.f32 %v3659, %v689
      %v3770 = vmul.f32 %v3663, %v689
      %v3771 = vmul.f32 %v3667, %v689
      %v3772 = vmul.f32 %v3671, %v689
      %v3773 = vmul.f32 %v3675, %v689
      %v3774 = vmul.f32 %v3679, %v689
      %v3775 = vmul.f32 %v3683, %v689
      %v3776 = vmul.f32 %v3687, %v689
      %v3777 = vmul.f32 %v3691, %v689
      %v3778 = vmul.f32 %v3695, %v689
      %v3779 = vmul.f32 %v3699, %v689
      %v3780 = vmul.f32 %v3703, %v689
      %v3781 = vmul.f32 %v3707, %v689
      %v3782 = vmul.f32 %v3711, %v689
      %v3783 = vmul.f32 %v3715, %v689
      %v3784 = vmul.f32 %v3719, %v689
      %v3785 = vmul.f32 %v3723, %v689
      %v3786 = vmul.f32 %v3727, %v689
      %v3787 = vmul.f32 %v3731, %v689
      %v3788 = vmul.f32 %v3735, %v689
      %v3789 = vmul.f32 %v3739, %v689
      %v3790 = vmul.f32 %v3743, %v689
      %v3791 = vmul.f32 %v3747, %v689
      %v3792 = vmul.f32 %v3751, %v689
      %v3793 = vmul.f32 %v3755, %v689
      %v3794 = vmul.f32 %v3759, %v689
      %v3795 = vmul.f32 %v3763, %v689
      %v3796 = vsub.f32 %v3478, %v3764
      %v3797 = vsub.f32 %v3480, %v3764
      %v3798 = vsub.f32 %v3482, %v3765
      %v3799 = vsub.f32 %v3484, %v3765
      %v3800 = vsub.f32 %v3488, %v3766
      %v3801 = vsub.f32 %v3490, %v3766
      %v3802 = vsub.f32 %v3492, %v3767
      %v3803 = vsub.f32 %v3494, %v3767
      %v3804 = vsub.f32 %v3498, %v3768
      %v3805 = vsub.f32 %v3500, %v3768
      %v3806 = vsub.f32 %v3502, %v3769
      %v3807 = vsub.f32 %v3504, %v3769
      %v3808 = vsub.f32 %v3508, %v3770
      %v3809 = vsub.f32 %v3510, %v3770
      %v3810 = vsub.f32 %v3512, %v3771
      %v3811 = vsub.f32 %v3514, %v3771
      %v3812 = vsub.f32 %v3518, %v3772
      %v3813 = vsub.f32 %v3520, %v3772
      %v3814 = vsub.f32 %v3522, %v3773
      %v3815 = vsub.f32 %v3524, %v3773
      %v3816 = vsub.f32 %v3528, %v3774
      %v3817 = vsub.f32 %v3530, %v3774
      %v3818 = vsub.f32 %v3532, %v3775
      %v3819 = vsub.f32 %v3534, %v3775
      %v3820 = vsub.f32 %v3538, %v3776
      %v3821 = vsub.f32 %v3540, %v3776
      %v3822 = vsub.f32 %v3542, %v3777
      %v3823 = vsub.f32 %v3544, %v3777
      %v3824 = vsub.f32 %v3548, %v3778
      %v3825 = vsub.f32 %v3550, %v3778
      %v3826 = vsub.f32 %v3552, %v3779
      %v3827 = vsub.f32 %v3554, %v3779
      %v3828 = vsub.f32 %v3558, %v3780
      %v3829 = vsub.f32 %v3560, %v3780
      %v3830 = vsub.f32 %v3562, %v3781
      %v3831 = vsub.f32 %v3564, %v3781
      %v3832 = vsub.f32 %v3568, %v3782
      %v3833 = vsub.f32 %v3570, %v3782
      %v3834 = vsub.f32 %v3572, %v3783
      %v3835 = vsub.f32 %v3574, %v3783
      %v3836 = vsub.f32 %v3578, %v3784
      %v3837 = vsub.f32 %v3580, %v3784
      %v3838 = vsub.f32 %v3582, %v3785
      %v3839 = vsub.f32 %v3584, %v3785
      %v3840 = vsub.f32 %v3588, %v3786
      %v3841 = vsub.f32 %v3590, %v3786
      %v3842 = vsub.f32 %v3592, %v3787
      %v3843 = vsub.f32 %v3594, %v3787
      %v3844 = vsub.f32 %v3598, %v3788
      %v3845 = vsub.f32 %v3600, %v3788
      %v3846 = vsub.f32 %v3602, %v3789
      %v3847 = vsub.f32 %v3604, %v3789
      %v3848 = vsub.f32 %v3608, %v3790
      %v3849 = vsub.f32 %v3610, %v3790
      %v3850 = vsub.f32 %v3612, %v3791
      %v3851 = vsub.f32 %v3614, %v3791
      %v3852 = vsub.f32 %v3618, %v3792
      %v3853 = vsub.f32 %v3620, %v3792
      %v3854 = vsub.f32 %v3622, %v3793
      %v3855 = vsub.f32 %v3624, %v3793
      %v3856 = vsub.f32 %v3628, %v3794
      %v3857 = vsub.f32 %v3630, %v3794
      %v3858 = vsub.f32 %v3632, %v3795
      %v3859 = vsub.f32 %v3634, %v3795
      %v3860 = vmul.f32 %v3796, %v3796
      %v3861 = vmul.f32 %v3797, %v3797
      %v3862 = vmul.f32 %v3798, %v3798
      %v3863 = vmul.f32 %v3799, %v3799
      %v3864 = vmul.f32 %v3800, %v3800
      %v3865 = vmul.f32 %v3801, %v3801
      %v3866 = vmul.f32 %v3802, %v3802
      %v3867 = vmul.f32 %v3803, %v3803
      %v3868 = vmul.f32 %v3804, %v3804
      %v3869 = vmul.f32 %v3805, %v3805
      %v3870 = vmul.f32 %v3806, %v3806
      %v3871 = vmul.f32 %v3807, %v3807
      %v3872 = vmul.f32 %v3808, %v3808
      %v3873 = vmul.f32 %v3809, %v3809
      %v3874 = vmul.f32 %v3810, %v3810
      %v3875 = vmul.f32 %v3811, %v3811
      %v3876 = vmul.f32 %v3812, %v3812
      %v3877 = vmul.f32 %v3813, %v3813
      %v3878 = vmul.f32 %v3814, %v3814
      %v3879 = vmul.f32 %v3815, %v3815
      %v3880 = vmul.f32 %v3816, %v3816
      %v3881 = vmul.f32 %v3817, %v3817
      %v3882 = vmul.f32 %v3818, %v3818
      %v3883 = vmul.f32 %v3819, %v3819
      %v3884 = vmul.f32 %v3820, %v3820
      %v3885 = vmul.f32 %v3821, %v3821
      %v3886 = vmul.f32 %v3822, %v3822
      %v3887 = vmul.f32 %v3823, %v3823
      %v3888 = vmul.f32 %v3824, %v3824
      %v3889 = vmul.f32 %v3825, %v3825
      %v3890 = vmul.f32 %v3826, %v3826
      %v3891 = vmul.f32 %v3827, %v3827
      %v3892 = vmul.f32 %v3828, %v3828
      %v3893 = vmul.f32 %v3829, %v3829
      %v3894 = vmul.f32 %v3830, %v3830
      %v3895 = vmul.f32 %v3831, %v3831
      %v3896 = vmul.f32 %v3832, %v3832
      %v3897 = vmul.f32 %v3833, %v3833
      %v3898 = vmul.f32 %v3834, %v3834
      %v3899 = vmul.f32 %v3835, %v3835
      %v3900 = vmul.f32 %v3836, %v3836
      %v3901 = vmul.f32 %v3837, %v3837
      %v3902 = vmul.f32 %v3838, %v3838
      %v3903 = vmul.f32 %v3839, %v3839
      %v3904 = vmul.f32 %v3840, %v3840
      %v3905 = vmul.f32 %v3841, %v3841
      %v3906 = vmul.f32 %v3842, %v3842
      %v3907 = vmul.f32 %v3843, %v3843
      %v3908 = vmul.f32 %v3844, %v3844
      %v3909 = vmul.f32 %v3845, %v3845
      %v3910 = vmul.f32 %v3846, %v3846
      %v3911 = vmul.f32 %v3847, %v3847
      %v3912 = vmul.f32 %v3848, %v3848
      %v3913 = vmul.f32 %v3849, %v3849
      %v3914 = vmul.f32 %v3850, %v3850
      %v3915 = vmul.f32 %v3851, %v3851
      %v3916 = vmul.f32 %v3852, %v3852
      %v3917 = vmul.f32 %v3853, %v3853
      %v3918 = vmul.f32 %v3854, %v3854
      %v3919 = vmul.f32 %v3855, %v3855
      %v3920 = vmul.f32 %v3856, %v3856
      %v3921 = vmul.f32 %v3857, %v3857
      %v3922 = vmul.f32 %v3858, %v3858
      %v3923 = vmul.f32 %v3859, %v3859
      %v3924 = vsel %vm432, %v3861, 0.0
      %v3925 = vadd.f32 %v3860, %v3924
      %3926 = vadd.xlane.f32.xlu0 %v3925
      %v3927 = vpop.xlane.xlu0 %3926
      %v3928 = vsel %vm432, %v3863, 0.0
      %v3929 = vadd.f32 %v3862, %v3928
      %3930 = vadd.xlane.f32.xlu0 %v3929
      %v3931 = vpop.xlane.xlu0 %3930
      %v3932 = vsel %vm432, %v3865, 0.0
      %v3933 = vadd.f32 %v3864, %v3932
      %3934 = vadd.xlane.f32.xlu0 %v3933
      %v3935 = vpop.xlane.xlu0 %3934
      %v3936 = vsel %vm432, %v3867, 0.0
      %v3937 = vadd.f32 %v3866, %v3936
      %3938 = vadd.xlane.f32.xlu0 %v3937
      %v3939 = vpop.xlane.xlu0 %3938
      %v3940 = vsel %vm432, %v3869, 0.0
      %v3941 = vadd.f32 %v3868, %v3940
      %3942 = vadd.xlane.f32.xlu0 %v3941
      %v3943 = vpop.xlane.xlu0 %3942
      %v3944 = vsel %vm432, %v3871, 0.0
      %v3945 = vadd.f32 %v3870, %v3944
      %3946 = vadd.xlane.f32.xlu0 %v3945
      %v3947 = vpop.xlane.xlu0 %3946
      %v3948 = vsel %vm432, %v3873, 0.0
      %v3949 = vadd.f32 %v3872, %v3948
      %3950 = vadd.xlane.f32.xlu0 %v3949
      %v3951 = vpop.xlane.xlu0 %3950
      %v3952 = vsel %vm432, %v3875, 0.0
      %v3953 = vadd.f32 %v3874, %v3952
      %3954 = vadd.xlane.f32.xlu0 %v3953
      %v3955 = vpop.xlane.xlu0 %3954
      %v3956 = vsel %vm432, %v3877, 0.0
      %v3957 = vadd.f32 %v3876, %v3956
      %3958 = vadd.xlane.f32.xlu0 %v3957
      %v3959 = vpop.xlane.xlu0 %3958
      %v3960 = vsel %vm432, %v3879, 0.0
      %v3961 = vadd.f32 %v3878, %v3960
      %3962 = vadd.xlane.f32.xlu0 %v3961
      %v3963 = vpop.xlane.xlu0 %3962
      %v3964 = vsel %vm432, %v3881, 0.0
      %v3965 = vadd.f32 %v3880, %v3964
      %3966 = vadd.xlane.f32.xlu0 %v3965
      %v3967 = vpop.xlane.xlu0 %3966
      %v3968 = vsel %vm432, %v3883, 0.0
      %v3969 = vadd.f32 %v3882, %v3968
      %3970 = vadd.xlane.f32.xlu0 %v3969
      %v3971 = vpop.xlane.xlu0 %3970
      %v3972 = vsel %vm432, %v3885, 0.0
      %v3973 = vadd.f32 %v3884, %v3972
      %3974 = vadd.xlane.f32.xlu0 %v3973
      %v3975 = vpop.xlane.xlu0 %3974
      %v3976 = vsel %vm432, %v3887, 0.0
      %v3977 = vadd.f32 %v3886, %v3976
      %3978 = vadd.xlane.f32.xlu0 %v3977
      %v3979 = vpop.xlane.xlu0 %3978
      %v3980 = vsel %vm432, %v3889, 0.0
      %v3981 = vadd.f32 %v3888, %v3980
      %3982 = vadd.xlane.f32.xlu0 %v3981
      %v3983 = vpop.xlane.xlu0 %3982
      %v3984 = vsel %vm432, %v3891, 0.0
      %v3985 = vadd.f32 %v3890, %v3984
      %3986 = vadd.xlane.f32.xlu0 %v3985
      %v3987 = vpop.xlane.xlu0 %3986
      %v3988 = vsel %vm432, %v3893, 0.0
      %v3989 = vadd.f32 %v3892, %v3988
      %3990 = vadd.xlane.f32.xlu0 %v3989
      %v3991 = vpop.xlane.xlu0 %3990
      %v3992 = vsel %vm432, %v3895, 0.0
      %v3993 = vadd.f32 %v3894, %v3992
      %3994 = vadd.xlane.f32.xlu0 %v3993
      %v3995 = vpop.xlane.xlu0 %3994
      %v3996 = vsel %vm432, %v3897, 0.0
      %v3997 = vadd.f32 %v3896, %v3996
      %3998 = vadd.xlane.f32.xlu0 %v3997
      %v3999 = vpop.xlane.xlu0 %3998
      %v4000 = vsel %vm432, %v3899, 0.0
      %v4001 = vadd.f32 %v3898, %v4000
      %4002 = vadd.xlane.f32.xlu0 %v4001
      %v4003 = vpop.xlane.xlu0 %4002
      %v4004 = vsel %vm432, %v3901, 0.0
      %v4005 = vadd.f32 %v3900, %v4004
      %4006 = vadd.xlane.f32.xlu0 %v4005
      %v4007 = vpop.xlane.xlu0 %4006
      %v4008 = vsel %vm432, %v3903, 0.0
      %v4009 = vadd.f32 %v3902, %v4008
      %4010 = vadd.xlane.f32.xlu0 %v4009
      %v4011 = vpop.xlane.xlu0 %4010
      %v4012 = vsel %vm432, %v3905, 0.0
      %v4013 = vadd.f32 %v3904, %v4012
      %4014 = vadd.xlane.f32.xlu0 %v4013
      %v4015 = vpop.xlane.xlu0 %4014
      %v4016 = vsel %vm432, %v3907, 0.0
      %v4017 = vadd.f32 %v3906, %v4016
      %4018 = vadd.xlane.f32.xlu0 %v4017
      %v4019 = vpop.xlane.xlu0 %4018
      %v4020 = vsel %vm432, %v3909, 0.0
      %v4021 = vadd.f32 %v3908, %v4020
      %4022 = vadd.xlane.f32.xlu0 %v4021
      %v4023 = vpop.xlane.xlu0 %4022
      %v4024 = vsel %vm432, %v3911, 0.0
      %v4025 = vadd.f32 %v3910, %v4024
      %4026 = vadd.xlane.f32.xlu0 %v4025
      %v4027 = vpop.xlane.xlu0 %4026
      %v4028 = vsel %vm432, %v3913, 0.0
      %v4029 = vadd.f32 %v3912, %v4028
      %4030 = vadd.xlane.f32.xlu0 %v4029
      %v4031 = vpop.xlane.xlu0 %4030
      %v4032 = vsel %vm432, %v3915, 0.0
      %v4033 = vadd.f32 %v3914, %v4032
      %4034 = vadd.xlane.f32.xlu0 %v4033
      %v4035 = vpop.xlane.xlu0 %4034
      %v4036 = vsel %vm432, %v3917, 0.0
      %v4037 = vadd.f32 %v3916, %v4036
      %4038 = vadd.xlane.f32.xlu0 %v4037
      %v4039 = vpop.xlane.xlu0 %4038
      %v4040 = vsel %vm432, %v3919, 0.0
      %v4041 = vadd.f32 %v3918, %v4040
      %4042 = vadd.xlane.f32.xlu0 %v4041
      %v4043 = vpop.xlane.xlu0 %4042
      %v4044 = vsel %vm432, %v3921, 0.0
      %v4045 = vadd.f32 %v3920, %v4044
      %4046 = vadd.xlane.f32.xlu0 %v4045
      %v4047 = vpop.xlane.xlu0 %4046
      %v4048 = vsel %vm432, %v3923, 0.0
      %v4049 = vadd.f32 %v3922, %v4048
      %4050 = vadd.xlane.f32.xlu0 %v4049
      %v4051 = vpop.xlane.xlu0 %4050
      %v4052 = vmul.f32 %v3927, %v689
      %v4053 = vmul.f32 %v3931, %v689
      %v4054 = vmul.f32 %v3935, %v689
      %v4055 = vmul.f32 %v3939, %v689
      %v4056 = vmul.f32 %v3943, %v689
      %v4057 = vmul.f32 %v3947, %v689
      %v4058 = vmul.f32 %v3951, %v689
      %v4059 = vmul.f32 %v3955, %v689
      %v4060 = vmul.f32 %v3959, %v689
      %v4061 = vmul.f32 %v3963, %v689
      %v4062 = vmul.f32 %v3967, %v689
      %v4063 = vmul.f32 %v3971, %v689
      %v4064 = vmul.f32 %v3975, %v689
      %v4065 = vmul.f32 %v3979, %v689
      %v4066 = vmul.f32 %v3983, %v689
      %v4067 = vmul.f32 %v3987, %v689
      %v4068 = vmul.f32 %v3991, %v689
      %v4069 = vmul.f32 %v3995, %v689
      %v4070 = vmul.f32 %v3999, %v689
      %v4071 = vmul.f32 %v4003, %v689
      %v4072 = vmul.f32 %v4007, %v689
      %v4073 = vmul.f32 %v4011, %v689
      %v4074 = vmul.f32 %v4015, %v689
      %v4075 = vmul.f32 %v4019, %v689
      %v4076 = vmul.f32 %v4023, %v689
      %v4077 = vmul.f32 %v4027, %v689
      %v4078 = vmul.f32 %v4031, %v689
      %v4079 = vmul.f32 %v4035, %v689
      %v4080 = vmul.f32 %v4039, %v689
      %v4081 = vmul.f32 %v4043, %v689
      %v4082 = vmul.f32 %v4047, %v689
      %v4083 = vmul.f32 %v4051, %v689
      %v4084 = vld [vmem:[%s289] sm:$0xff]
      %v4085 = vld [vmem:[%s289 + $0x8] sm:$0xff]
      %v4086 = vld [vmem:[%s289 + $0x10] sm:$0xff]
      %v4087 = vld [vmem:[%s289 + $0x18] sm:$0xff]
      %v4088 = vld [vmem:[%s289 + $0x20] sm:$0xff]
      %v4089 = vld [vmem:[%s289 + $0x28] sm:$0xff]
      %v4090 = vld [vmem:[%s289 + $0x30] sm:$0xff]
      %v4091 = vld [vmem:[%s289 + $0x38] sm:$0xff]
      %v4092 = vld [vmem:[%s289 + $0x40] sm:$0xff]
      %v4093 = vld [vmem:[%s289 + $0x48] sm:$0xff]
      %v4094 = vld [vmem:[%s289 + $0x50] sm:$0xff]
      %v4095 = vld [vmem:[%s289 + $0x58] sm:$0xff]
      %v4096 = vld [vmem:[%s289 + $0x60] sm:$0xff]
      %v4097 = vld [vmem:[%s289 + $0x68] sm:$0xff]
      %v4098 = vld [vmem:[%s289 + $0x70] sm:$0xff]
      %v4099 = vld [vmem:[%s289 + $0x78] sm:$0xff]
      %v4100 = vld [vmem:[%s289 + $0x80] sm:$0xff]
      %v4101 = vld [vmem:[%s289 + $0x88] sm:$0xff]
      %v4102 = vld [vmem:[%s289 + $0x90] sm:$0xff]
      %v4103 = vld [vmem:[%s289 + $0x98] sm:$0xff]
      %v4104 = vld [vmem:[%s289 + $0xa0] sm:$0xff]
      %v4105 = vld [vmem:[%s289 + $0xa8] sm:$0xff]
      %v4106 = vld [vmem:[%s289 + $0xb0] sm:$0xff]
      %v4107 = vld [vmem:[%s289 + $0xb8] sm:$0xff]
      %v4108 = vld [vmem:[%s289 + $0xc0] sm:$0xff]
      %v4109 = vld [vmem:[%s289 + $0xc8] sm:$0xff]
      %v4110 = vld [vmem:[%s289 + $0xd0] sm:$0xff]
      %v4111 = vld [vmem:[%s289 + $0xd8] sm:$0xff]
      %v4112 = vld [vmem:[%s289 + $0xe0] sm:$0xff]
      %v4113 = vld [vmem:[%s289 + $0xe8] sm:$0xff]
      %v4114 = vld [vmem:[%s289 + $0xf0] sm:$0xff]
      %v4115 = vld [vmem:[%s289 + $0xf8] sm:$0xff]
      %v4116 = vadd.f32 %v4052, 1e-05
      %v4117 = vadd.f32 %v4053, 1e-05
      %v4118 = vadd.f32 %v4054, 1e-05
      %v4119 = vadd.f32 %v4055, 1e-05
      %v4120 = vadd.f32 %v4056, 1e-05
      %v4121 = vadd.f32 %v4057, 1e-05
      %v4122 = vadd.f32 %v4058, 1e-05
      %v4123 = vadd.f32 %v4059, 1e-05
      %v4124 = vadd.f32 %v4060, 1e-05
      %v4125 = vadd.f32 %v4061, 1e-05
      %v4126 = vadd.f32 %v4062, 1e-05
      %v4127 = vadd.f32 %v4063, 1e-05
      %v4128 = vadd.f32 %v4064, 1e-05
      %v4129 = vadd.f32 %v4065, 1e-05
      %v4130 = vadd.f32 %v4066, 1e-05
      %v4131 = vadd.f32 %v4067, 1e-05
      %v4132 = vadd.f32 %v4068, 1e-05
      %v4133 = vadd.f32 %v4069, 1e-05
      %v4134 = vadd.f32 %v4070, 1e-05
      %v4135 = vadd.f32 %v4071, 1e-05
      %v4136 = vadd.f32 %v4072, 1e-05
      %v4137 = vadd.f32 %v4073, 1e-05
      %v4138 = vadd.f32 %v4074, 1e-05
      %v4139 = vadd.f32 %v4075, 1e-05
      %v4140 = vadd.f32 %v4076, 1e-05
      %v4141 = vadd.f32 %v4077, 1e-05
      %v4142 = vadd.f32 %v4078, 1e-05
      %v4143 = vadd.f32 %v4079, 1e-05
      %v4144 = vadd.f32 %v4080, 1e-05
      %v4145 = vadd.f32 %v4081, 1e-05
      %v4146 = vadd.f32 %v4082, 1e-05
      %v4147 = vadd.f32 %v4083, 1e-05
      %v4148 = vrsqrt.pop %v4116
      %v4149 = vrsqrt.pop %v4117
      %v4150 = vrsqrt.pop %v4118
      %v4151 = vrsqrt.pop %v4119
      %v4152 = vrsqrt.pop %v4120
      %v4153 = vrsqrt.pop %v4121
      %v4154 = vrsqrt.pop %v4122
      %v4155 = vrsqrt.pop %v4123
      %v4156 = vrsqrt.pop %v4124
      %v4157 = vrsqrt.pop %v4125
      %v4158 = vrsqrt.pop %v4126
      %v4159 = vrsqrt.pop %v4127
      %v4160 = vrsqrt.pop %v4128
      %v4161 = vrsqrt.pop %v4129
      %v4162 = vrsqrt.pop %v4130
      %v4163 = vrsqrt.pop %v4131
      %v4164 = vrsqrt.pop %v4132
      %v4165 = vrsqrt.pop %v4133
      %v4166 = vrsqrt.pop %v4134
      %v4167 = vrsqrt.pop %v4135
      %v4168 = vrsqrt.pop %v4136
      %v4169 = vrsqrt.pop %v4137
      %v4170 = vrsqrt.pop %v4138
      %v4171 = vrsqrt.pop %v4139
      %v4172 = vrsqrt.pop %v4140
      %v4173 = vrsqrt.pop %v4141
      %v4174 = vrsqrt.pop %v4142
      %v4175 = vrsqrt.pop %v4143
      %v4176 = vrsqrt.pop %v4144
      %v4177 = vrsqrt.pop %v4145
      %v4178 = vrsqrt.pop %v4146
      %v4179 = vrsqrt.pop %v4147
      %v4180 = vmul.f32 %v4084, %v4148
      %v4181 = vmul.f32 %v4085, %v4149
      %v4182 = vmul.f32 %v4086, %v4150
      %v4183 = vmul.f32 %v4087, %v4151
      %v4184 = vmul.f32 %v4088, %v4152
      %v4185 = vmul.f32 %v4089, %v4153
      %v4186 = vmul.f32 %v4090, %v4154
      %v4187 = vmul.f32 %v4091, %v4155
      %v4188 = vmul.f32 %v4092, %v4156
      %v4189 = vmul.f32 %v4093, %v4157
      %v4190 = vmul.f32 %v4094, %v4158
      %v4191 = vmul.f32 %v4095, %v4159
      %v4192 = vmul.f32 %v4096, %v4160
      %v4193 = vmul.f32 %v4097, %v4161
      %v4194 = vmul.f32 %v4098, %v4162
      %v4195 = vmul.f32 %v4099, %v4163
      %v4196 = vmul.f32 %v4100, %v4164
      %v4197 = vmul.f32 %v4101, %v4165
      %v4198 = vmul.f32 %v4102, %v4166
      %v4199 = vmul.f32 %v4103, %v4167
      %v4200 = vmul.f32 %v4104, %v4168
      %v4201 = vmul.f32 %v4105, %v4169
      %v4202 = vmul.f32 %v4106, %v4170
      %v4203 = vmul.f32 %v4107, %v4171
      %v4204 = vmul.f32 %v4108, %v4172
      %v4205 = vmul.f32 %v4109, %v4173
      %v4206 = vmul.f32 %v4110, %v4174
      %v4207 = vmul.f32 %v4111, %v4175
      %v4208 = vmul.f32 %v4112, %v4176
      %v4209 = vmul.f32 %v4113, %v4177
      %v4210 = vmul.f32 %v4114, %v4178
      %v4211 = vmul.f32 %v4115, %v4179
      %v4212 = vld [vmem:[%s295] sm:$0xff]
      %v4213 = vld [vmem:[%s295 + $0x8] sm:$0xff]
      %v4214 = vld [vmem:[%s295 + $0x10] sm:$0xff]
      %v4215 = vld [vmem:[%s295 + $0x18] sm:$0xff]
      %v4216 = vld [vmem:[%s295 + $0x20] sm:$0xff]
      %v4217 = vld [vmem:[%s295 + $0x28] sm:$0xff]
      %v4218 = vld [vmem:[%s295 + $0x30] sm:$0xff]
      %v4219 = vld [vmem:[%s295 + $0x38] sm:$0xff]
      %v4220 = vld [vmem:[%s295 + $0x40] sm:$0xff]
      %v4221 = vld [vmem:[%s295 + $0x48] sm:$0xff]
      %v4222 = vld [vmem:[%s295 + $0x50] sm:$0xff]
      %v4223 = vld [vmem:[%s295 + $0x58] sm:$0xff]
      %v4224 = vld [vmem:[%s295 + $0x60] sm:$0xff]
      %v4225 = vld [vmem:[%s295 + $0x68] sm:$0xff]
      %v4226 = vld [vmem:[%s295 + $0x70] sm:$0xff]
      %v4227 = vld [vmem:[%s295 + $0x78] sm:$0xff]
      %v4228 = vld [vmem:[%s295 + $0x80] sm:$0xff]
      %v4229 = vld [vmem:[%s295 + $0x88] sm:$0xff]
      %v4230 = vld [vmem:[%s295 + $0x90] sm:$0xff]
      %v4231 = vld [vmem:[%s295 + $0x98] sm:$0xff]
      %v4232 = vld [vmem:[%s295 + $0xa0] sm:$0xff]
      %v4233 = vld [vmem:[%s295 + $0xa8] sm:$0xff]
      %v4234 = vld [vmem:[%s295 + $0xb0] sm:$0xff]
      %v4235 = vld [vmem:[%s295 + $0xb8] sm:$0xff]
      %v4236 = vld [vmem:[%s295 + $0xc0] sm:$0xff]
      %v4237 = vld [vmem:[%s295 + $0xc8] sm:$0xff]
      %v4238 = vld [vmem:[%s295 + $0xd0] sm:$0xff]
      %v4239 = vld [vmem:[%s295 + $0xd8] sm:$0xff]
      %v4240 = vld [vmem:[%s295 + $0xe0] sm:$0xff]
      %v4241 = vld [vmem:[%s295 + $0xe8] sm:$0xff]
      %v4242 = vld [vmem:[%s295 + $0xf0] sm:$0xff]
      %v4243 = vld [vmem:[%s295 + $0xf8] sm:$0xff]
      %v4244 = vmul.f32 %v3764, %v4180
      %v4245 = vmul.f32 %v3765, %v4181
      %v4246 = vmul.f32 %v3766, %v4182
      %v4247 = vmul.f32 %v3767, %v4183
      %v4248 = vmul.f32 %v3768, %v4184
      %v4249 = vmul.f32 %v3769, %v4185
      %v4250 = vmul.f32 %v3770, %v4186
      %v4251 = vmul.f32 %v3771, %v4187
      %v4252 = vmul.f32 %v3772, %v4188
      %v4253 = vmul.f32 %v3773, %v4189
      %v4254 = vmul.f32 %v3774, %v4190
      %v4255 = vmul.f32 %v3775, %v4191
      %v4256 = vmul.f32 %v3776, %v4192
      %v4257 = vmul.f32 %v3777, %v4193
      %v4258 = vmul.f32 %v3778, %v4194
      %v4259 = vmul.f32 %v3779, %v4195
      %v4260 = vmul.f32 %v3780, %v4196
      %v4261 = vmul.f32 %v3781, %v4197
      %v4262 = vmul.f32 %v3782, %v4198
      %v4263 = vmul.f32 %v3783, %v4199
      %v4264 = vmul.f32 %v3784, %v4200
      %v4265 = vmul.f32 %v3785, %v4201
      %v4266 = vmul.f32 %v3786, %v4202
      %v4267 = vmul.f32 %v3787, %v4203
      %v4268 = vmul.f32 %v3788, %v4204
      %v4269 = vmul.f32 %v3789, %v4205
      %v4270 = vmul.f32 %v3790, %v4206
      %v4271 = vmul.f32 %v3791, %v4207
      %v4272 = vmul.f32 %v3792, %v4208
      %v4273 = vmul.f32 %v3793, %v4209
      %v4274 = vmul.f32 %v3794, %v4210
      %v4275 = vmul.f32 %v3795, %v4211
      %v4276 = vsub.f32 %v4212, %v4244
      %v4277 = vsub.f32 %v4213, %v4245
      %v4278 = vsub.f32 %v4214, %v4246
      %v4279 = vsub.f32 %v4215, %v4247
      %v4280 = vsub.f32 %v4216, %v4248
      %v4281 = vsub.f32 %v4217, %v4249
      %v4282 = vsub.f32 %v4218, %v4250
      %v4283 = vsub.f32 %v4219, %v4251
      %v4284 = vsub.f32 %v4220, %v4252
      %v4285 = vsub.f32 %v4221, %v4253
      %v4286 = vsub.f32 %v4222, %v4254
      %v4287 = vsub.f32 %v4223, %v4255
      %v4288 = vsub.f32 %v4224, %v4256
      %v4289 = vsub.f32 %v4225, %v4257
      %v4290 = vsub.f32 %v4226, %v4258
      %v4291 = vsub.f32 %v4227, %v4259
      %v4292 = vsub.f32 %v4228, %v4260
      %v4293 = vsub.f32 %v4229, %v4261
      %v4294 = vsub.f32 %v4230, %v4262
      %v4295 = vsub.f32 %v4231, %v4263
      %v4296 = vsub.f32 %v4232, %v4264
      %v4297 = vsub.f32 %v4233, %v4265
      %v4298 = vsub.f32 %v4234, %v4266
      %v4299 = vsub.f32 %v4235, %v4267
      %v4300 = vsub.f32 %v4236, %v4268
      %v4301 = vsub.f32 %v4237, %v4269
      %v4302 = vsub.f32 %v4238, %v4270
      %v4303 = vsub.f32 %v4239, %v4271
      %v4304 = vsub.f32 %v4240, %v4272
      %v4305 = vsub.f32 %v4241, %v4273
      %v4306 = vsub.f32 %v4242, %v4274
      %v4307 = vsub.f32 %v4243, %v4275
      %4309 = vset.pattern.permute.xlu0 0
      %4310 = vperm.xlu0 %4309, %v4180
      %v4311 = vpop.permute.xlu0 %4310
      %4314 = vset.pattern.permute.xlu0 0
      %4315 = vperm.xlu0 %4314, %v4181
      %v4316 = vpop.permute.xlu0 %4315
      %4319 = vset.pattern.permute.xlu0 0
      %4320 = vperm.xlu0 %4319, %v4182
      %v4321 = vpop.permute.xlu0 %4320
      %4324 = vset.pattern.permute.xlu0 0
      %4325 = vperm.xlu0 %4324, %v4183
      %v4326 = vpop.permute.xlu0 %4325
      %4329 = vset.pattern.permute.xlu0 0
      %4330 = vperm.xlu0 %4329, %v4184
      %v4331 = vpop.permute.xlu0 %4330
      %4334 = vset.pattern.permute.xlu0 0
      %4335 = vperm.xlu0 %4334, %v4185
      %v4336 = vpop.permute.xlu0 %4335
      %4339 = vset.pattern.permute.xlu0 0
      %4340 = vperm.xlu0 %4339, %v4186
      %v4341 = vpop.permute.xlu0 %4340
      %4344 = vset.pattern.permute.xlu0 0
      %4345 = vperm.xlu0 %4344, %v4187
      %v4346 = vpop.permute.xlu0 %4345
      %4349 = vset.pattern.permute.xlu0 0
      %4350 = vperm.xlu0 %4349, %v4188
      %v4351 = vpop.permute.xlu0 %4350
      %4354 = vset.pattern.permute.xlu0 0
      %4355 = vperm.xlu0 %4354, %v4189
      %v4356 = vpop.permute.xlu0 %4355
      %4359 = vset.pattern.permute.xlu0 0
      %4360 = vperm.xlu0 %4359, %v4190
      %v4361 = vpop.permute.xlu0 %4360
      %4364 = vset.pattern.permute.xlu0 0
      %4365 = vperm.xlu0 %4364, %v4191
      %v4366 = vpop.permute.xlu0 %4365
      %4369 = vset.pattern.permute.xlu0 0
      %4370 = vperm.xlu0 %4369, %v4192
      %v4371 = vpop.permute.xlu0 %4370
      %4374 = vset.pattern.permute.xlu0 0
      %4375 = vperm.xlu0 %4374, %v4193
      %v4376 = vpop.permute.xlu0 %4375
      %4379 = vset.pattern.permute.xlu0 0
      %4380 = vperm.xlu0 %4379, %v4194
      %v4381 = vpop.permute.xlu0 %4380
      %4384 = vset.pattern.permute.xlu0 0
      %4385 = vperm.xlu0 %4384, %v4195
      %v4386 = vpop.permute.xlu0 %4385
      %4389 = vset.pattern.permute.xlu0 0
      %4390 = vperm.xlu0 %4389, %v4196
      %v4391 = vpop.permute.xlu0 %4390
      %4394 = vset.pattern.permute.xlu0 0
      %4395 = vperm.xlu0 %4394, %v4197
      %v4396 = vpop.permute.xlu0 %4395
      %4399 = vset.pattern.permute.xlu0 0
      %4400 = vperm.xlu0 %4399, %v4198
      %v4401 = vpop.permute.xlu0 %4400
      %4404 = vset.pattern.permute.xlu0 0
      %4405 = vperm.xlu0 %4404, %v4199
      %v4406 = vpop.permute.xlu0 %4405
      %4409 = vset.pattern.permute.xlu0 0
      %4410 = vperm.xlu0 %4409, %v4200
      %v4411 = vpop.permute.xlu0 %4410
      %4414 = vset.pattern.permute.xlu0 0
      %4415 = vperm.xlu0 %4414, %v4201
      %v4416 = vpop.permute.xlu0 %4415
      %4419 = vset.pattern.permute.xlu0 0
      %4420 = vperm.xlu0 %4419, %v4202
      %v4421 = vpop.permute.xlu0 %4420
      %4424 = vset.pattern.permute.xlu0 0
      %4425 = vperm.xlu0 %4424, %v4203
      %v4426 = vpop.permute.xlu0 %4425
      %4429 = vset.pattern.permute.xlu0 0
      %4430 = vperm.xlu0 %4429, %v4204
      %v4431 = vpop.permute.xlu0 %4430
      %4434 = vset.pattern.permute.xlu0 0
      %4435 = vperm.xlu0 %4434, %v4205
      %v4436 = vpop.permute.xlu0 %4435
      %4439 = vset.pattern.permute.xlu0 0
      %4440 = vperm.xlu0 %4439, %v4206
      %v4441 = vpop.permute.xlu0 %4440
      %4444 = vset.pattern.permute.xlu0 0
      %4445 = vperm.xlu0 %4444, %v4207
      %v4446 = vpop.permute.xlu0 %4445
      %4449 = vset.pattern.permute.xlu0 0
      %4450 = vperm.xlu0 %4449, %v4208
      %v4451 = vpop.permute.xlu0 %4450
      %4454 = vset.pattern.permute.xlu0 0
      %4455 = vperm.xlu0 %4454, %v4209
      %v4456 = vpop.permute.xlu0 %4455
      %4459 = vset.pattern.permute.xlu0 0
      %4460 = vperm.xlu0 %4459, %v4210
      %v4461 = vpop.permute.xlu0 %4460
      %4464 = vset.pattern.permute.xlu0 0
      %4465 = vperm.xlu0 %4464, %v4211
      %v4466 = vpop.permute.xlu0 %4465
      %v4468 = vmul.f32 %v3478, %v4311
      %v4469 = vmul.f32 %v3480, %v4311
      %v4470 = vmul.f32 %v3482, %v4316
      %v4471 = vmul.f32 %v3484, %v4316
      %v4472 = vmul.f32 %v3488, %v4321
      %v4473 = vmul.f32 %v3490, %v4321
      %v4474 = vmul.f32 %v3492, %v4326
      %v4475 = vmul.f32 %v3494, %v4326
      %v4476 = vmul.f32 %v3498, %v4331
      %v4477 = vmul.f32 %v3500, %v4331
      %v4478 = vmul.f32 %v3502, %v4336
      %v4479 = vmul.f32 %v3504, %v4336
      %v4480 = vmul.f32 %v3508, %v4341
      %v4481 = vmul.f32 %v3510, %v4341
      %v4482 = vmul.f32 %v3512, %v4346
      %v4483 = vmul.f32 %v3514, %v4346
      %v4484 = vmul.f32 %v3518, %v4351
      %v4485 = vmul.f32 %v3520, %v4351
      %v4486 = vmul.f32 %v3522, %v4356
      %v4487 = vmul.f32 %v3524, %v4356
      %v4488 = vmul.f32 %v3528, %v4361
      %v4489 = vmul.f32 %v3530, %v4361
      %v4490 = vmul.f32 %v3532, %v4366
      %v4491 = vmul.f32 %v3534, %v4366
      %v4492 = vmul.f32 %v3538, %v4371
      %v4493 = vmul.f32 %v3540, %v4371
      %v4494 = vmul.f32 %v3542, %v4376
      %v4495 = vmul.f32 %v3544, %v4376
      %v4496 = vmul.f32 %v3548, %v4381
      %v4497 = vmul.f32 %v3550, %v4381
      %v4498 = vmul.f32 %v3552, %v4386
      %v4499 = vmul.f32 %v3554, %v4386
      %v4500 = vmul.f32 %v3558, %v4391
      %v4501 = vmul.f32 %v3560, %v4391
      %v4502 = vmul.f32 %v3562, %v4396
      %v4503 = vmul.f32 %v3564, %v4396
      %v4504 = vmul.f32 %v3568, %v4401
      %v4505 = vmul.f32 %v3570, %v4401
      %v4506 = vmul.f32 %v3572, %v4406
      %v4507 = vmul.f32 %v3574, %v4406
      %v4508 = vmul.f32 %v3578, %v4411
      %v4509 = vmul.f32 %v3580, %v4411
      %v4510 = vmul.f32 %v3582, %v4416
      %v4511 = vmul.f32 %v3584, %v4416
      %v4512 = vmul.f32 %v3588, %v4421
      %v4513 = vmul.f32 %v3590, %v4421
      %v4514 = vmul.f32 %v3592, %v4426
      %v4515 = vmul.f32 %v3594, %v4426
      %v4516 = vmul.f32 %v3598, %v4431
      %v4517 = vmul.f32 %v3600, %v4431
      %v4518 = vmul.f32 %v3602, %v4436
      %v4519 = vmul.f32 %v3604, %v4436
      %v4520 = vmul.f32 %v3608, %v4441
      %v4521 = vmul.f32 %v3610, %v4441
      %v4522 = vmul.f32 %v3612, %v4446
      %v4523 = vmul.f32 %v3614, %v4446
      %v4524 = vmul.f32 %v3618, %v4451
      %v4525 = vmul.f32 %v3620, %v4451
      %v4526 = vmul.f32 %v3622, %v4456
      %v4527 = vmul.f32 %v3624, %v4456
      %v4528 = vmul.f32 %v3628, %v4461
      %v4529 = vmul.f32 %v3630, %v4461
      %v4530 = vmul.f32 %v3632, %v4466
      %v4531 = vmul.f32 %v3634, %v4466
      %4533 = vset.pattern.permute.xlu0 0
      %4534 = vperm.xlu0 %4533, %v4276
      %v4535 = vpop.permute.xlu0 %4534
      %4538 = vset.pattern.permute.xlu0 0
      %4539 = vperm.xlu0 %4538, %v4277
      %v4540 = vpop.permute.xlu0 %4539
      %4543 = vset.pattern.permute.xlu0 0
      %4544 = vperm.xlu0 %4543, %v4278
      %v4545 = vpop.permute.xlu0 %4544
      %4548 = vset.pattern.permute.xlu0 0
      %4549 = vperm.xlu0 %4548, %v4279
      %v4550 = vpop.permute.xlu0 %4549
      %4553 = vset.pattern.permute.xlu0 0
      %4554 = vperm.xlu0 %4553, %v4280
      %v4555 = vpop.permute.xlu0 %4554
      %4558 = vset.pattern.permute.xlu0 0
      %4559 = vperm.xlu0 %4558, %v4281
      %v4560 = vpop.permute.xlu0 %4559
      %4563 = vset.pattern.permute.xlu0 0
      %4564 = vperm.xlu0 %4563, %v4282
      %v4565 = vpop.permute.xlu0 %4564
      %4568 = vset.pattern.permute.xlu0 0
      %4569 = vperm.xlu0 %4568, %v4283
      %v4570 = vpop.permute.xlu0 %4569
      %4573 = vset.pattern.permute.xlu0 0
      %4574 = vperm.xlu0 %4573, %v4284
      %v4575 = vpop.permute.xlu0 %4574
      %4578 = vset.pattern.permute.xlu0 0
      %4579 = vperm.xlu0 %4578, %v4285
      %v4580 = vpop.permute.xlu0 %4579
      %4583 = vset.pattern.permute.xlu0 0
      %4584 = vperm.xlu0 %4583, %v4286
      %v4585 = vpop.permute.xlu0 %4584
      %4588 = vset.pattern.permute.xlu0 0
      %4589 = vperm.xlu0 %4588, %v4287
      %v4590 = vpop.permute.xlu0 %4589
      %4593 = vset.pattern.permute.xlu0 0
      %4594 = vperm.xlu0 %4593, %v4288
      %v4595 = vpop.permute.xlu0 %4594
      %4598 = vset.pattern.permute.xlu0 0
      %4599 = vperm.xlu0 %4598, %v4289
      %v4600 = vpop.permute.xlu0 %4599
      %4603 = vset.pattern.permute.xlu0 0
      %4604 = vperm.xlu0 %4603, %v4290
      %v4605 = vpop.permute.xlu0 %4604
      %4608 = vset.pattern.permute.xlu0 0
      %4609 = vperm.xlu0 %4608, %v4291
      %v4610 = vpop.permute.xlu0 %4609
      %4613 = vset.pattern.permute.xlu0 0
      %4614 = vperm.xlu0 %4613, %v4292
      %v4615 = vpop.permute.xlu0 %4614
      %4618 = vset.pattern.permute.xlu0 0
      %4619 = vperm.xlu0 %4618, %v4293
      %v4620 = vpop.permute.xlu0 %4619
      %4623 = vset.pattern.permute.xlu0 0
      %4624 = vperm.xlu0 %4623, %v4294
      %v4625 = vpop.permute.xlu0 %4624
      %4628 = vset.pattern.permute.xlu0 0
      %4629 = vperm.xlu0 %4628, %v4295
      %v4630 = vpop.permute.xlu0 %4629
      %4633 = vset.pattern.permute.xlu0 0
      %4634 = vperm.xlu0 %4633, %v4296
      %v4635 = vpop.permute.xlu0 %4634
      %4638 = vset.pattern.permute.xlu0 0
      %4639 = vperm.xlu0 %4638, %v4297
      %v4640 = vpop.permute.xlu0 %4639
      %4643 = vset.pattern.permute.xlu0 0
      %4644 = vperm.xlu0 %4643, %v4298
      %v4645 = vpop.permute.xlu0 %4644
      %4648 = vset.pattern.permute.xlu0 0
      %4649 = vperm.xlu0 %4648, %v4299
      %v4650 = vpop.permute.xlu0 %4649
      %4653 = vset.pattern.permute.xlu0 0
      %4654 = vperm.xlu0 %4653, %v4300
      %v4655 = vpop.permute.xlu0 %4654
      %4658 = vset.pattern.permute.xlu0 0
      %4659 = vperm.xlu0 %4658, %v4301
      %v4660 = vpop.permute.xlu0 %4659
      %4663 = vset.pattern.permute.xlu0 0
      %4664 = vperm.xlu0 %4663, %v4302
      %v4665 = vpop.permute.xlu0 %4664
      %4668 = vset.pattern.permute.xlu0 0
      %4669 = vperm.xlu0 %4668, %v4303
      %v4670 = vpop.permute.xlu0 %4669
      %4673 = vset.pattern.permute.xlu0 0
      %4674 = vperm.xlu0 %4673, %v4304
      %v4675 = vpop.permute.xlu0 %4674
      %4678 = vset.pattern.permute.xlu0 0
      %4679 = vperm.xlu0 %4678, %v4305
      %v4680 = vpop.permute.xlu0 %4679
      %4683 = vset.pattern.permute.xlu0 0
      %4684 = vperm.xlu0 %4683, %v4306
      %v4685 = vpop.permute.xlu0 %4684
      %4688 = vset.pattern.permute.xlu0 0
      %4689 = vperm.xlu0 %4688, %v4307
      %v4690 = vpop.permute.xlu0 %4689
      %v4692 = vadd.f32 %v4468, %v4535
      %v4693 = vadd.f32 %v4469, %v4535
      %v4694 = vadd.f32 %v4470, %v4540
      %v4695 = vadd.f32 %v4471, %v4540
      %v4696 = vadd.f32 %v4472, %v4545
      %v4697 = vadd.f32 %v4473, %v4545
      %v4698 = vadd.f32 %v4474, %v4550
      %v4699 = vadd.f32 %v4475, %v4550
      %v4700 = vadd.f32 %v4476, %v4555
      %v4701 = vadd.f32 %v4477, %v4555
      %v4702 = vadd.f32 %v4478, %v4560
      %v4703 = vadd.f32 %v4479, %v4560
      %v4704 = vadd.f32 %v4480, %v4565
      %v4705 = vadd.f32 %v4481, %v4565
      %v4706 = vadd.f32 %v4482, %v4570
      %v4707 = vadd.f32 %v4483, %v4570
      %v4708 = vadd.f32 %v4484, %v4575
      %v4709 = vadd.f32 %v4485, %v4575
      %v4710 = vadd.f32 %v4486, %v4580
      %v4711 = vadd.f32 %v4487, %v4580
      %v4712 = vadd.f32 %v4488, %v4585
      %v4713 = vadd.f32 %v4489, %v4585
      %v4714 = vadd.f32 %v4490, %v4590
      %v4715 = vadd.f32 %v4491, %v4590
      %v4716 = vadd.f32 %v4492, %v4595
      %v4717 = vadd.f32 %v4493, %v4595
      %v4718 = vadd.f32 %v4494, %v4600
      %v4719 = vadd.f32 %v4495, %v4600
      %v4720 = vadd.f32 %v4496, %v4605
      %v4721 = vadd.f32 %v4497, %v4605
      %v4722 = vadd.f32 %v4498, %v4610
      %v4723 = vadd.f32 %v4499, %v4610
      %v4724 = vadd.f32 %v4500, %v4615
      %v4725 = vadd.f32 %v4501, %v4615
      %v4726 = vadd.f32 %v4502, %v4620
      %v4727 = vadd.f32 %v4503, %v4620
      %v4728 = vadd.f32 %v4504, %v4625
      %v4729 = vadd.f32 %v4505, %v4625
      %v4730 = vadd.f32 %v4506, %v4630
      %v4731 = vadd.f32 %v4507, %v4630
      %v4732 = vadd.f32 %v4508, %v4635
      %v4733 = vadd.f32 %v4509, %v4635
      %v4734 = vadd.f32 %v4510, %v4640
      %v4735 = vadd.f32 %v4511, %v4640
      %v4736 = vadd.f32 %v4512, %v4645
      %v4737 = vadd.f32 %v4513, %v4645
      %v4738 = vadd.f32 %v4514, %v4650
      %v4739 = vadd.f32 %v4515, %v4650
      %v4740 = vadd.f32 %v4516, %v4655
      %v4741 = vadd.f32 %v4517, %v4655
      %v4742 = vadd.f32 %v4518, %v4660
      %v4743 = vadd.f32 %v4519, %v4660
      %v4744 = vadd.f32 %v4520, %v4665
      %v4745 = vadd.f32 %v4521, %v4665
      %v4746 = vadd.f32 %v4522, %v4670
      %v4747 = vadd.f32 %v4523, %v4670
      %v4748 = vadd.f32 %v4524, %v4675
      %v4749 = vadd.f32 %v4525, %v4675
      %v4750 = vadd.f32 %v4526, %v4680
      %v4751 = vadd.f32 %v4527, %v4680
      %v4752 = vadd.f32 %v4528, %v4685
      %v4753 = vadd.f32 %v4529, %v4685
      %v4754 = vadd.f32 %v4530, %v4690
      %v4755 = vadd.f32 %v4531, %v4690
      %4756 = vst [vmem:[%s302] sm:$0xff] %v4692
      %4757 = vst.msk [vmem:[%s302 + $0x8] sm:$0xff] %vm432, %v4693
      %4758 = vst [vmem:[%s302 + $0x10] sm:$0xff] %v4694
      %4759 = vst.msk [vmem:[%s302 + $0x18] sm:$0xff] %vm432, %v4695
      %4760 = vst [vmem:[%s302 + $0x20] sm:$0xff] %v4696
      %4761 = vst.msk [vmem:[%s302 + $0x28] sm:$0xff] %vm432, %v4697
      %4762 = vst [vmem:[%s302 + $0x30] sm:$0xff] %v4698
      %4763 = vst.msk [vmem:[%s302 + $0x38] sm:$0xff] %vm432, %v4699
      %4764 = vst [vmem:[%s302 + $0x40] sm:$0xff] %v4700
      %4765 = vst.msk [vmem:[%s302 + $0x48] sm:$0xff] %vm432, %v4701
      %4766 = vst [vmem:[%s302 + $0x50] sm:$0xff] %v4702
      %4767 = vst.msk [vmem:[%s302 + $0x58] sm:$0xff] %vm432, %v4703
      %4768 = vst [vmem:[%s302 + $0x60] sm:$0xff] %v4704
      %4769 = vst.msk [vmem:[%s302 + $0x68] sm:$0xff] %vm432, %v4705
      %4770 = vst [vmem:[%s302 + $0x70] sm:$0xff] %v4706
      %4771 = vst.msk [vmem:[%s302 + $0x78] sm:$0xff] %vm432, %v4707
      %4772 = vst [vmem:[%s302 + $0x80] sm:$0xff] %v4708
      %4773 = vst.msk [vmem:[%s302 + $0x88] sm:$0xff] %vm432, %v4709
      %4774 = vst [vmem:[%s302 + $0x90] sm:$0xff] %v4710
      %4775 = vst.msk [vmem:[%s302 + $0x98] sm:$0xff] %vm432, %v4711
      %4776 = vst [vmem:[%s302 + $0xa0] sm:$0xff] %v4712
      %4777 = vst.msk [vmem:[%s302 + $0xa8] sm:$0xff] %vm432, %v4713
      %4778 = vst [vmem:[%s302 + $0xb0] sm:$0xff] %v4714
      %4779 = vst.msk [vmem:[%s302 + $0xb8] sm:$0xff] %vm432, %v4715
      %4780 = vst [vmem:[%s302 + $0xc0] sm:$0xff] %v4716
      %4781 = vst.msk [vmem:[%s302 + $0xc8] sm:$0xff] %vm432, %v4717
      %4782 = vst [vmem:[%s302 + $0xd0] sm:$0xff] %v4718
      %4783 = vst.msk [vmem:[%s302 + $0xd8] sm:$0xff] %vm432, %v4719
      %4784 = vst [vmem:[%s302 + $0xe0] sm:$0xff] %v4720
      %4785 = vst.msk [vmem:[%s302 + $0xe8] sm:$0xff] %vm432, %v4721
      %4786 = vst [vmem:[%s302 + $0xf0] sm:$0xff] %v4722
      %4787 = vst.msk [vmem:[%s302 + $0xf8] sm:$0xff] %vm432, %v4723
      %4788 = vst [vmem:[%s302 + $0x100] sm:$0xff] %v4724
      %4789 = vst.msk [vmem:[%s302 + $0x108] sm:$0xff] %vm432, %v4725
      %4790 = vst [vmem:[%s302 + $0x110] sm:$0xff] %v4726
      %4791 = vst.msk [vmem:[%s302 + $0x118] sm:$0xff] %vm432, %v4727
      %4792 = vst [vmem:[%s302 + $0x120] sm:$0xff] %v4728
      %4793 = vst.msk [vmem:[%s302 + $0x128] sm:$0xff] %vm432, %v4729
      %4794 = vst [vmem:[%s302 + $0x130] sm:$0xff] %v4730
      %4795 = vst.msk [vmem:[%s302 + $0x138] sm:$0xff] %vm432, %v4731
      %4796 = vst [vmem:[%s302 + $0x140] sm:$0xff] %v4732
      %4797 = vst.msk [vmem:[%s302 + $0x148] sm:$0xff] %vm432, %v4733
      %4798 = vst [vmem:[%s302 + $0x150] sm:$0xff] %v4734
      %4799 = vst.msk [vmem:[%s302 + $0x158] sm:$0xff] %vm432, %v4735
      %4800 = vst [vmem:[%s302 + $0x160] sm:$0xff] %v4736
      %4801 = vst.msk [vmem:[%s302 + $0x168] sm:$0xff] %vm432, %v4737
      %4802 = vst [vmem:[%s302 + $0x170] sm:$0xff] %v4738
      %4803 = vst.msk [vmem:[%s302 + $0x178] sm:$0xff] %vm432, %v4739
      %4804 = vst [vmem:[%s302 + $0x180] sm:$0xff] %v4740
      %4805 = vst.msk [vmem:[%s302 + $0x188] sm:$0xff] %vm432, %v4741
      %4806 = vst [vmem:[%s302 + $0x190] sm:$0xff] %v4742
      %4807 = vst.msk [vmem:[%s302 + $0x198] sm:$0xff] %vm432, %v4743
      %4808 = vst [vmem:[%s302 + $0x1a0] sm:$0xff] %v4744
      %4809 = vst.msk [vmem:[%s302 + $0x1a8] sm:$0xff] %vm432, %v4745
      %4810 = vst [vmem:[%s302 + $0x1b0] sm:$0xff] %v4746
      %4811 = vst.msk [vmem:[%s302 + $0x1b8] sm:$0xff] %vm432, %v4747
      %4812 = vst [vmem:[%s302 + $0x1c0] sm:$0xff] %v4748
      %4813 = vst.msk [vmem:[%s302 + $0x1c8] sm:$0xff] %vm432, %v4749
      %4814 = vst [vmem:[%s302 + $0x1d0] sm:$0xff] %v4750
      %4815 = vst.msk [vmem:[%s302 + $0x1d8] sm:$0xff] %vm432, %v4751
      %4816 = vst [vmem:[%s302 + $0x1e0] sm:$0xff] %v4752
      %4817 = vst.msk [vmem:[%s302 + $0x1e8] sm:$0xff] %vm432, %v4753
      %4818 = vst [vmem:[%s302 + $0x1f0] sm:$0xff] %v4754
      %4819 = vst.msk [vmem:[%s302 + $0x1f8] sm:$0xff] %vm432, %v4755
      %s4820 = smul.u32 32, %s17
      %p4821 = scmp.lt.s32.totalorder %s4820, 127
      %s4822 = scalar_select %p4821, %s4820, 127
      %s4823 = smul.addr %s4822, 2
      %s4824 = smul.addr %s4823, 8
      %s4825 = scalar_lea.vmem %s6, %s4824
      // Predicated region
      $region45: #{tpu_custom_call.1} parent=43 // pred_check
        %p4826 = pneg %p176
      $region46: #{tpu_custom_call.1} parent=43 // pred_check_branch
        %4828 = sbr.rel (%p4826) target = $region48
      $region47: #{tpu_custom_call.1} parent=43 // pred_region
        %s4829 = smul.u32 32, %s17
      $region48: #{tpu_custom_call.1} parent=43 // pred_fallthru
        _
    $region44: #{tpu_custom_call.1} parent=5 // pred_fallthru
      _
    %p4830 = scmp.le.s32.totalorder 2, %s12
    // Predicated region
    $region49: #{tpu_custom_call.1} parent=5 // pred_check
      %p4831 = pneg %p4830
    $region50: #{tpu_custom_call.1} parent=5 // pred_check_branch
      %4833 = sbr.rel (%p4831) target = $region52
    $region51: #{tpu_custom_call.1} parent=5 // pred_region
      %s4834 = ssub.s32 %s12, 2
      // Predicated region
      $region53: #{tpu_custom_call.1} parent=51 // pred_check
        %p4835 = pneg %p182
      $region54: #{tpu_custom_call.1} parent=51 // pred_check_branch
        %4837 = sbr.rel (%p4835) target = $region56
      $region55: #{tpu_custom_call.1} parent=51 // pred_region
        %s4838 = smul.u32 32, %s18
        %p4839 = scmp.lt.s32.totalorder %s4838, 127
        %s4840 = scalar_select %p4839, %s4838, 127
        %s4841 = smul.addr %s4840, 2
        %s4842 = smul.addr %s4841, 8
        %s4843 = scalar_lea.vmem %s6, %s4842
      $region56: #{tpu_custom_call.1} parent=51 // pred_fallthru
        _
    $region52: #{tpu_custom_call.1} parent=5 // pred_fallthru
      _
  $region6: #{tpu_custom_call.1} parent=0 // loop_footer
    %s16 = sadd.s32 1, %s12
  $region7: #{tpu_custom_call.1} parent=0 // loop_footer_branch
    %11 = sbr.rel target = $region3
  $region8: #{tpu_custom_call.1} parent=0 // loop_exit
    _

</llo_original>
